<compile_context>
chip_gen: v7x
topology: tpu7x:2x2x1
jax: 0.10.0
libtpu: 0.0.40
codegen_flags: <defaults>
</compile_context>

<pallas_src>
import math
from functools import partial

import jax
import jax.numpy as jnp
from jax.experimental import pallas as pl
from jax.experimental.pallas import tpu as pltpu


# ----------------------------- in-kernel helpers ----------------------------- #

def _layer_norm(x, gamma, beta, eps=1e-6):
    # x: (M, E) f32; gamma/beta: (1, E) f32 -- matches nn.LayerNorm(d_model, eps=1e-06).
    mu = jnp.mean(x, axis=-1, keepdims=True)
    xc = x - mu
    var = jnp.mean(xc * xc, axis=-1, keepdims=True)
    return xc * jax.lax.rsqrt(var + eps) * gamma + beta


def _mha(q, k, v, wo_ref, bo_ref, batch_mask, nhead):
    # q: (Mq, E) f32, k/v: (Mk, E) f32 -- token-major slabs (row = t*N + n);
    #   1/sqrt(Dh) is already folded into the Q projection.
    # batch_mask: (Mq, Mk) bool or None -- True where query/key rows belong to the same
    #   batch element; keeps the per-batch softmax while the score/PV matmuls run on the
    #   whole slab with heads as the only batch dim.
    # wo_ref: (E, E) bf16, bo_ref: (1, E) f32.
    Mq, E = q.shape
    Mk = k.shape[0]
    Dh = E // nhead
    f32 = jnp.float32
    bf16 = jnp.bfloat16

    # (M, E) -> (H, M, Dh): heads leading, minor dims untouched afterwards.
    qh = jnp.transpose(q.reshape(Mq, nhead, Dh), (1, 0, 2))
    kh = jnp.transpose(k.reshape(Mk, nhead, Dh), (1, 0, 2))
    vh = jnp.transpose(v.reshape(Mk, nhead, Dh), (1, 0, 2))

    # scores / softmax (f32 math, bf16 MXU operands)
    s = jnp.einsum('hqd,hkd->hqk', qh.astype(bf16), kh.astype(bf16),
                   preferred_element_type=f32)                     # (H, Mq, Mk)
    if batch_mask is not None:
        s = jnp.where(batch_mask, s, -1e30)                        # kill cross-batch pairs
    s = s - jnp.max(s, axis=-1, keepdims=True)
    p = jnp.exp(s)
    p = p * pl.reciprocal(jnp.sum(p, axis=-1, keepdims=True), approx=True)

    o = jnp.einsum('hqk,hkd->hqd', p.astype(bf16), vh.astype(bf16),
                   preferred_element_type=f32)                     # (H, Mq, Dh)

    # merge heads along lanes (concatenate, not a minor-dim reshape) and apply the
    # output projection as a single (Mq, E) @ (E, E) dot.
    o_cat = jnp.concatenate([o[h] for h in range(nhead)], axis=-1)  # (Mq, E) f32
    return jnp.dot(o_cat.astype(bf16), wo_ref[...],
                   preferred_element_type=f32) + bo_ref[...]


# --------------------------------- kernel ------------------------------------ #

def _decoder_layer_kernel(tgt_ref, mem_ref,
                          wq_s_ref, wk_s_ref, wv_s_ref, bq_s_ref, bk_s_ref, bv_s_ref,
                          wo_s_ref, bo_s_ref,
                          wq_c_ref, wk_c_ref, wv_c_ref, bq_c_ref, bk_c_ref, bv_c_ref,
                          wo_c_ref, bo_c_ref,
                          w1_ref, b1_ref, w2_ref, b2_ref,
                          g1_ref, be1_ref, g2_ref, be2_ref, g3_ref, be3_ref,
                          out_ref, *, nhead, n_batch):
    f32 = jnp.float32
    bf16 = jnp.bfloat16

    x = tgt_ref[...].astype(f32)      # (Mt, E) token-major slab, Mt = Lt * N
    m = mem_ref[...].astype(f32)      # (Mm, E) token-major slab, Mm = Lm * N
    Mt = x.shape[0]
    Mm = m.shape[0]

    def batch_mask(mq, mk):
        if n_batch == 1:
            return None
        rq = jax.lax.broadcasted_iota(jnp.int32, (mq, mk), 0)
        rk = jax.lax.broadcasted_iota(jnp.int32, (mq, mk), 1)
        return (rq % n_batch) == (rk % n_batch)   # row = t*N + n  ->  batch = row % N

    mask_tt = batch_mask(Mt, Mt)   # computed once (hoisted), reused by self-attn
    mask_tm = batch_mask(Mt, Mm)   # and cross-attn

    def proj(a, w_ref, b_ref):     # whole-slab projection: bf16 MXU operands, f32 acc
        return (jnp.dot(a.astype(bf16), w_ref[...], preferred_element_type=f32)
                + b_ref[...])

    # ---- self-attention + residual + norm1 (dropout1 = identity in eval) ----
    q = proj(x, wq_s_ref, bq_s_ref)
    k = proj(x, wk_s_ref, bk_s_ref)
    v = proj(x, wv_s_ref, bv_s_ref)
    sa = _mha(q, k, v, wo_s_ref, bo_s_ref, mask_tt, nhead)
    x = _layer_norm(x + sa, g1_ref[...], be1_ref[...])

    # ---- cross-attention (Q from tgt, K/V from memory) + residual + norm2 ----
    qc = proj(x, wq_c_ref, bq_c_ref)
    kc = proj(m, wk_c_ref, bk_c_ref)
    vc = proj(m, wv_c_ref, bv_c_ref)
    ca = _mha(qc, kc, vc, wo_c_ref, bo_c_ref, mask_tm, nhead)
    x = _layer_norm(x + ca, g2_ref[...], be2_ref[...])

    # ---- feed-forward: linear2(relu(linear1(x))) + residual + norm3 ----
    h = jnp.maximum(proj(x, w1_ref, b1_ref), 0.0)
    ff = proj(h, w2_ref, b2_ref)
    x = _layer_norm(x + ff, g3_ref[...], be3_ref[...])

    out_ref[...] = x.astype(out_ref.dtype)


# -------------------------------- wrapper ------------------------------------ #

_PARAM_ORDER = [
    "wq_s", "wk_s", "wv_s", "bq_s", "bk_s", "bv_s", "wo_s", "bo_s",
    "wq_c", "wk_c", "wv_c", "bq_c", "bk_c", "bv_c", "wo_c", "bo_c",
    "w1", "b1", "w2", "b2",
    "g1", "be1", "g2", "be2", "g3", "be3",
]


def transformer_decoder_layer(tgt, memory, kparams, nhead):
    # tgt: (Lt, N, E), memory: (Lm, N, E)  -- PyTorch MHA (seq, batch, embed) layout.
    Lt, N, E = tgt.shape
    Lm = memory.shape[0]

    # Token-major slabs via a cheap contiguous reshape (NOT a transpose): no extra HBM
    # transpose pass before/after the kernel.  Row r = t*N + n  ->  batch index r % N.
    tgt_slab = tgt.reshape(Lt * N, E)
    mem_slab = memory.reshape(Lm * N, E)

    param_list = [kparams[name] for name in _PARAM_ORDER]

    out = pl.pallas_call(
        partial(_decoder_layer_kernel, nhead=nhead, n_batch=N),
        out_shape=jax.ShapeDtypeStruct((Lt * N, E), tgt.dtype),
        # Single invocation (no grid): every matmul runs on the whole (N*L, E) slab and
        # each weight is DMA'd into VMEM exactly once (inherently single-buffered).
        compiler_params=pltpu.CompilerParams(vmem_limit_bytes=32 * 1024 * 1024),
    )(tgt_slab, mem_slab, *param_list)

    return out.reshape(Lt, N, E)


# -------------------------- parameters & host-side prep ----------------------- #

def init_params(key, d_model, nhead, dim_ff):
    """PyTorch-convention parameters (weights stored pre-transposed, f32)."""
    E = d_model
    keys = jax.random.split(key, 10)

    def u(k, shape, scale):
        return jax.random.uniform(k, shape, jnp.float32, -scale, scale)

    return {
        # self-attention: in_proj_weight.T (E, 3E), out_proj.weight.T (E, E)
        "win_s": u(keys[0], (E, 3 * E), 1.0 / math.sqrt(E)),
        "bin_s": u(keys[1], (1, 3 * E), 0.02),
        "wo_s": u(keys[2], (E, E), 1.0 / math.sqrt(E)),
        "bo_s": jnp.zeros((1, E), jnp.float32),
        # cross-attention
        "win_c": u(keys[3], (E, 3 * E), 1.0 / math.sqrt(E)),
        "bin_c": u(keys[4], (1, 3 * E), 0.02),
        "wo_c": u(keys[5], (E, E), 1.0 / math.sqrt(E)),
        "bo_c": jnp.zeros((1, E), jnp.float32),
        # feed-forward
        "w1": u(keys[6], (E, dim_ff), 1.0 / math.sqrt(E)),
        "b1": u(keys[7], (1, dim_ff), 0.02),
        "w2": u(keys[8], (dim_ff, E), 1.0 / math.sqrt(dim_ff)),
        "b2": u(keys[9], (1, E), 0.02),
        # layer norms (eps=1e-06 per the module spec)
        "g1": jnp.ones((1, E), jnp.float32), "be1": jnp.zeros((1, E), jnp.float32),
        "g2": jnp.ones((1, E), jnp.float32), "be2": jnp.zeros((1, E), jnp.float32),
        "g3": jnp.ones((1, E), jnp.float32), "be3": jnp.zeros((1, E), jnp.float32),
    }


def prepare_params(params, d_model, nhead):
    """One-time host-side transform: split in_proj into separate Q/K/V weights, fold the
    1/sqrt(Dh) attention scale into the Q projection, cast matmul weights to bf16
    (biases / LayerNorm params stay f32).  Output projections stay plain (E, E)."""
    E = d_model
    Dh = E // nhead
    scale = 1.0 / math.sqrt(Dh)
    bf16 = jnp.bfloat16

    def split_qkv(w_in, b_in):   # w_in: (E, 3E), b_in: (1, 3E)
        wq, wk, wv = w_in[:, :E], w_in[:, E:2 * E], w_in[:, 2 * E:]
        bq, bk, bv = b_in[:, :E], b_in[:, E:2 * E], b_in[:, 2 * E:]
        return ((wq * scale).astype(bf16), wk.astype(bf16), wv.astype(bf16),
                bq * scale, bk, bv)

    wq_s, wk_s, wv_s, bq_s, bk_s, bv_s = split_qkv(params["win_s"], params["bin_s"])
    wq_c, wk_c, wv_c, bq_c, bk_c, bv_c = split_qkv(params["win_c"], params["bin_c"])

    return {
        "wq_s": wq_s, "wk_s": wk_s, "wv_s": wv_s,
        "bq_s": bq_s, "bk_s": bk_s, "bv_s": bv_s,
        "wo_s": params["wo_s"].astype(bf16), "bo_s": params["bo_s"],
        "wq_c": wq_c, "wk_c": wk_c, "wv_c": wv_c,
        "bq_c": bq_c, "bk_c": bk_c, "bv_c": bv_c,
        "wo_c": params["wo_c"].astype(bf16), "bo_c": params["bo_c"],
        "w1": params["w1"].astype(bf16), "b1": params["b1"],
        "w2": params["w2"].astype(bf16), "b2": params["b2"],
        "g1": params["g1"], "be1": params["be1"],
        "g2": params["g2"], "be2": params["be2"],
        "g3": params["g3"], "be3": params["be3"],
    }


# ----------------------- pure-JAX f32 reference (PyTorch semantics) ----------- #

def reference(tgt, memory, params, nhead):
    E = tgt.shape[-1]
    Dh = E // nhead
    scale = 1.0 / math.sqrt(Dh)

    def layer_norm(x, g, b, eps=1e-6):
        mu = jnp.mean(x, axis=-1, keepdims=True)
        var = jnp.mean((x - mu) ** 2, axis=-1, keepdims=True)
        return (x - mu) / jnp.sqrt(var + eps) * g + b

    def mha(q_in, kv_in, w_in, b_in, w_o, b_o):
        q = q_in @ w_in[:, :E] + b_in[:, :E]
        k = kv_in @ w_in[:, E:2 * E] + b_in[:, E:2 * E]
        v = kv_in @ w_in[:, 2 * E:] + b_in[:, 2 * E:]
        Lq, Lk = q.shape[0], k.shape[0]
        qh = q.reshape(Lq, nhead, Dh).transpose(1, 0, 2) * scale
        kh = k.reshape(Lk, nhead, Dh).transpose(1, 0, 2)
        vh = v.reshape(Lk, nhead, Dh).transpose(1, 0, 2)
        s = jnp.einsum('hqd,hkd->hqk', qh, kh)
        p = jax.nn.softmax(s, axis=-1)
        o = jnp.einsum('hqk,hkd->hqd', p, vh).transpose(1, 0, 2).reshape(Lq, E)
        return o @ w_o + b_o

    def one(x, m):  # x: (Lt, E), m: (Lm, E)
        sa = mha(x, x, params["win_s"], params["bin_s"], params["wo_s"], params["bo_s"])
        x = layer_norm(x + sa, params["g1"], params["be1"])
        ca = mha(x, m, params["win_c"], params["bin_c"], params["wo_c"], params["bo_c"])
        x = layer_norm(x + ca, params["g2"], params["be2"])
        h = jnp.maximum(x @ params["w1"] + params["b1"], 0.0)
        ff = h @ params["w2"] + params["b2"]
        return layer_norm(x + ff, params["g3"], params["be3"])

    return jax.vmap(one, in_axes=(1, 1), out_axes=1)(tgt, memory)


# ----------------------------------- main ------------------------------------ #

if __name__ == "__main__":
    d_model, nhead, dim_feedforward, dropout = 32, 4, 64, 0.1   # dropout unused (eval)
    Lt, Lm, N = 8, 16, 2

    key = jax.random.PRNGKey(0)
    k1, k2, k3 = jax.random.split(key, 3)
    tgt = jax.random.normal(k1, (Lt, N, d_model), jnp.float32)      # (seq, batch, d_model)
    memory = jax.random.normal(k2, (Lm, N, d_model), jnp.float32)   # (seq, batch, d_model)

    params = init_params(k3, d_model, nhead, dim_feedforward)
    kparams = prepare_params(params, d_model, nhead)

    out = transformer_decoder_layer(tgt, memory, kparams, nhead)
    out = jax.block_until_ready(out)

    ref = reference(tgt, memory, params, nhead)
    assert out.shape == (Lt, N, d_model)
    max_err = float(jnp.max(jnp.abs(out - ref)))
    # bf16 MXU operands with f32 accumulation vs. full-f32 reference -> relaxed tolerance
    assert bool(jnp.allclose(out, ref, atol=2e-2, rtol=2e-2)), \
        f"kernel does not match reference (max abs err {max_err:.4e})"

    print("KERNEL_OK")
</pallas_src>

<mosaic_0001>
module attributes {stable_mosaic.version = 11 : i64} {
  func.func @_decoder_layer_kernel(%arg0: memref<16x32xf32, #tpu.memory_space<vmem>>, %arg1: memref<32x32xf32, #tpu.memory_space<vmem>>, %arg2: memref<32x32xbf16, #tpu.memory_space<vmem>>, %arg3: memref<32x32xbf16, #tpu.memory_space<vmem>>, %arg4: memref<32x32xbf16, #tpu.memory_space<vmem>>, %arg5: memref<1x32xf32, #tpu.memory_space<vmem>>, %arg6: memref<1x32xf32, #tpu.memory_space<vmem>>, %arg7: memref<1x32xf32, #tpu.memory_space<vmem>>, %arg8: memref<32x32xbf16, #tpu.memory_space<vmem>>, %arg9: memref<1x32xf32, #tpu.memory_space<vmem>>, %arg10: memref<32x32xbf16, #tpu.memory_space<vmem>>, %arg11: memref<32x32xbf16, #tpu.memory_space<vmem>>, %arg12: memref<32x32xbf16, #tpu.memory_space<vmem>>, %arg13: memref<1x32xf32, #tpu.memory_space<vmem>>, %arg14: memref<1x32xf32, #tpu.memory_space<vmem>>, %arg15: memref<1x32xf32, #tpu.memory_space<vmem>>, %arg16: memref<32x32xbf16, #tpu.memory_space<vmem>>, %arg17: memref<1x32xf32, #tpu.memory_space<vmem>>, %arg18: memref<32x64xbf16, #tpu.memory_space<vmem>>, %arg19: memref<1x64xf32, #tpu.memory_space<vmem>>, %arg20: memref<64x32xbf16, #tpu.memory_space<vmem>>, %arg21: memref<1x32xf32, #tpu.memory_space<vmem>>, %arg22: memref<1x32xf32, #tpu.memory_space<vmem>>, %arg23: memref<1x32xf32, #tpu.memory_space<vmem>>, %arg24: memref<1x32xf32, #tpu.memory_space<vmem>>, %arg25: memref<1x32xf32, #tpu.memory_space<vmem>>, %arg26: memref<1x32xf32, #tpu.memory_space<vmem>>, %arg27: memref<1x32xf32, #tpu.memory_space<vmem>>, %arg28: memref<16x32xf32, #tpu.memory_space<vmem>>) attributes {dimension_semantics = [], scalar_prefetch = 0 : i64, scratch_operands = 0 : i64, tpu.core_type = #tpu.core_type<tc>} {
    %c0 = arith.constant 0 : index
    %c0_0 = arith.constant 0 : index
    %0 = vector.load %arg0[%c0, %c0_0] : memref<16x32xf32, #tpu.memory_space<vmem>>, vector<16x32xf32>
    %c0_1 = arith.constant 0 : index
    %c0_2 = arith.constant 0 : index
    %1 = vector.load %arg1[%c0_1, %c0_2] : memref<32x32xf32, #tpu.memory_space<vmem>>, vector<32x32xf32>
    %2 = tpu.iota {dimensions = array<i32: 0>} : vector<16x16xi32>
    %3 = tpu.iota {dimensions = array<i32: 1>} : vector<16x16xi32>
    %c2_i32 = arith.constant 2 : i32
    %c0_i32 = arith.constant 0 : i32
    %4 = arith.cmpi eq, %c2_i32, %c0_i32 : i32
    %c1_i32 = arith.constant 1 : i32
    %5 = arith.select %4, %c1_i32, %c2_i32 : i32
    %6 = vector.broadcast %5 : i32 to vector<16x16xi32>
    %7 = arith.remsi %2, %6 : vector<16x16xi32>
    %c0_i32_3 = arith.constant 0 : i32
    %8 = vector.broadcast %c0_i32_3 : i32 to vector<16x16xi32>
    %9 = arith.cmpi ne, %7, %8 : vector<16x16xi32>
    %c0_i32_4 = arith.constant 0 : i32
    %10 = vector.broadcast %c0_i32_4 : i32 to vector<16x16xi32>
    %11 = arith.cmpi slt, %7, %10 : vector<16x16xi32>
    %c0_i32_5 = arith.constant 0 : i32
    %12 = arith.cmpi slt, %5, %c0_i32_5 : i32
    %13 = vector.broadcast %12 : i1 to vector<16x16xi1>
    %14 = vector.broadcast %13 : vector<16x16xi1> to vector<16x16xi1>
    %15 = arith.xori %11, %14 : vector<16x16xi1>
    %16 = arith.andi %15, %9 : vector<16x16xi1>
    %17 = vector.broadcast %5 : i32 to vector<16x16xi32>
    %18 = arith.addi %7, %17 : vector<16x16xi32>
    %19 = arith.select %16, %18, %7 : vector<16x16xi1>, vector<16x16xi32>
    %c2_i32_6 = arith.constant 2 : i32
    %c0_i32_7 = arith.constant 0 : i32
    %20 = arith.cmpi eq, %c2_i32_6, %c0_i32_7 : i32
    %c1_i32_8 = arith.constant 1 : i32
    %21 = arith.select %20, %c1_i32_8, %c2_i32_6 : i32
    %22 = vector.broadcast %21 : i32 to vector<16x16xi32>
    %23 = arith.remsi %3, %22 : vector<16x16xi32>
    %c0_i32_9 = arith.constant 0 : i32
    %24 = vector.broadcast %c0_i32_9 : i32 to vector<16x16xi32>
    %25 = arith.cmpi ne, %23, %24 : vector<16x16xi32>
    %c0_i32_10 = arith.constant 0 : i32
    %26 = vector.broadcast %c0_i32_10 : i32 to vector<16x16xi32>
    %27 = arith.cmpi slt, %23, %26 : vector<16x16xi32>
    %c0_i32_11 = arith.constant 0 : i32
    %28 = arith.cmpi slt, %21, %c0_i32_11 : i32
    %29 = vector.broadcast %28 : i1 to vector<16x16xi1>
    %30 = vector.broadcast %29 : vector<16x16xi1> to vector<16x16xi1>
    %31 = arith.xori %27, %30 : vector<16x16xi1>
    %32 = arith.andi %31, %25 : vector<16x16xi1>
    %33 = vector.broadcast %21 : i32 to vector<16x16xi32>
    %34 = arith.addi %23, %33 : vector<16x16xi32>
    %35 = arith.select %32, %34, %23 : vector<16x16xi1>, vector<16x16xi32>
    %36 = arith.cmpi eq, %19, %35 : vector<16x16xi32>
    %37 = tpu.iota {dimensions = array<i32: 0>} : vector<16x32xi32>
    %38 = tpu.iota {dimensions = array<i32: 1>} : vector<16x32xi32>
    %c2_i32_12 = arith.constant 2 : i32
    %c0_i32_13 = arith.constant 0 : i32
    %39 = arith.cmpi eq, %c2_i32_12, %c0_i32_13 : i32
    %c1_i32_14 = arith.constant 1 : i32
    %40 = arith.select %39, %c1_i32_14, %c2_i32_12 : i32
    %41 = vector.broadcast %40 : i32 to vector<16x32xi32>
    %42 = arith.remsi %37, %41 : vector<16x32xi32>
    %c0_i32_15 = arith.constant 0 : i32
    %43 = vector.broadcast %c0_i32_15 : i32 to vector<16x32xi32>
    %44 = arith.cmpi ne, %42, %43 : vector<16x32xi32>
    %c0_i32_16 = arith.constant 0 : i32
    %45 = vector.broadcast %c0_i32_16 : i32 to vector<16x32xi32>
    %46 = arith.cmpi slt, %42, %45 : vector<16x32xi32>
    %c0_i32_17 = arith.constant 0 : i32
    %47 = arith.cmpi slt, %40, %c0_i32_17 : i32
    %48 = vector.broadcast %47 : i1 to vector<16x32xi1>
    %49 = vector.broadcast %48 : vector<16x32xi1> to vector<16x32xi1>
    %50 = arith.xori %46, %49 : vector<16x32xi1>
    %51 = arith.andi %50, %44 : vector<16x32xi1>
    %52 = vector.broadcast %40 : i32 to vector<16x32xi32>
    %53 = arith.addi %42, %52 : vector<16x32xi32>
    %54 = arith.select %51, %53, %42 : vector<16x32xi1>, vector<16x32xi32>
    %c2_i32_18 = arith.constant 2 : i32
    %c0_i32_19 = arith.constant 0 : i32
    %55 = arith.cmpi eq, %c2_i32_18, %c0_i32_19 : i32
    %c1_i32_20 = arith.constant 1 : i32
    %56 = arith.select %55, %c1_i32_20, %c2_i32_18 : i32
    %57 = vector.broadcast %56 : i32 to vector<16x32xi32>
    %58 = arith.remsi %38, %57 : vector<16x32xi32>
    %c0_i32_21 = arith.constant 0 : i32
    %59 = vector.broadcast %c0_i32_21 : i32 to vector<16x32xi32>
    %60 = arith.cmpi ne, %58, %59 : vector<16x32xi32>
    %c0_i32_22 = arith.constant 0 : i32
    %61 = vector.broadcast %c0_i32_22 : i32 to vector<16x32xi32>
    %62 = arith.cmpi slt, %58, %61 : vector<16x32xi32>
    %c0_i32_23 = arith.constant 0 : i32
    %63 = arith.cmpi slt, %56, %c0_i32_23 : i32
    %64 = vector.broadcast %63 : i1 to vector<16x32xi1>
    %65 = vector.broadcast %64 : vector<16x32xi1> to vector<16x32xi1>
    %66 = arith.xori %62, %65 : vector<16x32xi1>
    %67 = arith.andi %66, %60 : vector<16x32xi1>
    %68 = vector.broadcast %56 : i32 to vector<16x32xi32>
    %69 = arith.addi %58, %68 : vector<16x32xi32>
    %70 = arith.select %67, %69, %58 : vector<16x32xi1>, vector<16x32xi32>
    %71 = arith.cmpi eq, %54, %70 : vector<16x32xi32>
    %72 = arith.truncf %0 : vector<16x32xf32> to vector<16x32xbf16>
    %c0_24 = arith.constant 0 : index
    %c0_25 = arith.constant 0 : index
    %73 = vector.load %arg2[%c0_24, %c0_25] : memref<32x32xbf16, #tpu.memory_space<vmem>>, vector<32x32xbf16>
    %cst = arith.constant dense<0.000000e+00> : vector<16x32xf32>
    %74 = tpu.matmul %72, %73, %cst {dimension_numbers = #tpu.dot_dimension_numbers<[1], [0], [0], [1], [0, 0, 1, 1], [], []>} : vector<16x32xbf16>, vector<32x32xbf16>, vector<16x32xf32> -> vector<16x32xf32>
    %c0_26 = arith.constant 0 : index
    %c0_27 = arith.constant 0 : index
    %75 = vector.load %arg5[%c0_26, %c0_27] : memref<1x32xf32, #tpu.memory_space<vmem>>, vector<1x32xf32>
    %76 = vector.broadcast %75 : vector<1x32xf32> to vector<16x32xf32>
    %77 = arith.addf %74, %76 : vector<16x32xf32>
    %78 = arith.truncf %0 : vector<16x32xf32> to vector<16x32xbf16>
    %c0_28 = arith.constant 0 : index
    %c0_29 = arith.constant 0 : index
    %79 = vector.load %arg3[%c0_28, %c0_29] : memref<32x32xbf16, #tpu.memory_space<vmem>>, vector<32x32xbf16>
    %cst_30 = arith.constant dense<0.000000e+00> : vector<16x32xf32>
    %80 = tpu.matmul %78, %79, %cst_30 {dimension_numbers = #tpu.dot_dimension_numbers<[1], [0], [0], [1], [0, 0, 1, 1], [], []>} : vector<16x32xbf16>, vector<32x32xbf16>, vector<16x32xf32> -> vector<16x32xf32>
    %c0_31 = arith.constant 0 : index
    %c0_32 = arith.constant 0 : index
    %81 = vector.load %arg6[%c0_31, %c0_32] : memref<1x32xf32, #tpu.memory_space<vmem>>, vector<1x32xf32>
    %82 = vector.broadcast %81 : vector<1x32xf32> to vector<16x32xf32>
    %83 = arith.addf %80, %82 : vector<16x32xf32>
    %84 = arith.truncf %0 : vector<16x32xf32> to vector<16x32xbf16>
    %c0_33 = arith.constant 0 : index
    %c0_34 = arith.constant 0 : index
    %85 = vector.load %arg4[%c0_33, %c0_34] : memref<32x32xbf16, #tpu.memory_space<vmem>>, vector<32x32xbf16>
    %cst_35 = arith.constant dense<0.000000e+00> : vector<16x32xf32>
    %86 = tpu.matmul %84, %85, %cst_35 {dimension_numbers = #tpu.dot_dimension_numbers<[1], [0], [0], [1], [0, 0, 1, 1], [], []>} : vector<16x32xbf16>, vector<32x32xbf16>, vector<16x32xf32> -> vector<16x32xf32>
    %c0_36 = arith.constant 0 : index
    %c0_37 = arith.constant 0 : index
    %87 = vector.load %arg7[%c0_36, %c0_37] : memref<1x32xf32, #tpu.memory_space<vmem>>, vector<1x32xf32>
    %88 = vector.broadcast %87 : vector<1x32xf32> to vector<16x32xf32>
    %89 = arith.addf %86, %88 : vector<16x32xf32>
    %90 = vector.shape_cast %77 : vector<16x32xf32> to vector<16x4x8xf32>
    %91 = tpu.transpose %90, [1, 0, 2] : vector<16x4x8xf32> -> vector<4x16x8xf32>
    %92 = vector.shape_cast %83 : vector<16x32xf32> to vector<16x4x8xf32>
    %93 = tpu.transpose %92, [1, 0, 2] : vector<16x4x8xf32> -> vector<4x16x8xf32>
    %94 = vector.shape_cast %89 : vector<16x32xf32> to vector<16x4x8xf32>
    %95 = tpu.transpose %94, [1, 0, 2] : vector<16x4x8xf32> -> vector<4x16x8xf32>
    %96 = arith.truncf %91 : vector<4x16x8xf32> to vector<4x16x8xbf16>
    %97 = arith.truncf %93 : vector<4x16x8xf32> to vector<4x16x8xbf16>
    "tpu.trace_start"() <{level = 10 : i32, message = "hqd,hkd->hqk"}> : () -> ()
    %cst_38 = arith.constant dense<0.000000e+00> : vector<4x16x16xf32>
    %98 = tpu.matmul %96, %97, %cst_38 {dimension_numbers = #tpu.dot_dimension_numbers<[2], [2], [1], [1], [0, 0, 0, 1, 1, 1], [0], [0]>} : vector<4x16x8xbf16>, vector<4x16x8xbf16>, vector<4x16x16xf32> -> vector<4x16x16xf32>
    %cst_39 = arith.constant -1.000000e+30 : f32
    "tpu.trace_stop"() : () -> ()
    %99 = vector.shape_cast %36 : vector<16x16xi1> to vector<1x16x16xi1>
    %100 = vector.broadcast %99 : vector<1x16x16xi1> to vector<4x16x16xi1>
    %101 = vector.broadcast %cst_39 : f32 to vector<4x16x16xf32>
    %102 = arith.select %100, %98, %101 : vector<4x16x16xi1>, vector<4x16x16xf32>
    %cst_40 = arith.constant dense<0xFF800000> : vector<4x16xf32>
    %103 = vector.multi_reduction <maximumf>, %102, %cst_40 [2] : vector<4x16x16xf32> to vector<4x16xf32>
    %104 = vector.shape_cast %103 : vector<4x16xf32> to vector<4x16x1xf32>
    %105 = vector.broadcast %104 : vector<4x16x1xf32> to vector<4x16x16xf32>
    %106 = arith.subf %102, %105 : vector<4x16x16xf32>
    %107 = math.exp %106 : vector<4x16x16xf32>
    %cst_41 = arith.constant dense<0.000000e+00> : vector<4x16xf32>
    %108 = vector.multi_reduction <add>, %107, %cst_41 [2] : vector<4x16x16xf32> to vector<4x16xf32>
    %109 = vector.shape_cast %108 : vector<4x16xf32> to vector<4x16x1xf32>
    %110 = tpu.reciprocal %109 {approx = true} : vector<4x16x1xf32> -> vector<4x16x1xf32>
    %111 = vector.broadcast %110 : vector<4x16x1xf32> to vector<4x16x16xf32>
    %112 = arith.mulf %107, %111 : vector<4x16x16xf32>
    %113 = arith.truncf %112 : vector<4x16x16xf32> to vector<4x16x16xbf16>
    %114 = arith.truncf %95 : vector<4x16x8xf32> to vector<4x16x8xbf16>
    "tpu.trace_start"() <{level = 10 : i32, message = "hqk,hkd->hqd"}> : () -> ()
    %cst_42 = arith.constant dense<0.000000e+00> : vector<4x16x8xf32>
    %115 = tpu.matmul %113, %114, %cst_42 {dimension_numbers = #tpu.dot_dimension_numbers<[2], [1], [1], [2], [0, 0, 0, 1, 1, 2], [0], [0]>} : vector<4x16x16xbf16>, vector<4x16x8xbf16>, vector<4x16x8xf32> -> vector<4x16x8xf32>
    "tpu.trace_stop"() : () -> ()
    %116 = vector.extract_strided_slice %115 {offsets = [0, 0, 0], sizes = [1, 16, 8], strides = [1, 1, 1]} : vector<4x16x8xf32> to vector<1x16x8xf32>
    %117 = vector.shape_cast %116 : vector<1x16x8xf32> to vector<16x8xf32>
    %118 = vector.extract_strided_slice %115 {offsets = [1, 0, 0], sizes = [1, 16, 8], strides = [1, 1, 1]} : vector<4x16x8xf32> to vector<1x16x8xf32>
    %119 = vector.shape_cast %118 : vector<1x16x8xf32> to vector<16x8xf32>
    %120 = vector.extract_strided_slice %115 {offsets = [2, 0, 0], sizes = [1, 16, 8], strides = [1, 1, 1]} : vector<4x16x8xf32> to vector<1x16x8xf32>
    %121 = vector.shape_cast %120 : vector<1x16x8xf32> to vector<16x8xf32>
    %122 = vector.extract_strided_slice %115 {offsets = [3, 0, 0], sizes = [1, 16, 8], strides = [1, 1, 1]} : vector<4x16x8xf32> to vector<1x16x8xf32>
    %123 = vector.shape_cast %122 : vector<1x16x8xf32> to vector<16x8xf32>
    %124 = tpu.concatenate %117, %119, %121, %123 in 1 : vector<16x8xf32>, vector<16x8xf32>, vector<16x8xf32>, vector<16x8xf32> -> vector<16x32xf32>
    %125 = arith.truncf %124 : vector<16x32xf32> to vector<16x32xbf16>
    %c0_43 = arith.constant 0 : index
    %c0_44 = arith.constant 0 : index
    %126 = vector.load %arg8[%c0_43, %c0_44] : memref<32x32xbf16, #tpu.memory_space<vmem>>, vector<32x32xbf16>
    %cst_45 = arith.constant dense<0.000000e+00> : vector<16x32xf32>
    %127 = tpu.matmul %125, %126, %cst_45 {dimension_numbers = #tpu.dot_dimension_numbers<[1], [0], [0], [1], [0, 0, 1, 1], [], []>} : vector<16x32xbf16>, vector<32x32xbf16>, vector<16x32xf32> -> vector<16x32xf32>
    %c0_46 = arith.constant 0 : index
    %c0_47 = arith.constant 0 : index
    %128 = vector.load %arg9[%c0_46, %c0_47] : memref<1x32xf32, #tpu.memory_space<vmem>>, vector<1x32xf32>
    %129 = vector.broadcast %128 : vector<1x32xf32> to vector<16x32xf32>
    %130 = arith.addf %127, %129 : vector<16x32xf32>
    %131 = arith.addf %0, %130 : vector<16x32xf32>
    %c0_48 = arith.constant 0 : index
    %c0_49 = arith.constant 0 : index
    %132 = vector.load %arg22[%c0_48, %c0_49] : memref<1x32xf32, #tpu.memory_space<vmem>>, vector<1x32xf32>
    %c0_50 = arith.constant 0 : index
    %c0_51 = arith.constant 0 : index
    %133 = vector.load %arg23[%c0_50, %c0_51] : memref<1x32xf32, #tpu.memory_space<vmem>>, vector<1x32xf32>
    %cst_52 = arith.constant dense<0.000000e+00> : vector<16xf32>
    %134 = vector.multi_reduction <add>, %131, %cst_52 [1] : vector<16x32xf32> to vector<16xf32>
    %135 = vector.shape_cast %134 : vector<16xf32> to vector<16x1xf32>
    %cst_53 = arith.constant 3.200000e+01 : f32
    %136 = vector.broadcast %cst_53 : f32 to vector<16x1xf32>
    %137 = arith.divf %135, %136 : vector<16x1xf32>
    %138 = vector.broadcast %137 : vector<16x1xf32> to vector<16x32xf32>
    %139 = arith.subf %131, %138 : vector<16x32xf32>
    %140 = arith.mulf %139, %139 : vector<16x32xf32>
    %cst_54 = arith.constant dense<0.000000e+00> : vector<16xf32>
    %141 = vector.multi_reduction <add>, %140, %cst_54 [1] : vector<16x32xf32> to vector<16xf32>
    %142 = vector.shape_cast %141 : vector<16xf32> to vector<16x1xf32>
    %cst_55 = arith.constant 3.200000e+01 : f32
    %143 = vector.broadcast %cst_55 : f32 to vector<16x1xf32>
    %144 = arith.divf %142, %143 : vector<16x1xf32>
    %cst_56 = arith.constant 9.99999997E-7 : f32
    %145 = vector.broadcast %cst_56 : f32 to vector<16x1xf32>
    %146 = arith.addf %144, %145 : vector<16x1xf32>
    %147 = math.rsqrt %146 : vector<16x1xf32>
    %148 = vector.broadcast %147 : vector<16x1xf32> to vector<16x32xf32>
    %149 = arith.mulf %139, %148 : vector<16x32xf32>
    %150 = vector.broadcast %132 : vector<1x32xf32> to vector<16x32xf32>
    %151 = arith.mulf %149, %150 : vector<16x32xf32>
    %152 = vector.broadcast %133 : vector<1x32xf32> to vector<16x32xf32>
    %153 = arith.addf %151, %152 : vector<16x32xf32>
    %154 = arith.truncf %153 : vector<16x32xf32> to vector<16x32xbf16>
    %c0_57 = arith.constant 0 : index
    %c0_58 = arith.constant 0 : index
    %155 = vector.load %arg10[%c0_57, %c0_58] : memref<32x32xbf16, #tpu.memory_space<vmem>>, vector<32x32xbf16>
    %cst_59 = arith.constant dense<0.000000e+00> : vector<16x32xf32>
    %156 = tpu.matmul %154, %155, %cst_59 {dimension_numbers = #tpu.dot_dimension_numbers<[1], [0], [0], [1], [0, 0, 1, 1], [], []>} : vector<16x32xbf16>, vector<32x32xbf16>, vector<16x32xf32> -> vector<16x32xf32>
    %c0_60 = arith.constant 0 : index
    %c0_61 = arith.constant 0 : index
    %157 = vector.load %arg13[%c0_60, %c0_61] : memref<1x32xf32, #tpu.memory_space<vmem>>, vector<1x32xf32>
    %158 = vector.broadcast %157 : vector<1x32xf32> to vector<16x32xf32>
    %159 = arith.addf %156, %158 : vector<16x32xf32>
    %160 = arith.truncf %1 : vector<32x32xf32> to vector<32x32xbf16>
    %c0_62 = arith.constant 0 : index
    %c0_63 = arith.constant 0 : index
    %161 = vector.load %arg11[%c0_62, %c0_63] : memref<32x32xbf16, #tpu.memory_space<vmem>>, vector<32x32xbf16>
    %cst_64 = arith.constant dense<0.000000e+00> : vector<32x32xf32>
    %162 = tpu.matmul %160, %161, %cst_64 {dimension_numbers = #tpu.dot_dimension_numbers<[1], [0], [0], [1], [0, 0, 1, 1], [], []>} : vector<32x32xbf16>, vector<32x32xbf16>, vector<32x32xf32> -> vector<32x32xf32>
    %c0_65 = arith.constant 0 : index
    %c0_66 = arith.constant 0 : index
    %163 = vector.load %arg14[%c0_65, %c0_66] : memref<1x32xf32, #tpu.memory_space<vmem>>, vector<1x32xf32>
    %164 = vector.broadcast %163 : vector<1x32xf32> to vector<32x32xf32>
    %165 = arith.addf %162, %164 : vector<32x32xf32>
    %166 = arith.truncf %1 : vector<32x32xf32> to vector<32x32xbf16>
    %c0_67 = arith.constant 0 : index
    %c0_68 = arith.constant 0 : index
    %167 = vector.load %arg12[%c0_67, %c0_68] : memref<32x32xbf16, #tpu.memory_space<vmem>>, vector<32x32xbf16>
    %cst_69 = arith.constant dense<0.000000e+00> : vector<32x32xf32>
    %168 = tpu.matmul %166, %167, %cst_69 {dimension_numbers = #tpu.dot_dimension_numbers<[1], [0], [0], [1], [0, 0, 1, 1], [], []>} : vector<32x32xbf16>, vector<32x32xbf16>, vector<32x32xf32> -> vector<32x32xf32>
    %c0_70 = arith.constant 0 : index
    %c0_71 = arith.constant 0 : index
    %169 = vector.load %arg15[%c0_70, %c0_71] : memref<1x32xf32, #tpu.memory_space<vmem>>, vector<1x32xf32>
    %170 = vector.broadcast %169 : vector<1x32xf32> to vector<32x32xf32>
    %171 = arith.addf %168, %170 : vector<32x32xf32>
    %172 = vector.shape_cast %159 : vector<16x32xf32> to vector<16x4x8xf32>
    %173 = tpu.transpose %172, [1, 0, 2] : vector<16x4x8xf32> -> vector<4x16x8xf32>
    %174 = vector.shape_cast %165 : vector<32x32xf32> to vector<32x4x8xf32>
    %175 = tpu.transpose %174, [1, 0, 2] : vector<32x4x8xf32> -> vector<4x32x8xf32>
    %176 = vector.shape_cast %171 : vector<32x32xf32> to vector<32x4x8xf32>
    %177 = tpu.transpose %176, [1, 0, 2] : vector<32x4x8xf32> -> vector<4x32x8xf32>
    %178 = arith.truncf %173 : vector<4x16x8xf32> to vector<4x16x8xbf16>
    %179 = arith.truncf %175 : vector<4x32x8xf32> to vector<4x32x8xbf16>
    "tpu.trace_start"() <{level = 10 : i32, message = "hqd,hkd->hqk"}> : () -> ()
    %cst_72 = arith.constant dense<0.000000e+00> : vector<4x16x32xf32>
    %180 = tpu.matmul %178, %179, %cst_72 {dimension_numbers = #tpu.dot_dimension_numbers<[2], [2], [1], [1], [0, 0, 0, 1, 1, 1], [0], [0]>} : vector<4x16x8xbf16>, vector<4x32x8xbf16>, vector<4x16x32xf32> -> vector<4x16x32xf32>
    %cst_73 = arith.constant -1.000000e+30 : f32
    "tpu.trace_stop"() : () -> ()
    %181 = vector.shape_cast %71 : vector<16x32xi1> to vector<1x16x32xi1>
    %182 = vector.broadcast %181 : vector<1x16x32xi1> to vector<4x16x32xi1>
    %183 = vector.broadcast %cst_73 : f32 to vector<4x16x32xf32>
    %184 = arith.select %182, %180, %183 : vector<4x16x32xi1>, vector<4x16x32xf32>
    %cst_74 = arith.constant dense<0xFF800000> : vector<4x16xf32>
    %185 = vector.multi_reduction <maximumf>, %184, %cst_74 [2] : vector<4x16x32xf32> to vector<4x16xf32>
    %186 = vector.shape_cast %185 : vector<4x16xf32> to vector<4x16x1xf32>
    %187 = vector.broadcast %186 : vector<4x16x1xf32> to vector<4x16x32xf32>
    %188 = arith.subf %184, %187 : vector<4x16x32xf32>
    %189 = math.exp %188 : vector<4x16x32xf32>
    %cst_75 = arith.constant dense<0.000000e+00> : vector<4x16xf32>
    %190 = vector.multi_reduction <add>, %189, %cst_75 [2] : vector<4x16x32xf32> to vector<4x16xf32>
    %191 = vector.shape_cast %190 : vector<4x16xf32> to vector<4x16x1xf32>
    %192 = tpu.reciprocal %191 {approx = true} : vector<4x16x1xf32> -> vector<4x16x1xf32>
    %193 = vector.broadcast %192 : vector<4x16x1xf32> to vector<4x16x32xf32>
    %194 = arith.mulf %189, %193 : vector<4x16x32xf32>
    %195 = arith.truncf %194 : vector<4x16x32xf32> to vector<4x16x32xbf16>
    %196 = arith.truncf %177 : vector<4x32x8xf32> to vector<4x32x8xbf16>
    "tpu.trace_start"() <{level = 10 : i32, message = "hqk,hkd->hqd"}> : () -> ()
    %cst_76 = arith.constant dense<0.000000e+00> : vector<4x16x8xf32>
    %197 = tpu.matmul %195, %196, %cst_76 {dimension_numbers = #tpu.dot_dimension_numbers<[2], [1], [1], [2], [0, 0, 0, 1, 1, 2], [0], [0]>} : vector<4x16x32xbf16>, vector<4x32x8xbf16>, vector<4x16x8xf32> -> vector<4x16x8xf32>
    "tpu.trace_stop"() : () -> ()
    %198 = vector.extract_strided_slice %197 {offsets = [0, 0, 0], sizes = [1, 16, 8], strides = [1, 1, 1]} : vector<4x16x8xf32> to vector<1x16x8xf32>
    %199 = vector.shape_cast %198 : vector<1x16x8xf32> to vector<16x8xf32>
    %200 = vector.extract_strided_slice %197 {offsets = [1, 0, 0], sizes = [1, 16, 8], strides = [1, 1, 1]} : vector<4x16x8xf32> to vector<1x16x8xf32>
    %201 = vector.shape_cast %200 : vector<1x16x8xf32> to vector<16x8xf32>
    %202 = vector.extract_strided_slice %197 {offsets = [2, 0, 0], sizes = [1, 16, 8], strides = [1, 1, 1]} : vector<4x16x8xf32> to vector<1x16x8xf32>
    %203 = vector.shape_cast %202 : vector<1x16x8xf32> to vector<16x8xf32>
    %204 = vector.extract_strided_slice %197 {offsets = [3, 0, 0], sizes = [1, 16, 8], strides = [1, 1, 1]} : vector<4x16x8xf32> to vector<1x16x8xf32>
    %205 = vector.shape_cast %204 : vector<1x16x8xf32> to vector<16x8xf32>
    %206 = tpu.concatenate %199, %201, %203, %205 in 1 : vector<16x8xf32>, vector<16x8xf32>, vector<16x8xf32>, vector<16x8xf32> -> vector<16x32xf32>
    %207 = arith.truncf %206 : vector<16x32xf32> to vector<16x32xbf16>
    %c0_77 = arith.constant 0 : index
    %c0_78 = arith.constant 0 : index
    %208 = vector.load %arg16[%c0_77, %c0_78] : memref<32x32xbf16, #tpu.memory_space<vmem>>, vector<32x32xbf16>
    %cst_79 = arith.constant dense<0.000000e+00> : vector<16x32xf32>
    %209 = tpu.matmul %207, %208, %cst_79 {dimension_numbers = #tpu.dot_dimension_numbers<[1], [0], [0], [1], [0, 0, 1, 1], [], []>} : vector<16x32xbf16>, vector<32x32xbf16>, vector<16x32xf32> -> vector<16x32xf32>
    %c0_80 = arith.constant 0 : index
    %c0_81 = arith.constant 0 : index
    %210 = vector.load %arg17[%c0_80, %c0_81] : memref<1x32xf32, #tpu.memory_space<vmem>>, vector<1x32xf32>
    %211 = vector.broadcast %210 : vector<1x32xf32> to vector<16x32xf32>
    %212 = arith.addf %209, %211 : vector<16x32xf32>
    %213 = arith.addf %153, %212 : vector<16x32xf32>
    %c0_82 = arith.constant 0 : index
    %c0_83 = arith.constant 0 : index
    %214 = vector.load %arg24[%c0_82, %c0_83] : memref<1x32xf32, #tpu.memory_space<vmem>>, vector<1x32xf32>
    %c0_84 = arith.constant 0 : index
    %c0_85 = arith.constant 0 : index
    %215 = vector.load %arg25[%c0_84, %c0_85] : memref<1x32xf32, #tpu.memory_space<vmem>>, vector<1x32xf32>
    %cst_86 = arith.constant dense<0.000000e+00> : vector<16xf32>
    %216 = vector.multi_reduction <add>, %213, %cst_86 [1] : vector<16x32xf32> to vector<16xf32>
    %217 = vector.shape_cast %216 : vector<16xf32> to vector<16x1xf32>
    %cst_87 = arith.constant 3.200000e+01 : f32
    %218 = vector.broadcast %cst_87 : f32 to vector<16x1xf32>
    %219 = arith.divf %217, %218 : vector<16x1xf32>
    %220 = vector.broadcast %219 : vector<16x1xf32> to vector<16x32xf32>
    %221 = arith.subf %213, %220 : vector<16x32xf32>
    %222 = arith.mulf %221, %221 : vector<16x32xf32>
    %cst_88 = arith.constant dense<0.000000e+00> : vector<16xf32>
    %223 = vector.multi_reduction <add>, %222, %cst_88 [1] : vector<16x32xf32> to vector<16xf32>
    %224 = vector.shape_cast %223 : vector<16xf32> to vector<16x1xf32>
    %cst_89 = arith.constant 3.200000e+01 : f32
    %225 = vector.broadcast %cst_89 : f32 to vector<16x1xf32>
    %226 = arith.divf %224, %225 : vector<16x1xf32>
    %cst_90 = arith.constant 9.99999997E-7 : f32
    %227 = vector.broadcast %cst_90 : f32 to vector<16x1xf32>
    %228 = arith.addf %226, %227 : vector<16x1xf32>
    %229 = math.rsqrt %228 : vector<16x1xf32>
    %230 = vector.broadcast %229 : vector<16x1xf32> to vector<16x32xf32>
    %231 = arith.mulf %221, %230 : vector<16x32xf32>
    %232 = vector.broadcast %214 : vector<1x32xf32> to vector<16x32xf32>
    %233 = arith.mulf %231, %232 : vector<16x32xf32>
    %234 = vector.broadcast %215 : vector<1x32xf32> to vector<16x32xf32>
    %235 = arith.addf %233, %234 : vector<16x32xf32>
    %236 = arith.truncf %235 : vector<16x32xf32> to vector<16x32xbf16>
    %c0_91 = arith.constant 0 : index
    %c0_92 = arith.constant 0 : index
    %237 = vector.load %arg18[%c0_91, %c0_92] : memref<32x64xbf16, #tpu.memory_space<vmem>>, vector<32x64xbf16>
    %cst_93 = arith.constant dense<0.000000e+00> : vector<16x64xf32>
    %238 = tpu.matmul %236, %237, %cst_93 {dimension_numbers = #tpu.dot_dimension_numbers<[1], [0], [0], [1], [0, 0, 1, 1], [], []>} : vector<16x32xbf16>, vector<32x64xbf16>, vector<16x64xf32> -> vector<16x64xf32>
    %c0_94 = arith.constant 0 : index
    %c0_95 = arith.constant 0 : index
    %239 = vector.load %arg19[%c0_94, %c0_95] : memref<1x64xf32, #tpu.memory_space<vmem>>, vector<1x64xf32>
    %240 = vector.broadcast %239 : vector<1x64xf32> to vector<16x64xf32>
    %241 = arith.addf %238, %240 : vector<16x64xf32>
    %cst_96 = arith.constant 0.000000e+00 : f32
    %242 = vector.broadcast %cst_96 : f32 to vector<16x64xf32>
    %243 = arith.maximumf %241, %242 : vector<16x64xf32>
    %244 = arith.truncf %243 : vector<16x64xf32> to vector<16x64xbf16>
    %c0_97 = arith.constant 0 : index
    %c0_98 = arith.constant 0 : index
    %245 = vector.load %arg20[%c0_97, %c0_98] : memref<64x32xbf16, #tpu.memory_space<vmem>>, vector<64x32xbf16>
    %cst_99 = arith.constant dense<0.000000e+00> : vector<16x32xf32>
    %246 = tpu.matmul %244, %245, %cst_99 {dimension_numbers = #tpu.dot_dimension_numbers<[1], [0], [0], [1], [0, 0, 1, 1], [], []>} : vector<16x64xbf16>, vector<64x32xbf16>, vector<16x32xf32> -> vector<16x32xf32>
    %c0_100 = arith.constant 0 : index
    %c0_101 = arith.constant 0 : index
    %247 = vector.load %arg21[%c0_100, %c0_101] : memref<1x32xf32, #tpu.memory_space<vmem>>, vector<1x32xf32>
    %248 = vector.broadcast %247 : vector<1x32xf32> to vector<16x32xf32>
    %249 = arith.addf %246, %248 : vector<16x32xf32>
    %250 = arith.addf %235, %249 : vector<16x32xf32>
    %c0_102 = arith.constant 0 : index
    %c0_103 = arith.constant 0 : index
    %251 = vector.load %arg26[%c0_102, %c0_103] : memref<1x32xf32, #tpu.memory_space<vmem>>, vector<1x32xf32>
    %c0_104 = arith.constant 0 : index
    %c0_105 = arith.constant 0 : index
    %252 = vector.load %arg27[%c0_104, %c0_105] : memref<1x32xf32, #tpu.memory_space<vmem>>, vector<1x32xf32>
    %cst_106 = arith.constant dense<0.000000e+00> : vector<16xf32>
    %253 = vector.multi_reduction <add>, %250, %cst_106 [1] : vector<16x32xf32> to vector<16xf32>
    %254 = vector.shape_cast %253 : vector<16xf32> to vector<16x1xf32>
    %cst_107 = arith.constant 3.200000e+01 : f32
    %255 = vector.broadcast %cst_107 : f32 to vector<16x1xf32>
    %256 = arith.divf %254, %255 : vector<16x1xf32>
    %257 = vector.broadcast %256 : vector<16x1xf32> to vector<16x32xf32>
    %258 = arith.subf %250, %257 : vector<16x32xf32>
    %259 = arith.mulf %258, %258 : vector<16x32xf32>
    %cst_108 = arith.constant dense<0.000000e+00> : vector<16xf32>
    %260 = vector.multi_reduction <add>, %259, %cst_108 [1] : vector<16x32xf32> to vector<16xf32>
    %261 = vector.shape_cast %260 : vector<16xf32> to vector<16x1xf32>
    %cst_109 = arith.constant 3.200000e+01 : f32
    %262 = vector.broadcast %cst_109 : f32 to vector<16x1xf32>
    %263 = arith.divf %261, %262 : vector<16x1xf32>
    %cst_110 = arith.constant 9.99999997E-7 : f32
    %264 = vector.broadcast %cst_110 : f32 to vector<16x1xf32>
    %265 = arith.addf %263, %264 : vector<16x1xf32>
    %266 = math.rsqrt %265 : vector<16x1xf32>
    %267 = vector.broadcast %266 : vector<16x1xf32> to vector<16x32xf32>
    %268 = arith.mulf %258, %267 : vector<16x32xf32>
    %269 = vector.broadcast %251 : vector<1x32xf32> to vector<16x32xf32>
    %270 = arith.mulf %268, %269 : vector<16x32xf32>
    %271 = vector.broadcast %252 : vector<1x32xf32> to vector<16x32xf32>
    %272 = arith.addf %270, %271 : vector<16x32xf32>
    %c0_111 = arith.constant 0 : index
    %c0_112 = arith.constant 0 : index
    %273 = vector.load %arg28[%c0_111, %c0_112] : memref<16x32xf32, #tpu.memory_space<vmem>>, vector<16x32xf32>
    tpu.vector_store %arg28[%c0_111, %c0_112], %272 {strides = array<i32>} : memref<16x32xf32, #tpu.memory_space<vmem>>, vector<16x32xf32>,
    return
  }
}

</mosaic_0001>

<llo_original>
// kernel: tpu_custom_call.1
$region0: #{tpu_custom_call.1}
  #allocation0 [shape = 'u32[]', space=smem, size = 0x4, offset = 0x4, fixed_abs, tag = 'smem constant byte address 0x4 - core index']
  #allocation1 [shape = 'u32[144,128]{1,0:T(1,128)}', space=vmem, size = 0x12000, scoped, tag = 'internal scratch']
  %s0 = inlined_call_operand.vmem [shape: f32[16,32], index: 0, kind: input, shape index: {}]
  %s1 = inlined_call_operand.vmem [shape: f32[32,32], index: 1, kind: input, shape index: {}]
  %s2 = inlined_call_operand.hbm [shape: bf16[32,32], index: 2, kind: input, shape index: {}]
  %s3 = inlined_call_operand.hbm [shape: bf16[32,32], index: 3, kind: input, shape index: {}]
  %s4 = inlined_call_operand.hbm [shape: bf16[32,32], index: 4, kind: input, shape index: {}]
  %s5 = inlined_call_operand.hbm [shape: f32[1,32], index: 5, kind: input, shape index: {}]
  %s6 = inlined_call_operand.hbm [shape: f32[1,32], index: 6, kind: input, shape index: {}]
  %s7 = inlined_call_operand.hbm [shape: f32[1,32], index: 7, kind: input, shape index: {}]
  %s8 = inlined_call_operand.hbm [shape: bf16[32,32], index: 8, kind: input, shape index: {}]
  %s9 = inlined_call_operand.hbm [shape: f32[1,32], index: 9, kind: input, shape index: {}]
  %s10 = inlined_call_operand.vmem [shape: bf16[32,32], index: 10, kind: input, shape index: {}]
  %s11 = inlined_call_operand.hbm [shape: bf16[32,32], index: 11, kind: input, shape index: {}]
  %s12 = inlined_call_operand.hbm [shape: bf16[32,32], index: 12, kind: input, shape index: {}]
  %s13 = inlined_call_operand.hbm [shape: f32[1,32], index: 13, kind: input, shape index: {}]
  %s14 = inlined_call_operand.hbm [shape: f32[1,32], index: 14, kind: input, shape index: {}]
  %s15 = inlined_call_operand.hbm [shape: f32[1,32], index: 15, kind: input, shape index: {}]
  %s16 = inlined_call_operand.vmem [shape: bf16[32,32], index: 16, kind: input, shape index: {}]
  %s17 = inlined_call_operand.hbm [shape: f32[1,32], index: 17, kind: input, shape index: {}]
  %s18 = inlined_call_operand.vmem [shape: bf16[32,64], index: 18, kind: input, shape index: {}]
  %s19 = inlined_call_operand.vmem [shape: f32[1,64], index: 19, kind: input, shape index: {}]
  %s20 = inlined_call_operand.vmem [shape: bf16[64,32], index: 20, kind: input, shape index: {}]
  %s21 = inlined_call_operand.vmem [shape: f32[1,32], index: 21, kind: input, shape index: {}]
  %s22 = inlined_call_operand.vmem [shape: f32[1,32], index: 22, kind: input, shape index: {}]
  %s23 = inlined_call_operand.vmem [shape: f32[1,32], index: 23, kind: input, shape index: {}]
  %s24 = inlined_call_operand.vmem [shape: f32[1,32], index: 24, kind: input, shape index: {}]
  %s25 = inlined_call_operand.vmem [shape: f32[1,32], index: 25, kind: input, shape index: {}]
  %s26 = inlined_call_operand.vmem [shape: f32[1,32], index: 26, kind: input, shape index: {}]
  %s27 = inlined_call_operand.vmem [shape: f32[1,32], index: 27, kind: input, shape index: {}]
  %s28 = inlined_call_operand.hbm [shape: f32[16,32], index: 28, kind: output, shape index: {}]
  %s29 = sld [smem:[#allocation0]]
  $region178: #{tpu_custom_call.1} parent=0
    _
  %s31 = ssub.s32 1, %s29
  %s32 = scalar_select 0, %s31, %s29
  $region1: #{tpu_custom_call.1} parent=0
    #allocation2 [shape = 'u8[8192]{0}', space=vmem, size = 0x2000, scoped, tag = 'input window, operand 2, single buffered']
    #allocation3 [shape = 's32[1]{0}', space=sflag, size = 0x4, scoped, tag = 'scoped memory for tpu_custom_call.1']
    #allocation4 [shape = 's32[1]{0}', space=sflag, size = 0x4, scoped, tag = 'scoped memory for tpu_custom_call.1']
    #allocation5 [shape = 'u8[8192]{0}', space=vmem, size = 0x2000, scoped, tag = 'input window, operand 3, single buffered']
    #allocation6 [shape = 's32[1]{0}', space=sflag, size = 0x4, scoped, tag = 'scoped memory for tpu_custom_call.1']
    #allocation7 [shape = 'u8[8192]{0}', space=vmem, size = 0x2000, scoped, tag = 'input window, operand 4, single buffered']
    #allocation8 [shape = 'u8[512]{0}', space=vmem, size = 0x400, scoped, tag = 'input window, operand 5, single buffered']
    #allocation9 [shape = 's32[1]{0}', space=sflag, size = 0x4, scoped, tag = 'scoped memory for tpu_custom_call.1']
    #allocation10 [shape = 'u8[512]{0}', space=vmem, size = 0x400, scoped, tag = 'input window, operand 6, single buffered']
    #allocation11 [shape = 'u8[512]{0}', space=vmem, size = 0x400, scoped, tag = 'input window, operand 7, single buffered']
    #allocation12 [shape = 's32[1]{0}', space=sflag, size = 0x4, scoped, tag = 'scoped memory for tpu_custom_call.1']
    #allocation13 [shape = 'u8[8192]{0}', space=vmem, size = 0x2000, scoped, tag = 'input window, operand 8, single buffered']
    #allocation14 [shape = 'u8[512]{0}', space=vmem, size = 0x400, scoped, tag = 'input window, operand 9, single buffered']
    #allocation15 [shape = 's32[1]{0}', space=sflag, size = 0x4, scoped, tag = 'scoped memory for tpu_custom_call.1']
    #allocation16 [shape = 'u8[8192]{0}', space=vmem, size = 0x2000, scoped, tag = 'input window, operand 11, single buffered']
    #allocation17 [shape = 'u8[8192]{0}', space=vmem, size = 0x2000, scoped, tag = 'input window, operand 12, single buffered']
    #allocation18 [shape = 's32[1]{0}', space=sflag, size = 0x4, scoped, tag = 'scoped memory for tpu_custom_call.1']
    #allocation19 [shape = 'u8[512]{0}', space=vmem, size = 0x400, scoped, tag = 'input window, operand 13, single buffered']
    #allocation20 [shape = 'u8[512]{0}', space=vmem, size = 0x400, scoped, tag = 'input window, operand 14, single buffered']
    #allocation21 [shape = 's32[1]{0}', space=sflag, size = 0x4, scoped, tag = 'scoped memory for tpu_custom_call.1']
    #allocation22 [shape = 'u8[512]{0}', space=vmem, size = 0x400, scoped, tag = 'input window, operand 15, single buffered']
    #allocation23 [shape = 'u8[512]{0}', space=vmem, size = 0x400, scoped, tag = 'input window, operand 17, single buffered']
    #allocation24 [shape = 's32[1]{0}', space=sflag, size = 0x4, scoped, tag = 'scoped memory for tpu_custom_call.1']
    #allocation25 [shape = 'u8[8192]{0}', space=vmem, size = 0x2000, scoped, tag = 'output window, operand 0, single buffered']
    %33 = vsyncpa [#allocation3], 0
    %34 = vsyncpa [#allocation6], 0
    %35 = vsyncpa [#allocation9], 0
    %36 = vsyncpa [#allocation12], 0
    %37 = vsyncpa [#allocation15], 0
    %38 = vsyncpa [#allocation18], 0
    %39 = vsyncpa [#allocation21], 0
    %40 = vsyncpa [#allocation24], 0
    %41 = vsyncpa [#allocation4], 0
    // Predicated region
    $region2: #{tpu_custom_call.1} parent=1 // pred_check
      _
    $region3: #{tpu_custom_call.1} parent=1 // pred_check_branch
      %43 = sbr.rel (0) target = $region5
    $region4: #{tpu_custom_call.1} parent=1 // pred_region
      _
    $region5: #{tpu_custom_call.1} parent=1 // pred_fallthru
      _
    // Predicated region
    $region6: #{tpu_custom_call.1} parent=1 // pred_check
      _
    $region7: #{tpu_custom_call.1} parent=1 // pred_check_branch
      %45 = sbr.rel (0) target = $region9
    $region8: #{tpu_custom_call.1} parent=1 // pred_region
      _
    $region9: #{tpu_custom_call.1} parent=1 // pred_fallthru
      _
    // Predicated region
    $region10: #{tpu_custom_call.1} parent=1 // pred_check
      _
    $region11: #{tpu_custom_call.1} parent=1 // pred_check_branch
      %47 = sbr.rel (0) target = $region13
    $region12: #{tpu_custom_call.1} parent=1 // pred_region
      %s49 = ssub.s32 256, 256
      %50 = vsyncadd [#allocation3], %s49
      %s51 = sshll.u32 [#allocation2], 4
      %s52 = int_to_ptr.vmem [resolvable:$true] %s51
      %57 = dma.hbm_to_vmem [thread:$0]  %s2, 256, %s52, [#allocation3], 64, 64, 4
    $region13: #{tpu_custom_call.1} parent=1 // pred_fallthru
      _
    // Predicated region
    $region14: #{tpu_custom_call.1} parent=1 // pred_check
      _
    $region15: #{tpu_custom_call.1} parent=1 // pred_check_branch
      %59 = sbr.rel (0) target = $region17
    $region16: #{tpu_custom_call.1} parent=1 // pred_region
      %s61 = ssub.s32 256, 256
      %62 = vsyncadd [#allocation6], %s61
      %s63 = sshll.u32 [#allocation5], 4
      %s64 = int_to_ptr.vmem [resolvable:$true] %s63
      %69 = dma.hbm_to_vmem [thread:$0]  %s3, 256, %s64, [#allocation6], 64, 64, 4
    $region17: #{tpu_custom_call.1} parent=1 // pred_fallthru
      _
    // Predicated region
    $region18: #{tpu_custom_call.1} parent=1 // pred_check
      _
    $region19: #{tpu_custom_call.1} parent=1 // pred_check_branch
      %71 = sbr.rel (0) target = $region21
    $region20: #{tpu_custom_call.1} parent=1 // pred_region
      %s73 = ssub.s32 256, 256
      %74 = vsyncadd [#allocation6], %s73
      %s75 = sshll.u32 [#allocation7], 4
      %s76 = int_to_ptr.vmem [resolvable:$true] %s75
      %81 = dma.hbm_to_vmem [thread:$0]  %s4, 256, %s76, [#allocation6], 64, 64, 4
    $region21: #{tpu_custom_call.1} parent=1 // pred_fallthru
      _
    // Predicated region
    $region22: #{tpu_custom_call.1} parent=1 // pred_check
      _
    $region23: #{tpu_custom_call.1} parent=1 // pred_check_branch
      %83 = sbr.rel (0) target = $region25
    $region24: #{tpu_custom_call.1} parent=1 // pred_region
      %s85 = ssub.s32 16, 16
      %86 = vsyncadd [#allocation9], %s85
      %s88 = sshll.u32 [#allocation8], 4
      %s89 = int_to_ptr.vmem [resolvable:$true] %s88
      %91 = dma.hbm_to_vmem [thread:$0]  %s5, 16, %s89, [#allocation9]
    $region25: #{tpu_custom_call.1} parent=1 // pred_fallthru
      _
    // Predicated region
    $region26: #{tpu_custom_call.1} parent=1 // pred_check
      _
    $region27: #{tpu_custom_call.1} parent=1 // pred_check_branch
      %93 = sbr.rel (0) target = $region29
    $region28: #{tpu_custom_call.1} parent=1 // pred_region
      %s95 = ssub.s32 16, 16
      %96 = vsyncadd [#allocation9], %s95
      %s98 = sshll.u32 [#allocation10], 4
      %s99 = int_to_ptr.vmem [resolvable:$true] %s98
      %101 = dma.hbm_to_vmem [thread:$0]  %s6, 16, %s99, [#allocation9]
    $region29: #{tpu_custom_call.1} parent=1 // pred_fallthru
      _
    // Predicated region
    $region30: #{tpu_custom_call.1} parent=1 // pred_check
      _
    $region31: #{tpu_custom_call.1} parent=1 // pred_check_branch
      %103 = sbr.rel (0) target = $region33
    $region32: #{tpu_custom_call.1} parent=1 // pred_region
      %s105 = ssub.s32 16, 16
      %106 = vsyncadd [#allocation12], %s105
      %s108 = sshll.u32 [#allocation11], 4
      %s109 = int_to_ptr.vmem [resolvable:$true] %s108
      %111 = dma.hbm_to_vmem [thread:$0]  %s7, 16, %s109, [#allocation12]
    $region33: #{tpu_custom_call.1} parent=1 // pred_fallthru
      _
    // Predicated region
    $region34: #{tpu_custom_call.1} parent=1 // pred_check
      _
    $region35: #{tpu_custom_call.1} parent=1 // pred_check_branch
      %113 = sbr.rel (0) target = $region37
    $region36: #{tpu_custom_call.1} parent=1 // pred_region
      %s115 = ssub.s32 256, 256
      %116 = vsyncadd [#allocation12], %s115
      %s117 = sshll.u32 [#allocation13], 4
      %s118 = int_to_ptr.vmem [resolvable:$true] %s117
      %123 = dma.hbm_to_vmem [thread:$0]  %s8, 256, %s118, [#allocation12], 64, 64, 4
    $region37: #{tpu_custom_call.1} parent=1 // pred_fallthru
      _
    // Predicated region
    $region38: #{tpu_custom_call.1} parent=1 // pred_check
      _
    $region39: #{tpu_custom_call.1} parent=1 // pred_check_branch
      %125 = sbr.rel (0) target = $region41
    $region40: #{tpu_custom_call.1} parent=1 // pred_region
      %s127 = ssub.s32 16, 16
      %128 = vsyncadd [#allocation15], %s127
      %s130 = sshll.u32 [#allocation14], 4
      %s131 = int_to_ptr.vmem [resolvable:$true] %s130
      %133 = dma.hbm_to_vmem [thread:$0]  %s9, 16, %s131, [#allocation15]
    $region41: #{tpu_custom_call.1} parent=1 // pred_fallthru
      _
    // Predicated region
    $region42: #{tpu_custom_call.1} parent=1 // pred_check
      _
    $region43: #{tpu_custom_call.1} parent=1 // pred_check_branch
      %135 = sbr.rel (0) target = $region45
    $region44: #{tpu_custom_call.1} parent=1 // pred_region
      _
    $region45: #{tpu_custom_call.1} parent=1 // pred_fallthru
      _
    // Predicated region
    $region46: #{tpu_custom_call.1} parent=1 // pred_check
      _
    $region47: #{tpu_custom_call.1} parent=1 // pred_check_branch
      %137 = sbr.rel (0) target = $region49
    $region48: #{tpu_custom_call.1} parent=1 // pred_region
      %s139 = ssub.s32 256, 256
      %140 = vsyncadd [#allocation15], %s139
      %s141 = sshll.u32 [#allocation16], 4
      %s142 = int_to_ptr.vmem [resolvable:$true] %s141
      %147 = dma.hbm_to_vmem [thread:$0]  %s11, 256, %s142, [#allocation15], 64, 64, 4
    $region49: #{tpu_custom_call.1} parent=1 // pred_fallthru
      _
    // Predicated region
    $region50: #{tpu_custom_call.1} parent=1 // pred_check
      _
    $region51: #{tpu_custom_call.1} parent=1 // pred_check_branch
      %149 = sbr.rel (0) target = $region53
    $region52: #{tpu_custom_call.1} parent=1 // pred_region
      %s151 = ssub.s32 256, 256
      %152 = vsyncadd [#allocation18], %s151
      %s153 = sshll.u32 [#allocation17], 4
      %s154 = int_to_ptr.vmem [resolvable:$true] %s153
      %159 = dma.hbm_to_vmem [thread:$0]  %s12, 256, %s154, [#allocation18], 64, 64, 4
    $region53: #{tpu_custom_call.1} parent=1 // pred_fallthru
      _
    // Predicated region
    $region54: #{tpu_custom_call.1} parent=1 // pred_check
      _
    $region55: #{tpu_custom_call.1} parent=1 // pred_check_branch
      %161 = sbr.rel (0) target = $region57
    $region56: #{tpu_custom_call.1} parent=1 // pred_region
      %s163 = ssub.s32 16, 16
      %164 = vsyncadd [#allocation18], %s163
      %s166 = sshll.u32 [#allocation19], 4
      %s167 = int_to_ptr.vmem [resolvable:$true] %s166
      %169 = dma.hbm_to_vmem [thread:$0]  %s13, 16, %s167, [#allocation18]
    $region57: #{tpu_custom_call.1} parent=1 // pred_fallthru
      _
    // Predicated region
    $region58: #{tpu_custom_call.1} parent=1 // pred_check
      _
    $region59: #{tpu_custom_call.1} parent=1 // pred_check_branch
      %171 = sbr.rel (0) target = $region61
    $region60: #{tpu_custom_call.1} parent=1 // pred_region
      %s173 = ssub.s32 16, 16
      %174 = vsyncadd [#allocation21], %s173
      %s176 = sshll.u32 [#allocation20], 4
      %s177 = int_to_ptr.vmem [resolvable:$true] %s176
      %179 = dma.hbm_to_vmem [thread:$0]  %s14, 16, %s177, [#allocation21]
    $region61: #{tpu_custom_call.1} parent=1 // pred_fallthru
      _
    // Predicated region
    $region62: #{tpu_custom_call.1} parent=1 // pred_check
      _
    $region63: #{tpu_custom_call.1} parent=1 // pred_check_branch
      %181 = sbr.rel (0) target = $region65
    $region64: #{tpu_custom_call.1} parent=1 // pred_region
      %s183 = ssub.s32 16, 16
      %184 = vsyncadd [#allocation21], %s183
      %s186 = sshll.u32 [#allocation22], 4
      %s187 = int_to_ptr.vmem [resolvable:$true] %s186
      %189 = dma.hbm_to_vmem [thread:$0]  %s15, 16, %s187, [#allocation21]
    $region65: #{tpu_custom_call.1} parent=1 // pred_fallthru
      _
    // Predicated region
    $region66: #{tpu_custom_call.1} parent=1 // pred_check
      _
    $region67: #{tpu_custom_call.1} parent=1 // pred_check_branch
      %191 = sbr.rel (0) target = $region69
    $region68: #{tpu_custom_call.1} parent=1 // pred_region
      _
    $region69: #{tpu_custom_call.1} parent=1 // pred_fallthru
      _
    // Predicated region
    $region70: #{tpu_custom_call.1} parent=1 // pred_check
      _
    $region71: #{tpu_custom_call.1} parent=1 // pred_check_branch
      %193 = sbr.rel (0) target = $region73
    $region72: #{tpu_custom_call.1} parent=1 // pred_region
      %s195 = ssub.s32 16, 16
      %196 = vsyncadd [#allocation24], %s195
      %s198 = sshll.u32 [#allocation23], 4
      %s199 = int_to_ptr.vmem [resolvable:$true] %s198
      %201 = dma.hbm_to_vmem [thread:$0]  %s17, 16, %s199, [#allocation24]
    $region73: #{tpu_custom_call.1} parent=1 // pred_fallthru
      _
    // Predicated region
    $region74: #{tpu_custom_call.1} parent=1 // pred_check
      _
    $region75: #{tpu_custom_call.1} parent=1 // pred_check_branch
      %203 = sbr.rel (0) target = $region77
    $region76: #{tpu_custom_call.1} parent=1 // pred_region
      _
    $region77: #{tpu_custom_call.1} parent=1 // pred_fallthru
      _
    // Predicated region
    $region78: #{tpu_custom_call.1} parent=1 // pred_check
      _
    $region79: #{tpu_custom_call.1} parent=1 // pred_check_branch
      %205 = sbr.rel (0) target = $region81
    $region80: #{tpu_custom_call.1} parent=1 // pred_region
      _
    $region81: #{tpu_custom_call.1} parent=1 // pred_fallthru
      _
    // Predicated region
    $region82: #{tpu_custom_call.1} parent=1 // pred_check
      _
    $region83: #{tpu_custom_call.1} parent=1 // pred_check_branch
      %207 = sbr.rel (0) target = $region85
    $region84: #{tpu_custom_call.1} parent=1 // pred_region
      _
    $region85: #{tpu_custom_call.1} parent=1 // pred_fallthru
      _
    // Predicated region
    $region86: #{tpu_custom_call.1} parent=1 // pred_check
      _
    $region87: #{tpu_custom_call.1} parent=1 // pred_check_branch
      %209 = sbr.rel (0) target = $region89
    $region88: #{tpu_custom_call.1} parent=1 // pred_region
      _
    $region89: #{tpu_custom_call.1} parent=1 // pred_fallthru
      _
    // Predicated region
    $region90: #{tpu_custom_call.1} parent=1 // pred_check
      _
    $region91: #{tpu_custom_call.1} parent=1 // pred_check_branch
      %211 = sbr.rel (0) target = $region93
    $region92: #{tpu_custom_call.1} parent=1 // pred_region
      _
    $region93: #{tpu_custom_call.1} parent=1 // pred_fallthru
      _
    // Predicated region
    $region94: #{tpu_custom_call.1} parent=1 // pred_check
      _
    $region95: #{tpu_custom_call.1} parent=1 // pred_check_branch
      %213 = sbr.rel (0) target = $region97
    $region96: #{tpu_custom_call.1} parent=1 // pred_region
      _
    $region97: #{tpu_custom_call.1} parent=1 // pred_fallthru
      _
    // Predicated region
    $region98: #{tpu_custom_call.1} parent=1 // pred_check
      _
    $region99: #{tpu_custom_call.1} parent=1 // pred_check_branch
      %215 = sbr.rel (0) target = $region101
    $region100: #{tpu_custom_call.1} parent=1 // pred_region
      _
    $region101: #{tpu_custom_call.1} parent=1 // pred_fallthru
      _
    // Predicated region
    $region102: #{tpu_custom_call.1} parent=1 // pred_check
      _
    $region103: #{tpu_custom_call.1} parent=1 // pred_check_branch
      %217 = sbr.rel (0) target = $region105
    $region104: #{tpu_custom_call.1} parent=1 // pred_region
      _
    $region105: #{tpu_custom_call.1} parent=1 // pred_fallthru
      _
    // Predicated region
    $region106: #{tpu_custom_call.1} parent=1 // pred_check
      _
    $region107: #{tpu_custom_call.1} parent=1 // pred_check_branch
      %219 = sbr.rel (0) target = $region109
    $region108: #{tpu_custom_call.1} parent=1 // pred_region
      _
    $region109: #{tpu_custom_call.1} parent=1 // pred_fallthru
      _
    // Predicated region
    $region110: #{tpu_custom_call.1} parent=1 // pred_check
      _
    $region111: #{tpu_custom_call.1} parent=1 // pred_check_branch
      %221 = sbr.rel (0) target = $region113
    $region112: #{tpu_custom_call.1} parent=1 // pred_region
      _
    $region113: #{tpu_custom_call.1} parent=1 // pred_fallthru
      _
    // Predicated region
    $region114: #{tpu_custom_call.1} parent=1 // pred_check
      _
    $region115: #{tpu_custom_call.1} parent=1 // pred_check_branch
      %223 = sbr.rel (0) target = $region117
    $region116: #{tpu_custom_call.1} parent=1 // pred_region
      %224 = dma.done [#allocation3], 256
    $region117: #{tpu_custom_call.1} parent=1 // pred_fallthru
      _
    // Predicated region
    $region118: #{tpu_custom_call.1} parent=1 // pred_check
      _
    $region119: #{tpu_custom_call.1} parent=1 // pred_check_branch
      %226 = sbr.rel (0) target = $region121
    $region120: #{tpu_custom_call.1} parent=1 // pred_region
      %227 = dma.done [#allocation6], 256
    $region121: #{tpu_custom_call.1} parent=1 // pred_fallthru
      _
    // Predicated region
    $region122: #{tpu_custom_call.1} parent=1 // pred_check
      _
    $region123: #{tpu_custom_call.1} parent=1 // pred_check_branch
      %229 = sbr.rel (0) target = $region125
    $region124: #{tpu_custom_call.1} parent=1 // pred_region
      %230 = dma.done [#allocation6], 256
    $region125: #{tpu_custom_call.1} parent=1 // pred_fallthru
      _
    // Predicated region
    $region126: #{tpu_custom_call.1} parent=1 // pred_check
      _
    $region127: #{tpu_custom_call.1} parent=1 // pred_check_branch
      %232 = sbr.rel (0) target = $region129
    $region128: #{tpu_custom_call.1} parent=1 // pred_region
      %233 = dma.done [#allocation9], 16
    $region129: #{tpu_custom_call.1} parent=1 // pred_fallthru
      _
    // Predicated region
    $region130: #{tpu_custom_call.1} parent=1 // pred_check
      _
    $region131: #{tpu_custom_call.1} parent=1 // pred_check_branch
      %235 = sbr.rel (0) target = $region133
    $region132: #{tpu_custom_call.1} parent=1 // pred_region
      %236 = dma.done [#allocation9], 16
    $region133: #{tpu_custom_call.1} parent=1 // pred_fallthru
      _
    // Predicated region
    $region134: #{tpu_custom_call.1} parent=1 // pred_check
      _
    $region135: #{tpu_custom_call.1} parent=1 // pred_check_branch
      %238 = sbr.rel (0) target = $region137
    $region136: #{tpu_custom_call.1} parent=1 // pred_region
      %239 = dma.done [#allocation12], 16
    $region137: #{tpu_custom_call.1} parent=1 // pred_fallthru
      _
    // Predicated region
    $region138: #{tpu_custom_call.1} parent=1 // pred_check
      _
    $region139: #{tpu_custom_call.1} parent=1 // pred_check_branch
      %241 = sbr.rel (0) target = $region141
    $region140: #{tpu_custom_call.1} parent=1 // pred_region
      %242 = dma.done [#allocation12], 256
    $region141: #{tpu_custom_call.1} parent=1 // pred_fallthru
      _
    // Predicated region
    $region142: #{tpu_custom_call.1} parent=1 // pred_check
      _
    $region143: #{tpu_custom_call.1} parent=1 // pred_check_branch
      %244 = sbr.rel (0) target = $region145
    $region144: #{tpu_custom_call.1} parent=1 // pred_region
      %245 = dma.done [#allocation15], 16
    $region145: #{tpu_custom_call.1} parent=1 // pred_fallthru
      _
    // Predicated region
    $region146: #{tpu_custom_call.1} parent=1 // pred_check
      _
    $region147: #{tpu_custom_call.1} parent=1 // pred_check_branch
      %247 = sbr.rel (0) target = $region149
    $region148: #{tpu_custom_call.1} parent=1 // pred_region
      %248 = dma.done [#allocation15], 256
    $region149: #{tpu_custom_call.1} parent=1 // pred_fallthru
      _
    // Predicated region
    $region150: #{tpu_custom_call.1} parent=1 // pred_check
      _
    $region151: #{tpu_custom_call.1} parent=1 // pred_check_branch
      %250 = sbr.rel (0) target = $region153
    $region152: #{tpu_custom_call.1} parent=1 // pred_region
      %251 = dma.done [#allocation18], 256
    $region153: #{tpu_custom_call.1} parent=1 // pred_fallthru
      _
    // Predicated region
    $region154: #{tpu_custom_call.1} parent=1 // pred_check
      _
    $region155: #{tpu_custom_call.1} parent=1 // pred_check_branch
      %253 = sbr.rel (0) target = $region157
    $region156: #{tpu_custom_call.1} parent=1 // pred_region
      %254 = dma.done [#allocation18], 16
    $region157: #{tpu_custom_call.1} parent=1 // pred_fallthru
      _
    // Predicated region
    $region158: #{tpu_custom_call.1} parent=1 // pred_check
      _
    $region159: #{tpu_custom_call.1} parent=1 // pred_check_branch
      %256 = sbr.rel (0) target = $region161
    $region160: #{tpu_custom_call.1} parent=1 // pred_region
      %257 = dma.done [#allocation21], 16
    $region161: #{tpu_custom_call.1} parent=1 // pred_fallthru
      _
    // Predicated region
    $region162: #{tpu_custom_call.1} parent=1 // pred_check
      _
    $region163: #{tpu_custom_call.1} parent=1 // pred_check_branch
      %259 = sbr.rel (0) target = $region165
    $region164: #{tpu_custom_call.1} parent=1 // pred_region
      %260 = dma.done [#allocation21], 16
    $region165: #{tpu_custom_call.1} parent=1 // pred_fallthru
      _
    // Predicated region
    $region166: #{tpu_custom_call.1} parent=1 // pred_check
      _
    $region167: #{tpu_custom_call.1} parent=1 // pred_check_branch
      %262 = sbr.rel (0) target = $region169
    $region168: #{tpu_custom_call.1} parent=1 // pred_region
      %263 = dma.done [#allocation24], 16
    $region169: #{tpu_custom_call.1} parent=1 // pred_fallthru
      _
    %v265 = vld [vmem:[%s0] sm:$0xff]
    %v266 = vld [vmem:[%s0 + $0x8] sm:$0xff]
    %v267 = vld [vmem:[%s1] sm:$0xff]
    %v268 = vld [vmem:[%s1 + $0x8] sm:$0xff]
    %v269 = vld [vmem:[%s1 + $0x10] sm:$0xff]
    %v270 = vld [vmem:[%s1 + $0x18] sm:$0xff]
    %v271 = vlaneseq
    %v272 = vshrl.u32 %v271, 7
    %v273 = vadd.s32 %v272, 8
    %v274 = vlaneseq
    %v275 = vand.u32 %v274, 127
    %vm276 = vcmp.lt.s32.totalorder %v272, 0
    %v277 = vsub.s32 0, %v272
    %v278 = vsel %vm276, %v277, %v272
    %v279 = vshrl.u32 %v278, 1
    %v280 = vand.u32 %v278, 1
    %v281 = vsub.s32 0, %v280
    %v282 = vsel %vm276, %v281, %v280
    %vm283 = vcmp.lt.s32.totalorder %v273, 0
    %v284 = vsub.s32 0, %v273
    %v285 = vsel %vm283, %v284, %v273
    %v286 = vshrl.u32 %v285, 1
    %v287 = vand.u32 %v285, 1
    %v288 = vsub.s32 0, %v287
    %v289 = vsel %vm283, %v288, %v287
    %vm290 = vcmp.ne.s32.totalorder %v282, 0
    %vm291 = vcmp.ne.s32.totalorder %v289, 0
    %vm292 = vcmp.lt.s32.totalorder %v282, 0
    %vm293 = vcmp.lt.s32.totalorder %v289, 0
    %vm294 = vmand %vm292, %vm290
    %vm295 = vmand %vm293, %vm291
    %v296 = vadd.s32 %v282, 2
    %v297 = vadd.s32 %v289, 2
    %v298 = vsel %vm294, %v296, %v282
    %v299 = vsel %vm295, %v297, %v289
    %vm300 = vcmp.lt.s32.totalorder %v275, 0
    %v301 = vsub.s32 0, %v275
    %v302 = vsel %vm300, %v301, %v275
    %v303 = vshrl.u32 %v302, 1
    %v304 = vand.u32 %v302, 1
    %v305 = vsub.s32 0, %v304
    %v306 = vsel %vm300, %v305, %v304
    %vm307 = vcmp.ne.s32.totalorder %v306, 0
    %vm308 = vcmp.lt.s32.totalorder %v306, 0
    %vm309 = vmand %vm308, %vm307
    %v310 = vadd.s32 %v306, 2
    %v311 = vsel %vm309, %v310, %v306
    %vm312 = vcmp.eq.s32.totalorder %v298, %v311
    %vm313 = vcmp.eq.s32.totalorder %v299, %v311
    %v314 = vpack.c.bf16 %v266, %v265
    %v315 = vld [vmem:[#allocation2] sm:$0xf]
    %v316 = vld [vmem:[#allocation2 + $0x4] sm:$0xf]
    %v317 = vld [vmem:[#allocation2 + $0x8] sm:$0xf]
    %v318 = vld [vmem:[#allocation2 + $0xc] sm:$0xf]
    %v319 = vld [vmem:[#allocation8] sm:$0x1]
    %v321 = vlaneseq
    %v322 = vshrl.u32 %v321, 7
    %v323 = vsub.s32 0, %v322
    %v324 = vrot.slane %v319, %v323
    %v330 = vunpack.c.l.b16 %v315
    %v331 = vunpack.c.l.b16 %v316
    %v332 = vunpack.c.l.b16 %v317
    %v333 = vunpack.c.l.b16 %v318
    %v334 = vpack.c.b16 %v331, %v330
    %v335 = vpack.c.b16 %v333, %v332
    %vm338 = vcmask 261120
    %v340 = vsel %vm338, %v314, 0
    %342 = vmatprep.subr.bf16.mxu0 0
    %343 = vmatpush1.bf16.msra.mxu0 %v334
    %344 = vmatprep.subr.bf16.mxu0 0
    %345 = vmatpush1.bf16.msra.mxu0 %v335
    %346 = vmatprep.subr.bf16.mxu0 0
    %347 = vmatpush1.bf16.msra.mxu0 0
    %348 = vmatprep.subr.bf16.mxu0 0
    %349 = vmatpush1.bf16.msra.mxu0 0
    %350 = vmatprep.subr.bf16.mxu0 0
    %351 = vmatpush1.bf16.msra.mxu0 0
    %352 = vmatprep.subr.bf16.mxu0 0
    %353 = vmatpush1.bf16.msra.mxu0 0
    %354 = vmatprep.subr.bf16.mxu0 0
    %355 = vmatpush1.bf16.msra.mxu0 0
    %356 = vmatprep.subr.bf16.mxu0 0
    %357 = vmatpush1.bf16.msra.mxu0 0
    %358 = vmatprep.subr.bf16.mxu0 0
    %359 = vmatpush1.bf16.msra.mxu0 0
    %360 = vmatprep.subr.bf16.mxu0 0
    %361 = vmatpush1.bf16.msra.mxu0 0
    %362 = vmatprep.subr.bf16.mxu0 0
    %363 = vmatpush1.bf16.msra.mxu0 0
    %364 = vmatprep.subr.bf16.mxu0 0
    %365 = vmatpush1.bf16.msra.mxu0 0
    %366 = vmatprep.subr.bf16.mxu0 0
    %367 = vmatpush1.bf16.msra.mxu0 0
    %368 = vmatprep.subr.bf16.mxu0 0
    %369 = vmatpush1.bf16.msra.mxu0 0
    %370 = vmatprep.subr.bf16.mxu0 0
    %371 = vmatpush1.bf16.msra.mxu0 0
    %372 = vmatprep.subr.bf16.mxu0 0
    %373 = vmatpush1.bf16.msra.mxu0 0
    %374 = vmatprep.mubr.bf16.mxu0 0
    %375 = vmatmul.mubr.bf16.gmra.mrb[0].mxu0 %v340
    %v376 = vpop.f32.mrb[0].mxu0
    %v377 = vadd.f32 %v324, %v376
    %v378 = vpop.f32.mrb[0].mxu0
    %v379 = vpop.f32.mrb[0].mxu0
    %v380 = vadd.f32 %v324, %v379
    %v381 = vpop.f32.mrb[0].mxu0
    %382 = vdwg.mxu0
    %v383 = vld [vmem:[#allocation5] sm:$0xf]
    %v384 = vld [vmem:[#allocation5 + $0x4] sm:$0xf]
    %v385 = vld [vmem:[#allocation5 + $0x8] sm:$0xf]
    %v386 = vld [vmem:[#allocation5 + $0xc] sm:$0xf]
    %v387 = vld [vmem:[#allocation10] sm:$0x1]
    %v389 = vlaneseq
    %v390 = vshrl.u32 %v389, 7
    %v391 = vsub.s32 0, %v390
    %v392 = vrot.slane %v387, %v391
    %v398 = vunpack.c.l.b16 %v383
    %v399 = vunpack.c.l.b16 %v384
    %v400 = vunpack.c.l.b16 %v385
    %v401 = vunpack.c.l.b16 %v386
    %v402 = vpack.c.b16 %v399, %v398
    %v403 = vpack.c.b16 %v401, %v400
    %406 = vmatprep.subr.bf16.mxu0 0
    %407 = vmatpush1.bf16.msra.mxu0 %v402
    %408 = vmatprep.subr.bf16.mxu0 0
    %409 = vmatpush1.bf16.msra.mxu0 %v403
    %410 = vmatprep.subr.bf16.mxu0 0
    %411 = vmatpush1.bf16.msra.mxu0 0
    %412 = vmatprep.subr.bf16.mxu0 0
    %413 = vmatpush1.bf16.msra.mxu0 0
    %414 = vmatprep.subr.bf16.mxu0 0
    %415 = vmatpush1.bf16.msra.mxu0 0
    %416 = vmatprep.subr.bf16.mxu0 0
    %417 = vmatpush1.bf16.msra.mxu0 0
    %418 = vmatprep.subr.bf16.mxu0 0
    %419 = vmatpush1.bf16.msra.mxu0 0
    %420 = vmatprep.subr.bf16.mxu0 0
    %421 = vmatpush1.bf16.msra.mxu0 0
    %422 = vmatprep.subr.bf16.mxu0 0
    %423 = vmatpush1.bf16.msra.mxu0 0
    %424 = vmatprep.subr.bf16.mxu0 0
    %425 = vmatpush1.bf16.msra.mxu0 0
    %426 = vmatprep.subr.bf16.mxu0 0
    %427 = vmatpush1.bf16.msra.mxu0 0
    %428 = vmatprep.subr.bf16.mxu0 0
    %429 = vmatpush1.bf16.msra.mxu0 0
    %430 = vmatprep.subr.bf16.mxu0 0
    %431 = vmatpush1.bf16.msra.mxu0 0
    %432 = vmatprep.subr.bf16.mxu0 0
    %433 = vmatpush1.bf16.msra.mxu0 0
    %434 = vmatprep.subr.bf16.mxu0 0
    %435 = vmatpush1.bf16.msra.mxu0 0
    %436 = vmatprep.subr.bf16.mxu0 0
    %437 = vmatpush1.bf16.msra.mxu0 0
    %438 = vmatprep.mubr.bf16.mxu0 0
    %439 = vmatmul.mubr.bf16.gmra.mrb[0].mxu0 %v340
    %v440 = vpop.f32.mrb[0].mxu0
    %v441 = vadd.f32 %v392, %v440
    %v442 = vpop.f32.mrb[0].mxu0
    %v443 = vpop.f32.mrb[0].mxu0
    %v444 = vadd.f32 %v392, %v443
    %v445 = vpop.f32.mrb[0].mxu0
    %446 = vdwg.mxu0
    %v447 = vld [vmem:[#allocation7] sm:$0xf]
    %v448 = vld [vmem:[#allocation7 + $0x4] sm:$0xf]
    %v449 = vld [vmem:[#allocation7 + $0x8] sm:$0xf]
    %v450 = vld [vmem:[#allocation7 + $0xc] sm:$0xf]
    %v451 = vld [vmem:[#allocation11] sm:$0x1]
    %v453 = vlaneseq
    %v454 = vshrl.u32 %v453, 7
    %v455 = vsub.s32 0, %v454
    %v456 = vrot.slane %v451, %v455
    %v462 = vunpack.c.l.b16 %v447
    %v463 = vunpack.c.l.b16 %v448
    %v464 = vunpack.c.l.b16 %v449
    %v465 = vunpack.c.l.b16 %v450
    %v466 = vpack.c.b16 %v463, %v462
    %v467 = vpack.c.b16 %v465, %v464
    %470 = vmatprep.subr.bf16.mxu0 0
    %471 = vmatpush1.bf16.msra.mxu0 %v466
    %472 = vmatprep.subr.bf16.mxu0 0
    %473 = vmatpush1.bf16.msra.mxu0 %v467
    %474 = vmatprep.subr.bf16.mxu0 0
    %475 = vmatpush1.bf16.msra.mxu0 0
    %476 = vmatprep.subr.bf16.mxu0 0
    %477 = vmatpush1.bf16.msra.mxu0 0
    %478 = vmatprep.subr.bf16.mxu0 0
    %479 = vmatpush1.bf16.msra.mxu0 0
    %480 = vmatprep.subr.bf16.mxu0 0
    %481 = vmatpush1.bf16.msra.mxu0 0
    %482 = vmatprep.subr.bf16.mxu0 0
    %483 = vmatpush1.bf16.msra.mxu0 0
    %484 = vmatprep.subr.bf16.mxu0 0
    %485 = vmatpush1.bf16.msra.mxu0 0
    %486 = vmatprep.subr.bf16.mxu0 0
    %487 = vmatpush1.bf16.msra.mxu0 0
    %488 = vmatprep.subr.bf16.mxu0 0
    %489 = vmatpush1.bf16.msra.mxu0 0
    %490 = vmatprep.subr.bf16.mxu0 0
    %491 = vmatpush1.bf16.msra.mxu0 0
    %492 = vmatprep.subr.bf16.mxu0 0
    %493 = vmatpush1.bf16.msra.mxu0 0
    %494 = vmatprep.subr.bf16.mxu0 0
    %495 = vmatpush1.bf16.msra.mxu0 0
    %496 = vmatprep.subr.bf16.mxu0 0
    %497 = vmatpush1.bf16.msra.mxu0 0
    %498 = vmatprep.subr.bf16.mxu0 0
    %499 = vmatpush1.bf16.msra.mxu0 0
    %500 = vmatprep.subr.bf16.mxu0 0
    %501 = vmatpush1.bf16.msra.mxu0 0
    %502 = vmatprep.mubr.bf16.mxu0 0
    %503 = vmatmul.mubr.bf16.gmra.mrb[0].mxu0 %v340
    %v504 = vpop.f32.mrb[0].mxu0
    %v505 = vadd.f32 %v456, %v504
    %v506 = vpop.f32.mrb[0].mxu0
    %v507 = vpop.f32.mrb[0].mxu0
    %v508 = vadd.f32 %v456, %v507
    %v509 = vpop.f32.mrb[0].mxu0
    %510 = vdwg.mxu0
    %513 = vrot.lane.b32.xlu0 %v377, 120
    %v514 = vpop.permute.xlu0 %513
    %515 = vrot.lane.b32.xlu0 %v380, 120
    %v516 = vpop.permute.xlu0 %515
    %519 = vrot.lane.b32.xlu0 %v377, 112
    %v520 = vpop.permute.xlu0 %519
    %521 = vrot.lane.b32.xlu0 %v380, 112
    %v522 = vpop.permute.xlu0 %521
    %525 = vrot.lane.b32.xlu0 %v377, 104
    %v526 = vpop.permute.xlu0 %525
    %527 = vrot.lane.b32.xlu0 %v380, 104
    %v528 = vpop.permute.xlu0 %527
    %v531 = vcombine.low %v377, %v520
    %v532 = vcombine.high %v377, %v520
    %v534 = vunpack.c.l.s4 1983009808
    %v535 = vunpack.c.0.s8 %v534
    %v536 = vlaneseq
    %v537 = vshrl.u32 %v536, 7
    %v538 = vsub.s32 %v535, %v537
    %v539 = vrot.slane %v531, %v538
    %v541 = vunpack.c.l.s4 1983009808
    %v542 = vunpack.c.0.s8 %v541
    %v543 = vlaneseq
    %v544 = vshrl.u32 %v543, 7
    %v545 = vsub.s32 %v542, %v544
    %v546 = vrot.slane %v532, %v545
    %v547 = vcombine.low %v514, %v526
    %v548 = vcombine.high %v514, %v526
    %v550 = vunpack.c.l.s4 1983009808
    %v551 = vunpack.c.0.s8 %v550
    %v552 = vlaneseq
    %v553 = vshrl.u32 %v552, 7
    %v554 = vsub.s32 %v551, %v553
    %v555 = vrot.slane %v547, %v554
    %v557 = vunpack.c.l.s4 1983009808
    %v558 = vunpack.c.0.s8 %v557
    %v559 = vlaneseq
    %v560 = vshrl.u32 %v559, 7
    %v561 = vsub.s32 %v558, %v560
    %v562 = vrot.slane %v548, %v561
    %v563 = vcombine.low %v539, %v555
    %v564 = vcombine.high %v539, %v555
    %v566 = vunpack.c.l.s4 1934713408
    %v567 = vunpack.c.0.s8 %v566
    %v568 = vlaneseq
    %v569 = vshrl.u32 %v568, 7
    %v570 = vsub.s32 %v567, %v569
    %v571 = vrot.slane %v563, %v570
    %v573 = vunpack.c.l.s4 1934713408
    %v574 = vunpack.c.0.s8 %v573
    %v575 = vlaneseq
    %v576 = vshrl.u32 %v575, 7
    %v577 = vsub.s32 %v574, %v576
    %v578 = vrot.slane %v564, %v577
    %v579 = vcombine.low %v546, %v562
    %v580 = vcombine.high %v546, %v562
    %v582 = vunpack.c.l.s4 1934713408
    %v583 = vunpack.c.0.s8 %v582
    %v584 = vlaneseq
    %v585 = vshrl.u32 %v584, 7
    %v586 = vsub.s32 %v583, %v585
    %v587 = vrot.slane %v579, %v586
    %v589 = vunpack.c.l.s4 1934713408
    %v590 = vunpack.c.0.s8 %v589
    %v591 = vlaneseq
    %v592 = vshrl.u32 %v591, 7
    %v593 = vsub.s32 %v590, %v592
    %v594 = vrot.slane %v580, %v593
    %v595 = vcombine.high %v571, 0.0
    %v596 = vcombine.high %v578, 0.0
    %v597 = vcombine.high %v587, 0.0
    %v598 = vcombine.high %v594, 0.0
    %v599 = vcombine.low %v380, %v522
    %v600 = vcombine.high %v380, %v522
    %v602 = vunpack.c.l.s4 1983009808
    %v603 = vunpack.c.0.s8 %v602
    %v604 = vlaneseq
    %v605 = vshrl.u32 %v604, 7
    %v606 = vsub.s32 %v603, %v605
    %v607 = vrot.slane %v599, %v606
    %v609 = vunpack.c.l.s4 1983009808
    %v610 = vunpack.c.0.s8 %v609
    %v611 = vlaneseq
    %v612 = vshrl.u32 %v611, 7
    %v613 = vsub.s32 %v610, %v612
    %v614 = vrot.slane %v600, %v613
    %v615 = vcombine.low %v516, %v528
    %v616 = vcombine.high %v516, %v528
    %v618 = vunpack.c.l.s4 1983009808
    %v619 = vunpack.c.0.s8 %v618
    %v620 = vlaneseq
    %v621 = vshrl.u32 %v620, 7
    %v622 = vsub.s32 %v619, %v621
    %v623 = vrot.slane %v615, %v622
    %v625 = vunpack.c.l.s4 1983009808
    %v626 = vunpack.c.0.s8 %v625
    %v627 = vlaneseq
    %v628 = vshrl.u32 %v627, 7
    %v629 = vsub.s32 %v626, %v628
    %v630 = vrot.slane %v616, %v629
    %v631 = vcombine.low %v607, %v623
    %v632 = vcombine.high %v607, %v623
    %v634 = vunpack.c.l.s4 1934713408
    %v635 = vunpack.c.0.s8 %v634
    %v636 = vlaneseq
    %v637 = vshrl.u32 %v636, 7
    %v638 = vsub.s32 %v635, %v637
    %v639 = vrot.slane %v631, %v638
    %v641 = vunpack.c.l.s4 1934713408
    %v642 = vunpack.c.0.s8 %v641
    %v643 = vlaneseq
    %v644 = vshrl.u32 %v643, 7
    %v645 = vsub.s32 %v642, %v644
    %v646 = vrot.slane %v632, %v645
    %v647 = vcombine.low %v614, %v630
    %v648 = vcombine.high %v614, %v630
    %v650 = vunpack.c.l.s4 1934713408
    %v651 = vunpack.c.0.s8 %v650
    %v652 = vlaneseq
    %v653 = vshrl.u32 %v652, 7
    %v654 = vsub.s32 %v651, %v653
    %v655 = vrot.slane %v647, %v654
    %v657 = vunpack.c.l.s4 1934713408
    %v658 = vunpack.c.0.s8 %v657
    %v659 = vlaneseq
    %v660 = vshrl.u32 %v659, 7
    %v661 = vsub.s32 %v658, %v660
    %v662 = vrot.slane %v648, %v661
    %v663 = vcombine.high %v639, 0.0
    %v664 = vcombine.high %v646, 0.0
    %v665 = vcombine.high %v655, 0.0
    %v666 = vcombine.high %v662, 0.0
    %v667 = vcombine.low %v571, %v578
    %v669 = vunpack.c.l.s4 1983009808
    %v670 = vunpack.c.0.s8 %v669
    %v671 = vlaneseq
    %v672 = vshrl.u32 %v671, 7
    %v673 = vsub.s32 %v670, %v672
    %v674 = vrot.slane %v667, %v673
    %v675 = vcombine.low %v595, %v596
    %v677 = vunpack.c.l.s4 1983009808
    %v678 = vunpack.c.0.s8 %v677
    %v679 = vlaneseq
    %v680 = vshrl.u32 %v679, 7
    %v681 = vsub.s32 %v678, %v680
    %v682 = vrot.slane %v675, %v681
    %v683 = vcombine.low %v587, %v594
    %v685 = vunpack.c.l.s4 1983009808
    %v686 = vunpack.c.0.s8 %v685
    %v687 = vlaneseq
    %v688 = vshrl.u32 %v687, 7
    %v689 = vsub.s32 %v686, %v688
    %v690 = vrot.slane %v683, %v689
    %v691 = vcombine.low %v597, %v598
    %v693 = vunpack.c.l.s4 1983009808
    %v694 = vunpack.c.0.s8 %v693
    %v695 = vlaneseq
    %v696 = vshrl.u32 %v695, 7
    %v697 = vsub.s32 %v694, %v696
    %v698 = vrot.slane %v691, %v697
    %v699 = vcombine.low %v674, %v682
    %v700 = vcombine.high %v674, %v682
    %v702 = vunpack.c.l.s4 1934713408
    %v703 = vunpack.c.0.s8 %v702
    %v704 = vlaneseq
    %v705 = vshrl.u32 %v704, 7
    %v706 = vsub.s32 %v703, %v705
    %v707 = vrot.slane %v699, %v706
    %v709 = vunpack.c.l.s4 1934713408
    %v710 = vunpack.c.0.s8 %v709
    %v711 = vlaneseq
    %v712 = vshrl.u32 %v711, 7
    %v713 = vsub.s32 %v710, %v712
    %v714 = vrot.slane %v700, %v713
    %v715 = vcombine.low %v690, %v698
    %v716 = vcombine.high %v690, %v698
    %v718 = vunpack.c.l.s4 1934713408
    %v719 = vunpack.c.0.s8 %v718
    %v720 = vlaneseq
    %v721 = vshrl.u32 %v720, 7
    %v722 = vsub.s32 %v719, %v721
    %v723 = vrot.slane %v715, %v722
    %v725 = vunpack.c.l.s4 1934713408
    %v726 = vunpack.c.0.s8 %v725
    %v727 = vlaneseq
    %v728 = vshrl.u32 %v727, 7
    %v729 = vsub.s32 %v726, %v728
    %v730 = vrot.slane %v716, %v729
    %v731 = vcombine.low %v707, %v723
    %v732 = vcombine.high %v707, %v723
    %v733 = vcombine.low %v714, %v730
    %v734 = vcombine.high %v714, %v730
    %v735 = vcombine.low %v639, %v646
    %v737 = vunpack.c.l.s4 1983009808
    %v738 = vunpack.c.0.s8 %v737
    %v739 = vlaneseq
    %v740 = vshrl.u32 %v739, 7
    %v741 = vsub.s32 %v738, %v740
    %v742 = vrot.slane %v735, %v741
    %v743 = vcombine.low %v663, %v664
    %v745 = vunpack.c.l.s4 1983009808
    %v746 = vunpack.c.0.s8 %v745
    %v747 = vlaneseq
    %v748 = vshrl.u32 %v747, 7
    %v749 = vsub.s32 %v746, %v748
    %v750 = vrot.slane %v743, %v749
    %v751 = vcombine.low %v655, %v662
    %v753 = vunpack.c.l.s4 1983009808
    %v754 = vunpack.c.0.s8 %v753
    %v755 = vlaneseq
    %v756 = vshrl.u32 %v755, 7
    %v757 = vsub.s32 %v754, %v756
    %v758 = vrot.slane %v751, %v757
    %v759 = vcombine.low %v665, %v666
    %v761 = vunpack.c.l.s4 1983009808
    %v762 = vunpack.c.0.s8 %v761
    %v763 = vlaneseq
    %v764 = vshrl.u32 %v763, 7
    %v765 = vsub.s32 %v762, %v764
    %v766 = vrot.slane %v759, %v765
    %v767 = vcombine.low %v742, %v750
    %v768 = vcombine.high %v742, %v750
    %v770 = vunpack.c.l.s4 1934713408
    %v771 = vunpack.c.0.s8 %v770
    %v772 = vlaneseq
    %v773 = vshrl.u32 %v772, 7
    %v774 = vsub.s32 %v771, %v773
    %v775 = vrot.slane %v767, %v774
    %v777 = vunpack.c.l.s4 1934713408
    %v778 = vunpack.c.0.s8 %v777
    %v779 = vlaneseq
    %v780 = vshrl.u32 %v779, 7
    %v781 = vsub.s32 %v778, %v780
    %v782 = vrot.slane %v768, %v781
    %v783 = vcombine.low %v758, %v766
    %v784 = vcombine.high %v758, %v766
    %v786 = vunpack.c.l.s4 1934713408
    %v787 = vunpack.c.0.s8 %v786
    %v788 = vlaneseq
    %v789 = vshrl.u32 %v788, 7
    %v790 = vsub.s32 %v787, %v789
    %v791 = vrot.slane %v783, %v790
    %v793 = vunpack.c.l.s4 1934713408
    %v794 = vunpack.c.0.s8 %v793
    %v795 = vlaneseq
    %v796 = vshrl.u32 %v795, 7
    %v797 = vsub.s32 %v794, %v796
    %v798 = vrot.slane %v784, %v797
    %v799 = vcombine.low %v775, %v791
    %v800 = vcombine.high %v775, %v791
    %v801 = vcombine.low %v782, %v798
    %v802 = vcombine.high %v782, %v798
    %805 = vrot.lane.b32.xlu0 %v441, 120
    %v806 = vpop.permute.xlu0 %805
    %807 = vrot.lane.b32.xlu0 %v444, 120
    %v808 = vpop.permute.xlu0 %807
    %811 = vrot.lane.b32.xlu0 %v441, 112
    %v812 = vpop.permute.xlu0 %811
    %813 = vrot.lane.b32.xlu0 %v444, 112
    %v814 = vpop.permute.xlu0 %813
    %817 = vrot.lane.b32.xlu0 %v441, 104
    %v818 = vpop.permute.xlu0 %817
    %819 = vrot.lane.b32.xlu0 %v444, 104
    %v820 = vpop.permute.xlu0 %819
    %v823 = vcombine.low %v441, %v812
    %v824 = vcombine.high %v441, %v812
    %v826 = vunpack.c.l.s4 1983009808
    %v827 = vunpack.c.0.s8 %v826
    %v828 = vlaneseq
    %v829 = vshrl.u32 %v828, 7
    %v830 = vsub.s32 %v827, %v829
    %v831 = vrot.slane %v823, %v830
    %v833 = vunpack.c.l.s4 1983009808
    %v834 = vunpack.c.0.s8 %v833
    %v835 = vlaneseq
    %v836 = vshrl.u32 %v835, 7
    %v837 = vsub.s32 %v834, %v836
    %v838 = vrot.slane %v824, %v837
    %v839 = vcombine.low %v806, %v818
    %v840 = vcombine.high %v806, %v818
    %v842 = vunpack.c.l.s4 1983009808
    %v843 = vunpack.c.0.s8 %v842
    %v844 = vlaneseq
    %v845 = vshrl.u32 %v844, 7
    %v846 = vsub.s32 %v843, %v845
    %v847 = vrot.slane %v839, %v846
    %v849 = vunpack.c.l.s4 1983009808
    %v850 = vunpack.c.0.s8 %v849
    %v851 = vlaneseq
    %v852 = vshrl.u32 %v851, 7
    %v853 = vsub.s32 %v850, %v852
    %v854 = vrot.slane %v840, %v853
    %v855 = vcombine.low %v831, %v847
    %v856 = vcombine.high %v831, %v847
    %v858 = vunpack.c.l.s4 1934713408
    %v859 = vunpack.c.0.s8 %v858
    %v860 = vlaneseq
    %v861 = vshrl.u32 %v860, 7
    %v862 = vsub.s32 %v859, %v861
    %v863 = vrot.slane %v855, %v862
    %v865 = vunpack.c.l.s4 1934713408
    %v866 = vunpack.c.0.s8 %v865
    %v867 = vlaneseq
    %v868 = vshrl.u32 %v867, 7
    %v869 = vsub.s32 %v866, %v868
    %v870 = vrot.slane %v856, %v869
    %v871 = vcombine.low %v838, %v854
    %v872 = vcombine.high %v838, %v854
    %v874 = vunpack.c.l.s4 1934713408
    %v875 = vunpack.c.0.s8 %v874
    %v876 = vlaneseq
    %v877 = vshrl.u32 %v876, 7
    %v878 = vsub.s32 %v875, %v877
    %v879 = vrot.slane %v871, %v878
    %v881 = vunpack.c.l.s4 1934713408
    %v882 = vunpack.c.0.s8 %v881
    %v883 = vlaneseq
    %v884 = vshrl.u32 %v883, 7
    %v885 = vsub.s32 %v882, %v884
    %v886 = vrot.slane %v872, %v885
    %v887 = vcombine.high %v863, 0.0
    %v888 = vcombine.high %v870, 0.0
    %v889 = vcombine.high %v879, 0.0
    %v890 = vcombine.high %v886, 0.0
    %v891 = vcombine.low %v444, %v814
    %v892 = vcombine.high %v444, %v814
    %v894 = vunpack.c.l.s4 1983009808
    %v895 = vunpack.c.0.s8 %v894
    %v896 = vlaneseq
    %v897 = vshrl.u32 %v896, 7
    %v898 = vsub.s32 %v895, %v897
    %v899 = vrot.slane %v891, %v898
    %v901 = vunpack.c.l.s4 1983009808
    %v902 = vunpack.c.0.s8 %v901
    %v903 = vlaneseq
    %v904 = vshrl.u32 %v903, 7
    %v905 = vsub.s32 %v902, %v904
    %v906 = vrot.slane %v892, %v905
    %v907 = vcombine.low %v808, %v820
    %v908 = vcombine.high %v808, %v820
    %v910 = vunpack.c.l.s4 1983009808
    %v911 = vunpack.c.0.s8 %v910
    %v912 = vlaneseq
    %v913 = vshrl.u32 %v912, 7
    %v914 = vsub.s32 %v911, %v913
    %v915 = vrot.slane %v907, %v914
    %v917 = vunpack.c.l.s4 1983009808
    %v918 = vunpack.c.0.s8 %v917
    %v919 = vlaneseq
    %v920 = vshrl.u32 %v919, 7
    %v921 = vsub.s32 %v918, %v920
    %v922 = vrot.slane %v908, %v921
    %v923 = vcombine.low %v899, %v915
    %v924 = vcombine.high %v899, %v915
    %v926 = vunpack.c.l.s4 1934713408
    %v927 = vunpack.c.0.s8 %v926
    %v928 = vlaneseq
    %v929 = vshrl.u32 %v928, 7
    %v930 = vsub.s32 %v927, %v929
    %v931 = vrot.slane %v923, %v930
    %v933 = vunpack.c.l.s4 1934713408
    %v934 = vunpack.c.0.s8 %v933
    %v935 = vlaneseq
    %v936 = vshrl.u32 %v935, 7
    %v937 = vsub.s32 %v934, %v936
    %v938 = vrot.slane %v924, %v937
    %v939 = vcombine.low %v906, %v922
    %v940 = vcombine.high %v906, %v922
    %v942 = vunpack.c.l.s4 1934713408
    %v943 = vunpack.c.0.s8 %v942
    %v944 = vlaneseq
    %v945 = vshrl.u32 %v944, 7
    %v946 = vsub.s32 %v943, %v945
    %v947 = vrot.slane %v939, %v946
    %v949 = vunpack.c.l.s4 1934713408
    %v950 = vunpack.c.0.s8 %v949
    %v951 = vlaneseq
    %v952 = vshrl.u32 %v951, 7
    %v953 = vsub.s32 %v950, %v952
    %v954 = vrot.slane %v940, %v953
    %v955 = vcombine.high %v931, 0.0
    %v956 = vcombine.high %v938, 0.0
    %v957 = vcombine.high %v947, 0.0
    %v958 = vcombine.high %v954, 0.0
    %v959 = vcombine.low %v863, %v870
    %v961 = vunpack.c.l.s4 1983009808
    %v962 = vunpack.c.0.s8 %v961
    %v963 = vlaneseq
    %v964 = vshrl.u32 %v963, 7
    %v965 = vsub.s32 %v962, %v964
    %v966 = vrot.slane %v959, %v965
    %v967 = vcombine.low %v887, %v888
    %v969 = vunpack.c.l.s4 1983009808
    %v970 = vunpack.c.0.s8 %v969
    %v971 = vlaneseq
    %v972 = vshrl.u32 %v971, 7
    %v973 = vsub.s32 %v970, %v972
    %v974 = vrot.slane %v967, %v973
    %v975 = vcombine.low %v879, %v886
    %v977 = vunpack.c.l.s4 1983009808
    %v978 = vunpack.c.0.s8 %v977
    %v979 = vlaneseq
    %v980 = vshrl.u32 %v979, 7
    %v981 = vsub.s32 %v978, %v980
    %v982 = vrot.slane %v975, %v981
    %v983 = vcombine.low %v889, %v890
    %v985 = vunpack.c.l.s4 1983009808
    %v986 = vunpack.c.0.s8 %v985
    %v987 = vlaneseq
    %v988 = vshrl.u32 %v987, 7
    %v989 = vsub.s32 %v986, %v988
    %v990 = vrot.slane %v983, %v989
    %v991 = vcombine.low %v966, %v974
    %v992 = vcombine.high %v966, %v974
    %v994 = vunpack.c.l.s4 1934713408
    %v995 = vunpack.c.0.s8 %v994
    %v996 = vlaneseq
    %v997 = vshrl.u32 %v996, 7
    %v998 = vsub.s32 %v995, %v997
    %v999 = vrot.slane %v991, %v998
    %v1001 = vunpack.c.l.s4 1934713408
    %v1002 = vunpack.c.0.s8 %v1001
    %v1003 = vlaneseq
    %v1004 = vshrl.u32 %v1003, 7
    %v1005 = vsub.s32 %v1002, %v1004
    %v1006 = vrot.slane %v992, %v1005
    %v1007 = vcombine.low %v982, %v990
    %v1008 = vcombine.high %v982, %v990
    %v1010 = vunpack.c.l.s4 1934713408
    %v1011 = vunpack.c.0.s8 %v1010
    %v1012 = vlaneseq
    %v1013 = vshrl.u32 %v1012, 7
    %v1014 = vsub.s32 %v1011, %v1013
    %v1015 = vrot.slane %v1007, %v1014
    %v1017 = vunpack.c.l.s4 1934713408
    %v1018 = vunpack.c.0.s8 %v1017
    %v1019 = vlaneseq
    %v1020 = vshrl.u32 %v1019, 7
    %v1021 = vsub.s32 %v1018, %v1020
    %v1022 = vrot.slane %v1008, %v1021
    %v1023 = vcombine.low %v999, %v1015
    %v1024 = vcombine.high %v999, %v1015
    %v1025 = vcombine.low %v1006, %v1022
    %v1026 = vcombine.high %v1006, %v1022
    %v1027 = vcombine.low %v931, %v938
    %v1029 = vunpack.c.l.s4 1983009808
    %v1030 = vunpack.c.0.s8 %v1029
    %v1031 = vlaneseq
    %v1032 = vshrl.u32 %v1031, 7
    %v1033 = vsub.s32 %v1030, %v1032
    %v1034 = vrot.slane %v1027, %v1033
    %v1035 = vcombine.low %v955, %v956
    %v1037 = vunpack.c.l.s4 1983009808
    %v1038 = vunpack.c.0.s8 %v1037
    %v1039 = vlaneseq
    %v1040 = vshrl.u32 %v1039, 7
    %v1041 = vsub.s32 %v1038, %v1040
    %v1042 = vrot.slane %v1035, %v1041
    %v1043 = vcombine.low %v947, %v954
    %v1045 = vunpack.c.l.s4 1983009808
    %v1046 = vunpack.c.0.s8 %v1045
    %v1047 = vlaneseq
    %v1048 = vshrl.u32 %v1047, 7
    %v1049 = vsub.s32 %v1046, %v1048
    %v1050 = vrot.slane %v1043, %v1049
    %v1051 = vcombine.low %v957, %v958
    %v1053 = vunpack.c.l.s4 1983009808
    %v1054 = vunpack.c.0.s8 %v1053
    %v1055 = vlaneseq
    %v1056 = vshrl.u32 %v1055, 7
    %v1057 = vsub.s32 %v1054, %v1056
    %v1058 = vrot.slane %v1051, %v1057
    %v1059 = vcombine.low %v1034, %v1042
    %v1060 = vcombine.high %v1034, %v1042
    %v1062 = vunpack.c.l.s4 1934713408
    %v1063 = vunpack.c.0.s8 %v1062
    %v1064 = vlaneseq
    %v1065 = vshrl.u32 %v1064, 7
    %v1066 = vsub.s32 %v1063, %v1065
    %v1067 = vrot.slane %v1059, %v1066
    %v1069 = vunpack.c.l.s4 1934713408
    %v1070 = vunpack.c.0.s8 %v1069
    %v1071 = vlaneseq
    %v1072 = vshrl.u32 %v1071, 7
    %v1073 = vsub.s32 %v1070, %v1072
    %v1074 = vrot.slane %v1060, %v1073
    %v1075 = vcombine.low %v1050, %v1058
    %v1076 = vcombine.high %v1050, %v1058
    %v1078 = vunpack.c.l.s4 1934713408
    %v1079 = vunpack.c.0.s8 %v1078
    %v1080 = vlaneseq
    %v1081 = vshrl.u32 %v1080, 7
    %v1082 = vsub.s32 %v1079, %v1081
    %v1083 = vrot.slane %v1075, %v1082
    %v1085 = vunpack.c.l.s4 1934713408
    %v1086 = vunpack.c.0.s8 %v1085
    %v1087 = vlaneseq
    %v1088 = vshrl.u32 %v1087, 7
    %v1089 = vsub.s32 %v1086, %v1088
    %v1090 = vrot.slane %v1076, %v1089
    %v1091 = vcombine.low %v1067, %v1083
    %v1092 = vcombine.high %v1067, %v1083
    %v1093 = vcombine.low %v1074, %v1090
    %v1094 = vcombine.high %v1074, %v1090
    %1097 = vrot.lane.b32.xlu0 %v505, 120
    %v1098 = vpop.permute.xlu0 %1097
    %1099 = vrot.lane.b32.xlu0 %v508, 120
    %v1100 = vpop.permute.xlu0 %1099
    %1103 = vrot.lane.b32.xlu0 %v505, 112
    %v1104 = vpop.permute.xlu0 %1103
    %1105 = vrot.lane.b32.xlu0 %v508, 112
    %v1106 = vpop.permute.xlu0 %1105
    %1109 = vrot.lane.b32.xlu0 %v505, 104
    %v1110 = vpop.permute.xlu0 %1109
    %1111 = vrot.lane.b32.xlu0 %v508, 104
    %v1112 = vpop.permute.xlu0 %1111
    %v1115 = vcombine.low %v505, %v1104
    %v1116 = vcombine.high %v505, %v1104
    %v1118 = vunpack.c.l.s4 1983009808
    %v1119 = vunpack.c.0.s8 %v1118
    %v1120 = vlaneseq
    %v1121 = vshrl.u32 %v1120, 7
    %v1122 = vsub.s32 %v1119, %v1121
    %v1123 = vrot.slane %v1115, %v1122
    %v1125 = vunpack.c.l.s4 1983009808
    %v1126 = vunpack.c.0.s8 %v1125
    %v1127 = vlaneseq
    %v1128 = vshrl.u32 %v1127, 7
    %v1129 = vsub.s32 %v1126, %v1128
    %v1130 = vrot.slane %v1116, %v1129
    %v1131 = vcombine.low %v1098, %v1110
    %v1132 = vcombine.high %v1098, %v1110
    %v1134 = vunpack.c.l.s4 1983009808
    %v1135 = vunpack.c.0.s8 %v1134
    %v1136 = vlaneseq
    %v1137 = vshrl.u32 %v1136, 7
    %v1138 = vsub.s32 %v1135, %v1137
    %v1139 = vrot.slane %v1131, %v1138
    %v1141 = vunpack.c.l.s4 1983009808
    %v1142 = vunpack.c.0.s8 %v1141
    %v1143 = vlaneseq
    %v1144 = vshrl.u32 %v1143, 7
    %v1145 = vsub.s32 %v1142, %v1144
    %v1146 = vrot.slane %v1132, %v1145
    %v1147 = vcombine.low %v1123, %v1139
    %v1148 = vcombine.high %v1123, %v1139
    %v1150 = vunpack.c.l.s4 1934713408
    %v1151 = vunpack.c.0.s8 %v1150
    %v1152 = vlaneseq
    %v1153 = vshrl.u32 %v1152, 7
    %v1154 = vsub.s32 %v1151, %v1153
    %v1155 = vrot.slane %v1147, %v1154
    %v1157 = vunpack.c.l.s4 1934713408
    %v1158 = vunpack.c.0.s8 %v1157
    %v1159 = vlaneseq
    %v1160 = vshrl.u32 %v1159, 7
    %v1161 = vsub.s32 %v1158, %v1160
    %v1162 = vrot.slane %v1148, %v1161
    %v1163 = vcombine.low %v1130, %v1146
    %v1164 = vcombine.high %v1130, %v1146
    %v1166 = vunpack.c.l.s4 1934713408
    %v1167 = vunpack.c.0.s8 %v1166
    %v1168 = vlaneseq
    %v1169 = vshrl.u32 %v1168, 7
    %v1170 = vsub.s32 %v1167, %v1169
    %v1171 = vrot.slane %v1163, %v1170
    %v1173 = vunpack.c.l.s4 1934713408
    %v1174 = vunpack.c.0.s8 %v1173
    %v1175 = vlaneseq
    %v1176 = vshrl.u32 %v1175, 7
    %v1177 = vsub.s32 %v1174, %v1176
    %v1178 = vrot.slane %v1164, %v1177
    %v1179 = vcombine.high %v1155, 0.0
    %v1180 = vcombine.high %v1162, 0.0
    %v1181 = vcombine.high %v1171, 0.0
    %v1182 = vcombine.high %v1178, 0.0
    %v1183 = vcombine.low %v508, %v1106
    %v1184 = vcombine.high %v508, %v1106
    %v1186 = vunpack.c.l.s4 1983009808
    %v1187 = vunpack.c.0.s8 %v1186
    %v1188 = vlaneseq
    %v1189 = vshrl.u32 %v1188, 7
    %v1190 = vsub.s32 %v1187, %v1189
    %v1191 = vrot.slane %v1183, %v1190
    %v1193 = vunpack.c.l.s4 1983009808
    %v1194 = vunpack.c.0.s8 %v1193
    %v1195 = vlaneseq
    %v1196 = vshrl.u32 %v1195, 7
    %v1197 = vsub.s32 %v1194, %v1196
    %v1198 = vrot.slane %v1184, %v1197
    %v1199 = vcombine.low %v1100, %v1112
    %v1200 = vcombine.high %v1100, %v1112
    %v1202 = vunpack.c.l.s4 1983009808
    %v1203 = vunpack.c.0.s8 %v1202
    %v1204 = vlaneseq
    %v1205 = vshrl.u32 %v1204, 7
    %v1206 = vsub.s32 %v1203, %v1205
    %v1207 = vrot.slane %v1199, %v1206
    %v1209 = vunpack.c.l.s4 1983009808
    %v1210 = vunpack.c.0.s8 %v1209
    %v1211 = vlaneseq
    %v1212 = vshrl.u32 %v1211, 7
    %v1213 = vsub.s32 %v1210, %v1212
    %v1214 = vrot.slane %v1200, %v1213
    %v1215 = vcombine.low %v1191, %v1207
    %v1216 = vcombine.high %v1191, %v1207
    %v1218 = vunpack.c.l.s4 1934713408
    %v1219 = vunpack.c.0.s8 %v1218
    %v1220 = vlaneseq
    %v1221 = vshrl.u32 %v1220, 7
    %v1222 = vsub.s32 %v1219, %v1221
    %v1223 = vrot.slane %v1215, %v1222
    %v1225 = vunpack.c.l.s4 1934713408
    %v1226 = vunpack.c.0.s8 %v1225
    %v1227 = vlaneseq
    %v1228 = vshrl.u32 %v1227, 7
    %v1229 = vsub.s32 %v1226, %v1228
    %v1230 = vrot.slane %v1216, %v1229
    %v1231 = vcombine.low %v1198, %v1214
    %v1232 = vcombine.high %v1198, %v1214
    %v1234 = vunpack.c.l.s4 1934713408
    %v1235 = vunpack.c.0.s8 %v1234
    %v1236 = vlaneseq
    %v1237 = vshrl.u32 %v1236, 7
    %v1238 = vsub.s32 %v1235, %v1237
    %v1239 = vrot.slane %v1231, %v1238
    %v1241 = vunpack.c.l.s4 1934713408
    %v1242 = vunpack.c.0.s8 %v1241
    %v1243 = vlaneseq
    %v1244 = vshrl.u32 %v1243, 7
    %v1245 = vsub.s32 %v1242, %v1244
    %v1246 = vrot.slane %v1232, %v1245
    %v1247 = vcombine.high %v1223, 0.0
    %v1248 = vcombine.high %v1230, 0.0
    %v1249 = vcombine.high %v1239, 0.0
    %v1250 = vcombine.high %v1246, 0.0
    %v1251 = vcombine.low %v1155, %v1162
    %v1253 = vunpack.c.l.s4 1983009808
    %v1254 = vunpack.c.0.s8 %v1253
    %v1255 = vlaneseq
    %v1256 = vshrl.u32 %v1255, 7
    %v1257 = vsub.s32 %v1254, %v1256
    %v1258 = vrot.slane %v1251, %v1257
    %v1259 = vcombine.low %v1179, %v1180
    %v1261 = vunpack.c.l.s4 1983009808
    %v1262 = vunpack.c.0.s8 %v1261
    %v1263 = vlaneseq
    %v1264 = vshrl.u32 %v1263, 7
    %v1265 = vsub.s32 %v1262, %v1264
    %v1266 = vrot.slane %v1259, %v1265
    %v1267 = vcombine.low %v1171, %v1178
    %v1269 = vunpack.c.l.s4 1983009808
    %v1270 = vunpack.c.0.s8 %v1269
    %v1271 = vlaneseq
    %v1272 = vshrl.u32 %v1271, 7
    %v1273 = vsub.s32 %v1270, %v1272
    %v1274 = vrot.slane %v1267, %v1273
    %v1275 = vcombine.low %v1181, %v1182
    %v1277 = vunpack.c.l.s4 1983009808
    %v1278 = vunpack.c.0.s8 %v1277
    %v1279 = vlaneseq
    %v1280 = vshrl.u32 %v1279, 7
    %v1281 = vsub.s32 %v1278, %v1280
    %v1282 = vrot.slane %v1275, %v1281
    %v1283 = vcombine.low %v1258, %v1266
    %v1284 = vcombine.high %v1258, %v1266
    %v1286 = vunpack.c.l.s4 1934713408
    %v1287 = vunpack.c.0.s8 %v1286
    %v1288 = vlaneseq
    %v1289 = vshrl.u32 %v1288, 7
    %v1290 = vsub.s32 %v1287, %v1289
    %v1291 = vrot.slane %v1283, %v1290
    %v1293 = vunpack.c.l.s4 1934713408
    %v1294 = vunpack.c.0.s8 %v1293
    %v1295 = vlaneseq
    %v1296 = vshrl.u32 %v1295, 7
    %v1297 = vsub.s32 %v1294, %v1296
    %v1298 = vrot.slane %v1284, %v1297
    %v1299 = vcombine.low %v1274, %v1282
    %v1300 = vcombine.high %v1274, %v1282
    %v1302 = vunpack.c.l.s4 1934713408
    %v1303 = vunpack.c.0.s8 %v1302
    %v1304 = vlaneseq
    %v1305 = vshrl.u32 %v1304, 7
    %v1306 = vsub.s32 %v1303, %v1305
    %v1307 = vrot.slane %v1299, %v1306
    %v1309 = vunpack.c.l.s4 1934713408
    %v1310 = vunpack.c.0.s8 %v1309
    %v1311 = vlaneseq
    %v1312 = vshrl.u32 %v1311, 7
    %v1313 = vsub.s32 %v1310, %v1312
    %v1314 = vrot.slane %v1300, %v1313
    %v1315 = vcombine.low %v1291, %v1307
    %v1316 = vcombine.high %v1291, %v1307
    %v1317 = vcombine.low %v1298, %v1314
    %v1318 = vcombine.high %v1298, %v1314
    %v1319 = vcombine.low %v1223, %v1230
    %v1321 = vunpack.c.l.s4 1983009808
    %v1322 = vunpack.c.0.s8 %v1321
    %v1323 = vlaneseq
    %v1324 = vshrl.u32 %v1323, 7
    %v1325 = vsub.s32 %v1322, %v1324
    %v1326 = vrot.slane %v1319, %v1325
    %v1327 = vcombine.low %v1247, %v1248
    %v1329 = vunpack.c.l.s4 1983009808
    %v1330 = vunpack.c.0.s8 %v1329
    %v1331 = vlaneseq
    %v1332 = vshrl.u32 %v1331, 7
    %v1333 = vsub.s32 %v1330, %v1332
    %v1334 = vrot.slane %v1327, %v1333
    %v1335 = vcombine.low %v1239, %v1246
    %v1337 = vunpack.c.l.s4 1983009808
    %v1338 = vunpack.c.0.s8 %v1337
    %v1339 = vlaneseq
    %v1340 = vshrl.u32 %v1339, 7
    %v1341 = vsub.s32 %v1338, %v1340
    %v1342 = vrot.slane %v1335, %v1341
    %v1343 = vcombine.low %v1249, %v1250
    %v1345 = vunpack.c.l.s4 1983009808
    %v1346 = vunpack.c.0.s8 %v1345
    %v1347 = vlaneseq
    %v1348 = vshrl.u32 %v1347, 7
    %v1349 = vsub.s32 %v1346, %v1348
    %v1350 = vrot.slane %v1343, %v1349
    %v1351 = vcombine.low %v1326, %v1334
    %v1352 = vcombine.high %v1326, %v1334
    %v1354 = vunpack.c.l.s4 1934713408
    %v1355 = vunpack.c.0.s8 %v1354
    %v1356 = vlaneseq
    %v1357 = vshrl.u32 %v1356, 7
    %v1358 = vsub.s32 %v1355, %v1357
    %v1359 = vrot.slane %v1351, %v1358
    %v1361 = vunpack.c.l.s4 1934713408
    %v1362 = vunpack.c.0.s8 %v1361
    %v1363 = vlaneseq
    %v1364 = vshrl.u32 %v1363, 7
    %v1365 = vsub.s32 %v1362, %v1364
    %v1366 = vrot.slane %v1352, %v1365
    %v1367 = vcombine.low %v1342, %v1350
    %v1368 = vcombine.high %v1342, %v1350
    %v1370 = vunpack.c.l.s4 1934713408
    %v1371 = vunpack.c.0.s8 %v1370
    %v1372 = vlaneseq
    %v1373 = vshrl.u32 %v1372, 7
    %v1374 = vsub.s32 %v1371, %v1373
    %v1375 = vrot.slane %v1367, %v1374
    %v1377 = vunpack.c.l.s4 1934713408
    %v1378 = vunpack.c.0.s8 %v1377
    %v1379 = vlaneseq
    %v1380 = vshrl.u32 %v1379, 7
    %v1381 = vsub.s32 %v1378, %v1380
    %v1382 = vrot.slane %v1368, %v1381
    %v1383 = vcombine.low %v1359, %v1375
    %v1384 = vcombine.high %v1359, %v1375
    %v1385 = vcombine.low %v1366, %v1382
    %v1386 = vcombine.high %v1366, %v1382
    %v1387 = vpack.c.bf16 %v799, %v731
    %v1388 = vpack.c.bf16 %v800, %v732
    %v1389 = vpack.c.bf16 %v801, %v733
    %v1390 = vpack.c.bf16 %v802, %v734
    %v1391 = vpack.c.bf16 %v1091, %v1023
    %v1392 = vpack.c.bf16 %v1092, %v1024
    %v1393 = vpack.c.bf16 %v1093, %v1025
    %v1394 = vpack.c.bf16 %v1094, %v1026
    %vm1395 = vcmask 64512
    %v1397 = vsel %vm1395, %v1387, 0
    %v1400 = vsel %vm1395, %v1391, 0
    %1402 = vmatprep.subr.bf16.mxu0 0
    %1403 = vmatpush1.bf16.xpose.msra.mxu0 %v1400
    %1404 = vmatprep.subr.bf16.mxu0 0
    %1405 = vmatpush1.bf16.xpose.msra.mxu0 0
    %1406 = vmatprep.subr.bf16.mxu0 0
    %1407 = vmatpush1.bf16.xpose.msra.mxu0 0
    %1408 = vmatprep.subr.bf16.mxu0 0
    %1409 = vmatpush1.bf16.xpose.msra.mxu0 0
    %1410 = vmatprep.subr.bf16.mxu0 0
    %1411 = vmatpush1.bf16.xpose.msra.mxu0 0
    %1412 = vmatprep.subr.bf16.mxu0 0
    %1413 = vmatpush1.bf16.xpose.msra.mxu0 0
    %1414 = vmatprep.subr.bf16.mxu0 0
    %1415 = vmatpush1.bf16.xpose.msra.mxu0 0
    %1416 = vmatprep.subr.bf16.mxu0 0
    %1417 = vmatpush1.bf16.xpose.msra.mxu0 0
    %1418 = vmatprep.subr.bf16.mxu0 0
    %1419 = vmatpush1.bf16.xpose.msra.mxu0 0
    %1420 = vmatprep.subr.bf16.mxu0 0
    %1421 = vmatpush1.bf16.xpose.msra.mxu0 0
    %1422 = vmatprep.subr.bf16.mxu0 0
    %1423 = vmatpush1.bf16.xpose.msra.mxu0 0
    %1424 = vmatprep.subr.bf16.mxu0 0
    %1425 = vmatpush1.bf16.xpose.msra.mxu0 0
    %1426 = vmatprep.subr.bf16.mxu0 0
    %1427 = vmatpush1.bf16.xpose.msra.mxu0 0
    %1428 = vmatprep.subr.bf16.mxu0 0
    %1429 = vmatpush1.bf16.xpose.msra.mxu0 0
    %1430 = vmatprep.subr.bf16.mxu0 0
    %1431 = vmatpush1.bf16.xpose.msra.mxu0 0
    %1432 = vmatprep.subr.bf16.mxu0 0
    %1433 = vmatpush1.bf16.xpose.msra.mxu0 0
    %1434 = vmatprep.mubr.bf16.mxu0 0
    %1435 = vmatmul.mubr.bf16.gmra.mrb[0].mxu0 %v1397
    %v1436 = vpop.f32.mrb[0].mxu0
    %v1437 = vadd.f32 0.0, %v1436
    %v1438 = vpop.f32.mrb[0].mxu0
    %v1439 = vpop.f32.mrb[0].mxu0
    %v1440 = vadd.f32 0.0, %v1439
    %v1441 = vpop.f32.mrb[0].mxu0
    %1442 = vdwg.mxu0
    %v1444 = vsel %vm1395, %v1388, 0
    %v1447 = vsel %vm1395, %v1392, 0
    %1449 = vmatprep.subr.bf16.mxu0 0
    %1450 = vmatpush1.bf16.xpose.msra.mxu0 %v1447
    %1451 = vmatprep.subr.bf16.mxu0 0
    %1452 = vmatpush1.bf16.xpose.msra.mxu0 0
    %1453 = vmatprep.subr.bf16.mxu0 0
    %1454 = vmatpush1.bf16.xpose.msra.mxu0 0
    %1455 = vmatprep.subr.bf16.mxu0 0
    %1456 = vmatpush1.bf16.xpose.msra.mxu0 0
    %1457 = vmatprep.subr.bf16.mxu0 0
    %1458 = vmatpush1.bf16.xpose.msra.mxu0 0
    %1459 = vmatprep.subr.bf16.mxu0 0
    %1460 = vmatpush1.bf16.xpose.msra.mxu0 0
    %1461 = vmatprep.subr.bf16.mxu0 0
    %1462 = vmatpush1.bf16.xpose.msra.mxu0 0
    %1463 = vmatprep.subr.bf16.mxu0 0
    %1464 = vmatpush1.bf16.xpose.msra.mxu0 0
    %1465 = vmatprep.subr.bf16.mxu0 0
    %1466 = vmatpush1.bf16.xpose.msra.mxu0 0
    %1467 = vmatprep.subr.bf16.mxu0 0
    %1468 = vmatpush1.bf16.xpose.msra.mxu0 0
    %1469 = vmatprep.subr.bf16.mxu0 0
    %1470 = vmatpush1.bf16.xpose.msra.mxu0 0
    %1471 = vmatprep.subr.bf16.mxu0 0
    %1472 = vmatpush1.bf16.xpose.msra.mxu0 0
    %1473 = vmatprep.subr.bf16.mxu0 0
    %1474 = vmatpush1.bf16.xpose.msra.mxu0 0
    %1475 = vmatprep.subr.bf16.mxu0 0
    %1476 = vmatpush1.bf16.xpose.msra.mxu0 0
    %1477 = vmatprep.subr.bf16.mxu0 0
    %1478 = vmatpush1.bf16.xpose.msra.mxu0 0
    %1479 = vmatprep.subr.bf16.mxu0 0
    %1480 = vmatpush1.bf16.xpose.msra.mxu0 0
    %1481 = vmatprep.mubr.bf16.mxu0 0
    %1482 = vmatmul.mubr.bf16.gmra.mrb[0].mxu0 %v1444
    %v1483 = vpop.f32.mrb[0].mxu0
    %v1484 = vadd.f32 0.0, %v1483
    %v1485 = vpop.f32.mrb[0].mxu0
    %v1486 = vpop.f32.mrb[0].mxu0
    %v1487 = vadd.f32 0.0, %v1486
    %v1488 = vpop.f32.mrb[0].mxu0
    %1489 = vdwg.mxu0
    %v1491 = vsel %vm1395, %v1389, 0
    %v1494 = vsel %vm1395, %v1393, 0
    %1496 = vmatprep.subr.bf16.mxu0 0
    %1497 = vmatpush1.bf16.xpose.msra.mxu0 %v1494
    %1498 = vmatprep.subr.bf16.mxu0 0
    %1499 = vmatpush1.bf16.xpose.msra.mxu0 0
    %1500 = vmatprep.subr.bf16.mxu0 0
    %1501 = vmatpush1.bf16.xpose.msra.mxu0 0
    %1502 = vmatprep.subr.bf16.mxu0 0
    %1503 = vmatpush1.bf16.xpose.msra.mxu0 0
    %1504 = vmatprep.subr.bf16.mxu0 0
    %1505 = vmatpush1.bf16.xpose.msra.mxu0 0
    %1506 = vmatprep.subr.bf16.mxu0 0
    %1507 = vmatpush1.bf16.xpose.msra.mxu0 0
    %1508 = vmatprep.subr.bf16.mxu0 0
    %1509 = vmatpush1.bf16.xpose.msra.mxu0 0
    %1510 = vmatprep.subr.bf16.mxu0 0
    %1511 = vmatpush1.bf16.xpose.msra.mxu0 0
    %1512 = vmatprep.subr.bf16.mxu0 0
    %1513 = vmatpush1.bf16.xpose.msra.mxu0 0
    %1514 = vmatprep.subr.bf16.mxu0 0
    %1515 = vmatpush1.bf16.xpose.msra.mxu0 0
    %1516 = vmatprep.subr.bf16.mxu0 0
    %1517 = vmatpush1.bf16.xpose.msra.mxu0 0
    %1518 = vmatprep.subr.bf16.mxu0 0
    %1519 = vmatpush1.bf16.xpose.msra.mxu0 0
    %1520 = vmatprep.subr.bf16.mxu0 0
    %1521 = vmatpush1.bf16.xpose.msra.mxu0 0
    %1522 = vmatprep.subr.bf16.mxu0 0
    %1523 = vmatpush1.bf16.xpose.msra.mxu0 0
    %1524 = vmatprep.subr.bf16.mxu0 0
    %1525 = vmatpush1.bf16.xpose.msra.mxu0 0
    %1526 = vmatprep.subr.bf16.mxu0 0
    %1527 = vmatpush1.bf16.xpose.msra.mxu0 0
    %1528 = vmatprep.mubr.bf16.mxu0 0
    %1529 = vmatmul.mubr.bf16.gmra.mrb[0].mxu0 %v1491
    %v1530 = vpop.f32.mrb[0].mxu0
    %v1531 = vadd.f32 0.0, %v1530
    %v1532 = vpop.f32.mrb[0].mxu0
    %v1533 = vpop.f32.mrb[0].mxu0
    %v1534 = vadd.f32 0.0, %v1533
    %v1535 = vpop.f32.mrb[0].mxu0
    %1536 = vdwg.mxu0
    %v1538 = vsel %vm1395, %v1390, 0
    %v1541 = vsel %vm1395, %v1394, 0
    %1543 = vmatprep.subr.bf16.mxu0 0
    %1544 = vmatpush1.bf16.xpose.msra.mxu0 %v1541
    %1545 = vmatprep.subr.bf16.mxu0 0
    %1546 = vmatpush1.bf16.xpose.msra.mxu0 0
    %1547 = vmatprep.subr.bf16.mxu0 0
    %1548 = vmatpush1.bf16.xpose.msra.mxu0 0
    %1549 = vmatprep.subr.bf16.mxu0 0
    %1550 = vmatpush1.bf16.xpose.msra.mxu0 0
    %1551 = vmatprep.subr.bf16.mxu0 0
    %1552 = vmatpush1.bf16.xpose.msra.mxu0 0
    %1553 = vmatprep.subr.bf16.mxu0 0
    %1554 = vmatpush1.bf16.xpose.msra.mxu0 0
    %1555 = vmatprep.subr.bf16.mxu0 0
    %1556 = vmatpush1.bf16.xpose.msra.mxu0 0
    %1557 = vmatprep.subr.bf16.mxu0 0
    %1558 = vmatpush1.bf16.xpose.msra.mxu0 0
    %1559 = vmatprep.subr.bf16.mxu0 0
    %1560 = vmatpush1.bf16.xpose.msra.mxu0 0
    %1561 = vmatprep.subr.bf16.mxu0 0
    %1562 = vmatpush1.bf16.xpose.msra.mxu0 0
    %1563 = vmatprep.subr.bf16.mxu0 0
    %1564 = vmatpush1.bf16.xpose.msra.mxu0 0
    %1565 = vmatprep.subr.bf16.mxu0 0
    %1566 = vmatpush1.bf16.xpose.msra.mxu0 0
    %1567 = vmatprep.subr.bf16.mxu0 0
    %1568 = vmatpush1.bf16.xpose.msra.mxu0 0
    %1569 = vmatprep.subr.bf16.mxu0 0
    %1570 = vmatpush1.bf16.xpose.msra.mxu0 0
    %1571 = vmatprep.subr.bf16.mxu0 0
    %1572 = vmatpush1.bf16.xpose.msra.mxu0 0
    %1573 = vmatprep.subr.bf16.mxu0 0
    %1574 = vmatpush1.bf16.xpose.msra.mxu0 0
    %1575 = vmatprep.mubr.bf16.mxu0 0
    %1576 = vmatmul.mubr.bf16.gmra.mrb[0].mxu0 %v1538
    %v1577 = vpop.f32.mrb[0].mxu0
    %v1578 = vadd.f32 0.0, %v1577
    %v1579 = vpop.f32.mrb[0].mxu0
    %v1580 = vpop.f32.mrb[0].mxu0
    %v1581 = vadd.f32 0.0, %v1580
    %v1582 = vpop.f32.mrb[0].mxu0
    %1583 = vdwg.mxu0
    %v1584 = vsel %vm312, 1, 0
    %v1585 = vsel %vm313, 1, 0
    %vm1586 = vcmp.eq.s32.totalorder %v1584, 1
    %vm1587 = vcmp.eq.s32.totalorder %v1585, 1
    %v1588 = vsel %vm1586, %v1437, -1e+30
    %v1589 = vsel %vm1587, %v1440, -1e+30
    %v1590 = vsel %vm1586, %v1484, -1e+30
    %v1591 = vsel %vm1587, %v1487, -1e+30
    %v1592 = vsel %vm1586, %v1531, -1e+30
    %v1593 = vsel %vm1587, %v1534, -1e+30
    %v1594 = vsel %vm1586, %v1578, -1e+30
    %v1595 = vsel %vm1587, %v1581, -1e+30
    %vm1596 = vcmask 130048
    %v1597 = vsel %vm1596, %v1588, -inf
    %1598 = vmax.xlane.f32.xlu0 %v1597
    %v1599 = vpop.xlane.xlu0 %1598
    %v1600 = vsel %vm1596, %v1589, -inf
    %1601 = vmax.xlane.f32.xlu0 %v1600
    %v1602 = vpop.xlane.xlu0 %1601
    %v1603 = vsel %vm1596, %v1590, -inf
    %1604 = vmax.xlane.f32.xlu0 %v1603
    %v1605 = vpop.xlane.xlu0 %1604
    %v1606 = vsel %vm1596, %v1591, -inf
    %1607 = vmax.xlane.f32.xlu0 %v1606
    %v1608 = vpop.xlane.xlu0 %1607
    %v1609 = vsel %vm1596, %v1592, -inf
    %1610 = vmax.xlane.f32.xlu0 %v1609
    %v1611 = vpop.xlane.xlu0 %1610
    %v1612 = vsel %vm1596, %v1593, -inf
    %1613 = vmax.xlane.f32.xlu0 %v1612
    %v1614 = vpop.xlane.xlu0 %1613
    %v1615 = vsel %vm1596, %v1594, -inf
    %1616 = vmax.xlane.f32.xlu0 %v1615
    %v1617 = vpop.xlane.xlu0 %1616
    %v1618 = vsel %vm1596, %v1595, -inf
    %1619 = vmax.xlane.f32.xlu0 %v1618
    %v1620 = vpop.xlane.xlu0 %1619
    %v1621 = vsub.f32 %v1588, %v1599
    %v1622 = vsub.f32 %v1589, %v1602
    %v1623 = vsub.f32 %v1590, %v1605
    %v1624 = vsub.f32 %v1591, %v1608
    %v1625 = vsub.f32 %v1592, %v1611
    %v1626 = vsub.f32 %v1593, %v1614
    %v1627 = vsub.f32 %v1594, %v1617
    %v1628 = vsub.f32 %v1595, %v1620
    %v1629 = vmul.f32 %v1621, 1.442695
    %v1630 = vpow.pop %v1629
    %v1631 = vmul.f32 %v1622, 1.442695
    %v1632 = vpow.pop %v1631
    %v1633 = vmul.f32 %v1623, 1.442695
    %v1634 = vpow.pop %v1633
    %v1635 = vmul.f32 %v1624, 1.442695
    %v1636 = vpow.pop %v1635
    %v1637 = vmul.f32 %v1625, 1.442695
    %v1638 = vpow.pop %v1637
    %v1639 = vmul.f32 %v1626, 1.442695
    %v1640 = vpow.pop %v1639
    %v1641 = vmul.f32 %v1627, 1.442695
    %v1642 = vpow.pop %v1641
    %v1643 = vmul.f32 %v1628, 1.442695
    %v1644 = vpow.pop %v1643
    %v1645 = vsel %vm1596, %v1630, 0.0
    %1646 = vadd.xlane.f32.xlu0 %v1645
    %v1647 = vpop.xlane.xlu0 %1646
    %v1648 = vsel %vm1596, %v1632, 0.0
    %1649 = vadd.xlane.f32.xlu0 %v1648
    %v1650 = vpop.xlane.xlu0 %1649
    %v1651 = vsel %vm1596, %v1634, 0.0
    %1652 = vadd.xlane.f32.xlu0 %v1651
    %v1653 = vpop.xlane.xlu0 %1652
    %v1654 = vsel %vm1596, %v1636, 0.0
    %1655 = vadd.xlane.f32.xlu0 %v1654
    %v1656 = vpop.xlane.xlu0 %1655
    %v1657 = vsel %vm1596, %v1638, 0.0
    %1658 = vadd.xlane.f32.xlu0 %v1657
    %v1659 = vpop.xlane.xlu0 %1658
    %v1660 = vsel %vm1596, %v1640, 0.0
    %1661 = vadd.xlane.f32.xlu0 %v1660
    %v1662 = vpop.xlane.xlu0 %1661
    %v1663 = vsel %vm1596, %v1642, 0.0
    %1664 = vadd.xlane.f32.xlu0 %v1663
    %v1665 = vpop.xlane.xlu0 %1664
    %v1666 = vsel %vm1596, %v1644, 0.0
    %1667 = vadd.xlane.f32.xlu0 %v1666
    %v1668 = vpop.xlane.xlu0 %1667
    %v1669 = vrcp.pop %v1647
    %v1670 = vrcp.pop %v1650
    %v1671 = vrcp.pop %v1653
    %v1672 = vrcp.pop %v1656
    %v1673 = vrcp.pop %v1659
    %v1674 = vrcp.pop %v1662
    %v1675 = vrcp.pop %v1665
    %v1676 = vrcp.pop %v1668
    %v1677 = vmul.f32 %v1630, %v1669
    %v1678 = vmul.f32 %v1632, %v1670
    %v1679 = vmul.f32 %v1634, %v1671
    %v1680 = vmul.f32 %v1636, %v1672
    %v1681 = vmul.f32 %v1638, %v1673
    %v1682 = vmul.f32 %v1640, %v1674
    %v1683 = vmul.f32 %v1642, %v1675
    %v1684 = vmul.f32 %v1644, %v1676
    %v1685 = vpack.c.bf16 %v1678, %v1677
    %v1686 = vpack.c.bf16 %v1680, %v1679
    %v1687 = vpack.c.bf16 %v1682, %v1681
    %v1688 = vpack.c.bf16 %v1684, %v1683
    %v1689 = vpack.c.bf16 %v1383, %v1315
    %v1690 = vpack.c.bf16 %v1384, %v1316
    %v1691 = vpack.c.bf16 %v1385, %v1317
    %v1692 = vpack.c.bf16 %v1386, %v1318
    %v1694 = vsel %vm1596, %v1685, 0
    %1696 = vmatprep.subr.bf16.mxu0 0
    %1697 = vmatpush1.bf16.msra.mxu0 %v1689
    %1698 = vmatprep.subr.bf16.mxu0 0
    %1699 = vmatpush1.bf16.msra.mxu0 0
    %1700 = vmatprep.subr.bf16.mxu0 0
    %1701 = vmatpush1.bf16.msra.mxu0 0
    %1702 = vmatprep.subr.bf16.mxu0 0
    %1703 = vmatpush1.bf16.msra.mxu0 0
    %1704 = vmatprep.subr.bf16.mxu0 0
    %1705 = vmatpush1.bf16.msra.mxu0 0
    %1706 = vmatprep.subr.bf16.mxu0 0
    %1707 = vmatpush1.bf16.msra.mxu0 0
    %1708 = vmatprep.subr.bf16.mxu0 0
    %1709 = vmatpush1.bf16.msra.mxu0 0
    %1710 = vmatprep.subr.bf16.mxu0 0
    %1711 = vmatpush1.bf16.msra.mxu0 0
    %1712 = vmatprep.subr.bf16.mxu0 0
    %1713 = vmatpush1.bf16.msra.mxu0 0
    %1714 = vmatprep.subr.bf16.mxu0 0
    %1715 = vmatpush1.bf16.msra.mxu0 0
    %1716 = vmatprep.subr.bf16.mxu0 0
    %1717 = vmatpush1.bf16.msra.mxu0 0
    %1718 = vmatprep.subr.bf16.mxu0 0
    %1719 = vmatpush1.bf16.msra.mxu0 0
    %1720 = vmatprep.subr.bf16.mxu0 0
    %1721 = vmatpush1.bf16.msra.mxu0 0
    %1722 = vmatprep.subr.bf16.mxu0 0
    %1723 = vmatpush1.bf16.msra.mxu0 0
    %1724 = vmatprep.subr.bf16.mxu0 0
    %1725 = vmatpush1.bf16.msra.mxu0 0
    %1726 = vmatprep.subr.bf16.mxu0 0
    %1727 = vmatpush1.bf16.msra.mxu0 0
    %1728 = vmatprep.mubr.bf16.mxu0 0
    %1729 = vmatmul.mubr.bf16.gmra.mrb[0].mxu0 %v1694
    %v1730 = vpop.f32.mrb[0].mxu0
    %v1731 = vadd.f32 0.0, %v1730
    %v1732 = vpop.f32.mrb[0].mxu0
    %v1733 = vpop.f32.mrb[0].mxu0
    %v1734 = vadd.f32 0.0, %v1733
    %v1735 = vpop.f32.mrb[0].mxu0
    %1736 = vdwg.mxu0
    %v1738 = vsel %vm1596, %v1686, 0
    %1740 = vmatprep.subr.bf16.mxu0 0
    %1741 = vmatpush1.bf16.msra.mxu0 %v1690
    %1742 = vmatprep.subr.bf16.mxu0 0
    %1743 = vmatpush1.bf16.msra.mxu0 0
    %1744 = vmatprep.subr.bf16.mxu0 0
    %1745 = vmatpush1.bf16.msra.mxu0 0
    %1746 = vmatprep.subr.bf16.mxu0 0
    %1747 = vmatpush1.bf16.msra.mxu0 0
    %1748 = vmatprep.subr.bf16.mxu0 0
    %1749 = vmatpush1.bf16.msra.mxu0 0
    %1750 = vmatprep.subr.bf16.mxu0 0
    %1751 = vmatpush1.bf16.msra.mxu0 0
    %1752 = vmatprep.subr.bf16.mxu0 0
    %1753 = vmatpush1.bf16.msra.mxu0 0
    %1754 = vmatprep.subr.bf16.mxu0 0
    %1755 = vmatpush1.bf16.msra.mxu0 0
    %1756 = vmatprep.subr.bf16.mxu0 0
    %1757 = vmatpush1.bf16.msra.mxu0 0
    %1758 = vmatprep.subr.bf16.mxu0 0
    %1759 = vmatpush1.bf16.msra.mxu0 0
    %1760 = vmatprep.subr.bf16.mxu0 0
    %1761 = vmatpush1.bf16.msra.mxu0 0
    %1762 = vmatprep.subr.bf16.mxu0 0
    %1763 = vmatpush1.bf16.msra.mxu0 0
    %1764 = vmatprep.subr.bf16.mxu0 0
    %1765 = vmatpush1.bf16.msra.mxu0 0
    %1766 = vmatprep.subr.bf16.mxu0 0
    %1767 = vmatpush1.bf16.msra.mxu0 0
    %1768 = vmatprep.subr.bf16.mxu0 0
    %1769 = vmatpush1.bf16.msra.mxu0 0
    %1770 = vmatprep.subr.bf16.mxu0 0
    %1771 = vmatpush1.bf16.msra.mxu0 0
    %1772 = vmatprep.mubr.bf16.mxu0 0
    %1773 = vmatmul.mubr.bf16.gmra.mrb[0].mxu0 %v1738
    %v1774 = vpop.f32.mrb[0].mxu0
    %v1775 = vadd.f32 0.0, %v1774
    %v1776 = vpop.f32.mrb[0].mxu0
    %v1777 = vpop.f32.mrb[0].mxu0
    %v1778 = vadd.f32 0.0, %v1777
    %v1779 = vpop.f32.mrb[0].mxu0
    %1780 = vdwg.mxu0
    %v1782 = vsel %vm1596, %v1687, 0
    %1784 = vmatprep.subr.bf16.mxu0 0
    %1785 = vmatpush1.bf16.msra.mxu0 %v1691
    %1786 = vmatprep.subr.bf16.mxu0 0
    %1787 = vmatpush1.bf16.msra.mxu0 0
    %1788 = vmatprep.subr.bf16.mxu0 0
    %1789 = vmatpush1.bf16.msra.mxu0 0
    %1790 = vmatprep.subr.bf16.mxu0 0
    %1791 = vmatpush1.bf16.msra.mxu0 0
    %1792 = vmatprep.subr.bf16.mxu0 0
    %1793 = vmatpush1.bf16.msra.mxu0 0
    %1794 = vmatprep.subr.bf16.mxu0 0
    %1795 = vmatpush1.bf16.msra.mxu0 0
    %1796 = vmatprep.subr.bf16.mxu0 0
    %1797 = vmatpush1.bf16.msra.mxu0 0
    %1798 = vmatprep.subr.bf16.mxu0 0
    %1799 = vmatpush1.bf16.msra.mxu0 0
    %1800 = vmatprep.subr.bf16.mxu0 0
    %1801 = vmatpush1.bf16.msra.mxu0 0
    %1802 = vmatprep.subr.bf16.mxu0 0
    %1803 = vmatpush1.bf16.msra.mxu0 0
    %1804 = vmatprep.subr.bf16.mxu0 0
    %1805 = vmatpush1.bf16.msra.mxu0 0
    %1806 = vmatprep.subr.bf16.mxu0 0
    %1807 = vmatpush1.bf16.msra.mxu0 0
    %1808 = vmatprep.subr.bf16.mxu0 0
    %1809 = vmatpush1.bf16.msra.mxu0 0
    %1810 = vmatprep.subr.bf16.mxu0 0
    %1811 = vmatpush1.bf16.msra.mxu0 0
    %1812 = vmatprep.subr.bf16.mxu0 0
    %1813 = vmatpush1.bf16.msra.mxu0 0
    %1814 = vmatprep.subr.bf16.mxu0 0
    %1815 = vmatpush1.bf16.msra.mxu0 0
    %1816 = vmatprep.mubr.bf16.mxu0 0
    %1817 = vmatmul.mubr.bf16.gmra.mrb[0].mxu0 %v1782
    %v1818 = vpop.f32.mrb[0].mxu0
    %v1819 = vadd.f32 0.0, %v1818
    %v1820 = vpop.f32.mrb[0].mxu0
    %v1821 = vpop.f32.mrb[0].mxu0
    %v1822 = vadd.f32 0.0, %v1821
    %v1823 = vpop.f32.mrb[0].mxu0
    %1824 = vdwg.mxu0
    %v1826 = vsel %vm1596, %v1688, 0
    %1828 = vmatprep.subr.bf16.mxu0 0
    %1829 = vmatpush1.bf16.msra.mxu0 %v1692
    %1830 = vmatprep.subr.bf16.mxu0 0
    %1831 = vmatpush1.bf16.msra.mxu0 0
    %1832 = vmatprep.subr.bf16.mxu0 0
    %1833 = vmatpush1.bf16.msra.mxu0 0
    %1834 = vmatprep.subr.bf16.mxu0 0
    %1835 = vmatpush1.bf16.msra.mxu0 0
    %1836 = vmatprep.subr.bf16.mxu0 0
    %1837 = vmatpush1.bf16.msra.mxu0 0
    %1838 = vmatprep.subr.bf16.mxu0 0
    %1839 = vmatpush1.bf16.msra.mxu0 0
    %1840 = vmatprep.subr.bf16.mxu0 0
    %1841 = vmatpush1.bf16.msra.mxu0 0
    %1842 = vmatprep.subr.bf16.mxu0 0
    %1843 = vmatpush1.bf16.msra.mxu0 0
    %1844 = vmatprep.subr.bf16.mxu0 0
    %1845 = vmatpush1.bf16.msra.mxu0 0
    %1846 = vmatprep.subr.bf16.mxu0 0
    %1847 = vmatpush1.bf16.msra.mxu0 0
    %1848 = vmatprep.subr.bf16.mxu0 0
    %1849 = vmatpush1.bf16.msra.mxu0 0
    %1850 = vmatprep.subr.bf16.mxu0 0
    %1851 = vmatpush1.bf16.msra.mxu0 0
    %1852 = vmatprep.subr.bf16.mxu0 0
    %1853 = vmatpush1.bf16.msra.mxu0 0
    %1854 = vmatprep.subr.bf16.mxu0 0
    %1855 = vmatpush1.bf16.msra.mxu0 0
    %1856 = vmatprep.subr.bf16.mxu0 0
    %1857 = vmatpush1.bf16.msra.mxu0 0
    %1858 = vmatprep.subr.bf16.mxu0 0
    %1859 = vmatpush1.bf16.msra.mxu0 0
    %1860 = vmatprep.mubr.bf16.mxu0 0
    %1861 = vmatmul.mubr.bf16.gmra.mrb[0].mxu0 %v1826
    %v1862 = vpop.f32.mrb[0].mxu0
    %v1863 = vadd.f32 0.0, %v1862
    %v1864 = vpop.f32.mrb[0].mxu0
    %v1865 = vpop.f32.mrb[0].mxu0
    %v1866 = vadd.f32 0.0, %v1865
    %v1867 = vpop.f32.mrb[0].mxu0
    %1868 = vdwg.mxu0
    %1871 = vrot.lane.b32.xlu0 %v1775, 8
    %v1872 = vpop.permute.xlu0 %1871
    %1873 = vrot.lane.b32.xlu0 %v1778, 8
    %v1874 = vpop.permute.xlu0 %1873
    %1879 = vrot.lane.b32.xlu0 %v1819, 16
    %v1880 = vpop.permute.xlu0 %1879
    %1881 = vrot.lane.b32.xlu0 %v1822, 16
    %v1882 = vpop.permute.xlu0 %1881
    %1887 = vrot.lane.b32.xlu0 %v1863, 24
    %v1888 = vpop.permute.xlu0 %1887
    %1889 = vrot.lane.b32.xlu0 %v1866, 24
    %v1890 = vpop.permute.xlu0 %1889
    %v1893 = vsel %vm1395, %v1731, %v1872
    %v1894 = vsel %vm1395, %v1734, %v1874
    %v1895 = vsel %vm1596, %v1893, %v1880
    %v1896 = vsel %vm1596, %v1894, %v1882
    %vm1897 = vcmask 195584
    %v1898 = vsel %vm1897, %v1895, %v1888
    %v1899 = vsel %vm1897, %v1896, %v1890
    %v1900 = vpack.c.bf16 %v1899, %v1898
    %v1901 = vld [vmem:[#allocation13] sm:$0xf]
    %v1902 = vld [vmem:[#allocation13 + $0x4] sm:$0xf]
    %v1903 = vld [vmem:[#allocation13 + $0x8] sm:$0xf]
    %v1904 = vld [vmem:[#allocation13 + $0xc] sm:$0xf]
    %v1905 = vld [vmem:[#allocation14] sm:$0x1]
    %v1907 = vlaneseq
    %v1908 = vshrl.u32 %v1907, 7
    %v1909 = vsub.s32 0, %v1908
    %v1910 = vrot.slane %v1905, %v1909
    %v1916 = vunpack.c.l.b16 %v1901
    %v1917 = vunpack.c.l.b16 %v1902
    %v1918 = vunpack.c.l.b16 %v1903
    %v1919 = vunpack.c.l.b16 %v1904
    %v1920 = vpack.c.b16 %v1917, %v1916
    %v1921 = vpack.c.b16 %v1919, %v1918
    %v1925 = vsel %vm338, %v1900, 0
    %1927 = vmatprep.subr.bf16.mxu0 0
    %1928 = vmatpush1.bf16.msra.mxu0 %v1920
    %1929 = vmatprep.subr.bf16.mxu0 0
    %1930 = vmatpush1.bf16.msra.mxu0 %v1921
    %1931 = vmatprep.subr.bf16.mxu0 0
    %1932 = vmatpush1.bf16.msra.mxu0 0
    %1933 = vmatprep.subr.bf16.mxu0 0
    %1934 = vmatpush1.bf16.msra.mxu0 0
    %1935 = vmatprep.subr.bf16.mxu0 0
    %1936 = vmatpush1.bf16.msra.mxu0 0
    %1937 = vmatprep.subr.bf16.mxu0 0
    %1938 = vmatpush1.bf16.msra.mxu0 0
    %1939 = vmatprep.subr.bf16.mxu0 0
    %1940 = vmatpush1.bf16.msra.mxu0 0
    %1941 = vmatprep.subr.bf16.mxu0 0
    %1942 = vmatpush1.bf16.msra.mxu0 0
    %1943 = vmatprep.subr.bf16.mxu0 0
    %1944 = vmatpush1.bf16.msra.mxu0 0
    %1945 = vmatprep.subr.bf16.mxu0 0
    %1946 = vmatpush1.bf16.msra.mxu0 0
    %1947 = vmatprep.subr.bf16.mxu0 0
    %1948 = vmatpush1.bf16.msra.mxu0 0
    %1949 = vmatprep.subr.bf16.mxu0 0
    %1950 = vmatpush1.bf16.msra.mxu0 0
    %1951 = vmatprep.subr.bf16.mxu0 0
    %1952 = vmatpush1.bf16.msra.mxu0 0
    %1953 = vmatprep.subr.bf16.mxu0 0
    %1954 = vmatpush1.bf16.msra.mxu0 0
    %1955 = vmatprep.subr.bf16.mxu0 0
    %1956 = vmatpush1.bf16.msra.mxu0 0
    %1957 = vmatprep.subr.bf16.mxu0 0
    %1958 = vmatpush1.bf16.msra.mxu0 0
    %1959 = vmatprep.mubr.bf16.mxu0 0
    %1960 = vmatmul.mubr.bf16.gmra.mrb[0].mxu0 %v1925
    %v1961 = vpop.f32.mrb[0].mxu0
    %v1962 = vadd.f32 %v1910, %v1961
    %v1963 = vpop.f32.mrb[0].mxu0
    %v1964 = vpop.f32.mrb[0].mxu0
    %v1965 = vadd.f32 %v1910, %v1964
    %v1966 = vpop.f32.mrb[0].mxu0
    %1967 = vdwg.mxu0
    %v1968 = vadd.f32 %v265, %v1962
    %v1969 = vadd.f32 %v266, %v1965
    %v1970 = vld [vmem:[%s22] sm:$0x1]
    %v1971 = vld [vmem:[%s23] sm:$0x1]
    %v1972 = vsel %vm338, %v1968, 0.0
    %1973 = vadd.xlane.f32.xlu0 %v1972
    %v1974 = vpop.xlane.xlu0 %1973
    %v1975 = vsel %vm338, %v1969, 0.0
    %1976 = vadd.xlane.f32.xlu0 %v1975
    %v1977 = vpop.xlane.xlu0 %1976
    %v1978 = vrcp.pop 32.0
    %v1979 = vmul.f32 %v1974, %v1978
    %v1980 = vmul.f32 %v1977, %v1978
    %v1981 = vsub.f32 %v1968, %v1979
    %v1982 = vsub.f32 %v1969, %v1980
    %v1983 = vmul.f32 %v1981, %v1981
    %v1984 = vmul.f32 %v1982, %v1982
    %v1985 = vsel %vm338, %v1983, 0.0
    %1986 = vadd.xlane.f32.xlu0 %v1985
    %v1987 = vpop.xlane.xlu0 %1986
    %v1988 = vsel %vm338, %v1984, 0.0
    %1989 = vadd.xlane.f32.xlu0 %v1988
    %v1990 = vpop.xlane.xlu0 %1989
    %v1991 = vmul.f32 %v1987, %v1978
    %v1992 = vmul.f32 %v1990, %v1978
    %v1993 = vadd.f32 %v1991, 1e-06
    %v1994 = vadd.f32 %v1992, 1e-06
    %v1995 = vrsqrt.pop %v1993
    %v1996 = vrsqrt.pop %v1994
    %v1997 = vmul.f32 %v1981, %v1995
    %v1998 = vmul.f32 %v1982, %v1996
    %v2000 = vlaneseq
    %v2001 = vshrl.u32 %v2000, 7
    %v2002 = vsub.s32 0, %v2001
    %v2003 = vrot.slane %v1970, %v2002
    %v2005 = vmul.f32 %v1997, %v2003
    %v2006 = vmul.f32 %v1998, %v2003
    %v2008 = vlaneseq
    %v2009 = vshrl.u32 %v2008, 7
    %v2010 = vsub.s32 0, %v2009
    %v2011 = vrot.slane %v1971, %v2010
    %v2013 = vadd.f32 %v2005, %v2011
    %v2014 = vadd.f32 %v2006, %v2011
    %v2015 = vpack.c.bf16 %v2014, %v2013
    %v2016 = vld [vmem:[%s10] sm:$0xf]
    %v2017 = vld [vmem:[%s10 + $0x4] sm:$0xf]
    %v2018 = vld [vmem:[%s10 + $0x8] sm:$0xf]
    %v2019 = vld [vmem:[%s10 + $0xc] sm:$0xf]
    %v2020 = vld [vmem:[#allocation19] sm:$0x1]
    %v2022 = vlaneseq
    %v2023 = vshrl.u32 %v2022, 7
    %v2024 = vsub.s32 0, %v2023
    %v2025 = vrot.slane %v2020, %v2024
    %v2031 = vunpack.c.l.b16 %v2016
    %v2032 = vunpack.c.l.b16 %v2017
    %v2033 = vunpack.c.l.b16 %v2018
    %v2034 = vunpack.c.l.b16 %v2019
    %v2035 = vpack.c.b16 %v2032, %v2031
    %v2036 = vpack.c.b16 %v2034, %v2033
    %v2040 = vsel %vm338, %v2015, 0
    %2042 = vmatprep.subr.bf16.mxu0 0
    %2043 = vmatpush1.bf16.msra.mxu0 %v2035
    %2044 = vmatprep.subr.bf16.mxu0 0
    %2045 = vmatpush1.bf16.msra.mxu0 %v2036
    %2046 = vmatprep.subr.bf16.mxu0 0
    %2047 = vmatpush1.bf16.msra.mxu0 0
    %2048 = vmatprep.subr.bf16.mxu0 0
    %2049 = vmatpush1.bf16.msra.mxu0 0
    %2050 = vmatprep.subr.bf16.mxu0 0
    %2051 = vmatpush1.bf16.msra.mxu0 0
    %2052 = vmatprep.subr.bf16.mxu0 0
    %2053 = vmatpush1.bf16.msra.mxu0 0
    %2054 = vmatprep.subr.bf16.mxu0 0
    %2055 = vmatpush1.bf16.msra.mxu0 0
    %2056 = vmatprep.subr.bf16.mxu0 0
    %2057 = vmatpush1.bf16.msra.mxu0 0
    %2058 = vmatprep.subr.bf16.mxu0 0
    %2059 = vmatpush1.bf16.msra.mxu0 0
    %2060 = vmatprep.subr.bf16.mxu0 0
    %2061 = vmatpush1.bf16.msra.mxu0 0
    %2062 = vmatprep.subr.bf16.mxu0 0
    %2063 = vmatpush1.bf16.msra.mxu0 0
    %2064 = vmatprep.subr.bf16.mxu0 0
    %2065 = vmatpush1.bf16.msra.mxu0 0
    %2066 = vmatprep.subr.bf16.mxu0 0
    %2067 = vmatpush1.bf16.msra.mxu0 0
    %2068 = vmatprep.subr.bf16.mxu0 0
    %2069 = vmatpush1.bf16.msra.mxu0 0
    %2070 = vmatprep.subr.bf16.mxu0 0
    %2071 = vmatpush1.bf16.msra.mxu0 0
    %2072 = vmatprep.subr.bf16.mxu0 0
    %2073 = vmatpush1.bf16.msra.mxu0 0
    %2074 = vmatprep.mubr.bf16.mxu0 0
    %2075 = vmatmul.mubr.bf16.gmra.mrb[0].mxu0 %v2040
    %v2076 = vpop.f32.mrb[0].mxu0
    %v2077 = vadd.f32 %v2025, %v2076
    %v2078 = vpop.f32.mrb[0].mxu0
    %v2079 = vpop.f32.mrb[0].mxu0
    %v2080 = vadd.f32 %v2025, %v2079
    %v2081 = vpop.f32.mrb[0].mxu0
    %2082 = vdwg.mxu0
    %v2083 = vpack.c.bf16 %v268, %v267
    %v2084 = vpack.c.bf16 %v270, %v269
    %v2085 = vld [vmem:[#allocation16] sm:$0xf]
    %v2086 = vld [vmem:[#allocation16 + $0x4] sm:$0xf]
    %v2087 = vld [vmem:[#allocation16 + $0x8] sm:$0xf]
    %v2088 = vld [vmem:[#allocation16 + $0xc] sm:$0xf]
    %v2089 = vld [vmem:[#allocation20] sm:$0x1]
    %v2091 = vlaneseq
    %v2092 = vshrl.u32 %v2091, 7
    %v2093 = vsub.s32 0, %v2092
    %v2094 = vrot.slane %v2089, %v2093
    %v2100 = vunpack.c.l.b16 %v2085
    %v2101 = vunpack.c.l.b16 %v2086
    %v2102 = vunpack.c.l.b16 %v2087
    %v2103 = vunpack.c.l.b16 %v2088
    %v2104 = vpack.c.b16 %v2101, %v2100
    %v2105 = vpack.c.b16 %v2103, %v2102
    %v2109 = vsel %vm338, %v2083, 0
    %v2112 = vsel %vm338, %v2084, 0
    %2114 = vmatprep.subr.bf16.mxu0 0
    %2115 = vmatpush1.bf16.msra.mxu0 %v2104
    %2116 = vmatprep.subr.bf16.mxu0 0
    %2117 = vmatpush1.bf16.msra.mxu0 %v2105
    %2118 = vmatprep.subr.bf16.mxu0 0
    %2119 = vmatpush1.bf16.msra.mxu0 0
    %2120 = vmatprep.subr.bf16.mxu0 0
    %2121 = vmatpush1.bf16.msra.mxu0 0
    %2122 = vmatprep.subr.bf16.mxu0 0
    %2123 = vmatpush1.bf16.msra.mxu0 0
    %2124 = vmatprep.subr.bf16.mxu0 0
    %2125 = vmatpush1.bf16.msra.mxu0 0
    %2126 = vmatprep.subr.bf16.mxu0 0
    %2127 = vmatpush1.bf16.msra.mxu0 0
    %2128 = vmatprep.subr.bf16.mxu0 0
    %2129 = vmatpush1.bf16.msra.mxu0 0
    %2130 = vmatprep.subr.bf16.mxu0 0
    %2131 = vmatpush1.bf16.msra.mxu0 0
    %2132 = vmatprep.subr.bf16.mxu0 0
    %2133 = vmatpush1.bf16.msra.mxu0 0
    %2134 = vmatprep.subr.bf16.mxu0 0
    %2135 = vmatpush1.bf16.msra.mxu0 0
    %2136 = vmatprep.subr.bf16.mxu0 0
    %2137 = vmatpush1.bf16.msra.mxu0 0
    %2138 = vmatprep.subr.bf16.mxu0 0
    %2139 = vmatpush1.bf16.msra.mxu0 0
    %2140 = vmatprep.subr.bf16.mxu0 0
    %2141 = vmatpush1.bf16.msra.mxu0 0
    %2142 = vmatprep.subr.bf16.mxu0 0
    %2143 = vmatpush1.bf16.msra.mxu0 0
    %2144 = vmatprep.subr.bf16.mxu0 0
    %2145 = vmatpush1.bf16.msra.mxu0 0
    %2146 = vmatprep.mubr.bf16.mxu0 0
    %2147 = vmatmul.mubr.bf16.gmra.mrb[0].mxu0 %v2109
    %v2148 = vpop.f32.mrb[0].mxu0
    %v2149 = vadd.f32 %v2094, %v2148
    %v2150 = vpop.f32.mrb[0].mxu0
    %v2151 = vpop.f32.mrb[0].mxu0
    %v2152 = vadd.f32 %v2094, %v2151
    %v2153 = vpop.f32.mrb[0].mxu0
    %2154 = vmatprep.mubr.bf16.mxu0 0
    %2155 = vmatmul.mubr.bf16.gmra.mrb[0].mxu0 %v2112
    %v2156 = vpop.f32.mrb[0].mxu0
    %v2157 = vadd.f32 %v2094, %v2156
    %v2158 = vpop.f32.mrb[0].mxu0
    %v2159 = vpop.f32.mrb[0].mxu0
    %v2160 = vadd.f32 %v2094, %v2159
    %v2161 = vpop.f32.mrb[0].mxu0
    %2162 = vdwg.mxu0
    %v2163 = vld [vmem:[#allocation17] sm:$0xf]
    %v2164 = vld [vmem:[#allocation17 + $0x4] sm:$0xf]
    %v2165 = vld [vmem:[#allocation17 + $0x8] sm:$0xf]
    %v2166 = vld [vmem:[#allocation17 + $0xc] sm:$0xf]
    %v2167 = vld [vmem:[#allocation22] sm:$0x1]
    %v2169 = vlaneseq
    %v2170 = vshrl.u32 %v2169, 7
    %v2171 = vsub.s32 0, %v2170
    %v2172 = vrot.slane %v2167, %v2171
    %v2178 = vunpack.c.l.b16 %v2163
    %v2179 = vunpack.c.l.b16 %v2164
    %v2180 = vunpack.c.l.b16 %v2165
    %v2181 = vunpack.c.l.b16 %v2166
    %v2182 = vpack.c.b16 %v2179, %v2178
    %v2183 = vpack.c.b16 %v2181, %v2180
    %2186 = vmatprep.subr.bf16.mxu0 0
    %2187 = vmatpush1.bf16.msra.mxu0 %v2182
    %2188 = vmatprep.subr.bf16.mxu0 0
    %2189 = vmatpush1.bf16.msra.mxu0 %v2183
    %2190 = vmatprep.subr.bf16.mxu0 0
    %2191 = vmatpush1.bf16.msra.mxu0 0
    %2192 = vmatprep.subr.bf16.mxu0 0
    %2193 = vmatpush1.bf16.msra.mxu0 0
    %2194 = vmatprep.subr.bf16.mxu0 0
    %2195 = vmatpush1.bf16.msra.mxu0 0
    %2196 = vmatprep.subr.bf16.mxu0 0
    %2197 = vmatpush1.bf16.msra.mxu0 0
    %2198 = vmatprep.subr.bf16.mxu0 0
    %2199 = vmatpush1.bf16.msra.mxu0 0
    %2200 = vmatprep.subr.bf16.mxu0 0
    %2201 = vmatpush1.bf16.msra.mxu0 0
    %2202 = vmatprep.subr.bf16.mxu0 0
    %2203 = vmatpush1.bf16.msra.mxu0 0
    %2204 = vmatprep.subr.bf16.mxu0 0
    %2205 = vmatpush1.bf16.msra.mxu0 0
    %2206 = vmatprep.subr.bf16.mxu0 0
    %2207 = vmatpush1.bf16.msra.mxu0 0
    %2208 = vmatprep.subr.bf16.mxu0 0
    %2209 = vmatpush1.bf16.msra.mxu0 0
    %2210 = vmatprep.subr.bf16.mxu0 0
    %2211 = vmatpush1.bf16.msra.mxu0 0
    %2212 = vmatprep.subr.bf16.mxu0 0
    %2213 = vmatpush1.bf16.msra.mxu0 0
    %2214 = vmatprep.subr.bf16.mxu0 0
    %2215 = vmatpush1.bf16.msra.mxu0 0
    %2216 = vmatprep.subr.bf16.mxu0 0
    %2217 = vmatpush1.bf16.msra.mxu0 0
    %2218 = vmatprep.mubr.bf16.mxu0 0
    %2219 = vmatmul.mubr.bf16.gmra.mrb[0].mxu0 %v2109
    %v2220 = vpop.f32.mrb[0].mxu0
    %v2221 = vadd.f32 %v2172, %v2220
    %v2222 = vpop.f32.mrb[0].mxu0
    %v2223 = vpop.f32.mrb[0].mxu0
    %v2224 = vadd.f32 %v2172, %v2223
    %v2225 = vpop.f32.mrb[0].mxu0
    %2226 = vmatprep.mubr.bf16.mxu0 0
    %2227 = vmatmul.mubr.bf16.gmra.mrb[0].mxu0 %v2112
    %v2228 = vpop.f32.mrb[0].mxu0
    %v2229 = vadd.f32 %v2172, %v2228
    %v2230 = vpop.f32.mrb[0].mxu0
    %v2231 = vpop.f32.mrb[0].mxu0
    %v2232 = vadd.f32 %v2172, %v2231
    %v2233 = vpop.f32.mrb[0].mxu0
    %2234 = vdwg.mxu0
    %2237 = vrot.lane.b32.xlu0 %v2077, 120
    %v2238 = vpop.permute.xlu0 %2237
    %2239 = vrot.lane.b32.xlu0 %v2080, 120
    %v2240 = vpop.permute.xlu0 %2239
    %2243 = vrot.lane.b32.xlu0 %v2077, 112
    %v2244 = vpop.permute.xlu0 %2243
    %2245 = vrot.lane.b32.xlu0 %v2080, 112
    %v2246 = vpop.permute.xlu0 %2245
    %2249 = vrot.lane.b32.xlu0 %v2077, 104
    %v2250 = vpop.permute.xlu0 %2249
    %2251 = vrot.lane.b32.xlu0 %v2080, 104
    %v2252 = vpop.permute.xlu0 %2251
    %v2255 = vcombine.low %v2077, %v2244
    %v2256 = vcombine.high %v2077, %v2244
    %v2258 = vunpack.c.l.s4 1983009808
    %v2259 = vunpack.c.0.s8 %v2258
    %v2260 = vlaneseq
    %v2261 = vshrl.u32 %v2260, 7
    %v2262 = vsub.s32 %v2259, %v2261
    %v2263 = vrot.slane %v2255, %v2262
    %v2265 = vunpack.c.l.s4 1983009808
    %v2266 = vunpack.c.0.s8 %v2265
    %v2267 = vlaneseq
    %v2268 = vshrl.u32 %v2267, 7
    %v2269 = vsub.s32 %v2266, %v2268
    %v2270 = vrot.slane %v2256, %v2269
    %v2271 = vcombine.low %v2238, %v2250
    %v2272 = vcombine.high %v2238, %v2250
    %v2274 = vunpack.c.l.s4 1983009808
    %v2275 = vunpack.c.0.s8 %v2274
    %v2276 = vlaneseq
    %v2277 = vshrl.u32 %v2276, 7
    %v2278 = vsub.s32 %v2275, %v2277
    %v2279 = vrot.slane %v2271, %v2278
    %v2281 = vunpack.c.l.s4 1983009808
    %v2282 = vunpack.c.0.s8 %v2281
    %v2283 = vlaneseq
    %v2284 = vshrl.u32 %v2283, 7
    %v2285 = vsub.s32 %v2282, %v2284
    %v2286 = vrot.slane %v2272, %v2285
    %v2287 = vcombine.low %v2263, %v2279
    %v2288 = vcombine.high %v2263, %v2279
    %v2290 = vunpack.c.l.s4 1934713408
    %v2291 = vunpack.c.0.s8 %v2290
    %v2292 = vlaneseq
    %v2293 = vshrl.u32 %v2292, 7
    %v2294 = vsub.s32 %v2291, %v2293
    %v2295 = vrot.slane %v2287, %v2294
    %v2297 = vunpack.c.l.s4 1934713408
    %v2298 = vunpack.c.0.s8 %v2297
    %v2299 = vlaneseq
    %v2300 = vshrl.u32 %v2299, 7
    %v2301 = vsub.s32 %v2298, %v2300
    %v2302 = vrot.slane %v2288, %v2301
    %v2303 = vcombine.low %v2270, %v2286
    %v2304 = vcombine.high %v2270, %v2286
    %v2306 = vunpack.c.l.s4 1934713408
    %v2307 = vunpack.c.0.s8 %v2306
    %v2308 = vlaneseq
    %v2309 = vshrl.u32 %v2308, 7
    %v2310 = vsub.s32 %v2307, %v2309
    %v2311 = vrot.slane %v2303, %v2310
    %v2313 = vunpack.c.l.s4 1934713408
    %v2314 = vunpack.c.0.s8 %v2313
    %v2315 = vlaneseq
    %v2316 = vshrl.u32 %v2315, 7
    %v2317 = vsub.s32 %v2314, %v2316
    %v2318 = vrot.slane %v2304, %v2317
    %v2319 = vcombine.high %v2295, 0.0
    %v2320 = vcombine.high %v2302, 0.0
    %v2321 = vcombine.high %v2311, 0.0
    %v2322 = vcombine.high %v2318, 0.0
    %v2323 = vcombine.low %v2080, %v2246
    %v2324 = vcombine.high %v2080, %v2246
    %v2326 = vunpack.c.l.s4 1983009808
    %v2327 = vunpack.c.0.s8 %v2326
    %v2328 = vlaneseq
    %v2329 = vshrl.u32 %v2328, 7
    %v2330 = vsub.s32 %v2327, %v2329
    %v2331 = vrot.slane %v2323, %v2330
    %v2333 = vunpack.c.l.s4 1983009808
    %v2334 = vunpack.c.0.s8 %v2333
    %v2335 = vlaneseq
    %v2336 = vshrl.u32 %v2335, 7
    %v2337 = vsub.s32 %v2334, %v2336
    %v2338 = vrot.slane %v2324, %v2337
    %v2339 = vcombine.low %v2240, %v2252
    %v2340 = vcombine.high %v2240, %v2252
    %v2342 = vunpack.c.l.s4 1983009808
    %v2343 = vunpack.c.0.s8 %v2342
    %v2344 = vlaneseq
    %v2345 = vshrl.u32 %v2344, 7
    %v2346 = vsub.s32 %v2343, %v2345
    %v2347 = vrot.slane %v2339, %v2346
    %v2349 = vunpack.c.l.s4 1983009808
    %v2350 = vunpack.c.0.s8 %v2349
    %v2351 = vlaneseq
    %v2352 = vshrl.u32 %v2351, 7
    %v2353 = vsub.s32 %v2350, %v2352
    %v2354 = vrot.slane %v2340, %v2353
    %v2355 = vcombine.low %v2331, %v2347
    %v2356 = vcombine.high %v2331, %v2347
    %v2358 = vunpack.c.l.s4 1934713408
    %v2359 = vunpack.c.0.s8 %v2358
    %v2360 = vlaneseq
    %v2361 = vshrl.u32 %v2360, 7
    %v2362 = vsub.s32 %v2359, %v2361
    %v2363 = vrot.slane %v2355, %v2362
    %v2365 = vunpack.c.l.s4 1934713408
    %v2366 = vunpack.c.0.s8 %v2365
    %v2367 = vlaneseq
    %v2368 = vshrl.u32 %v2367, 7
    %v2369 = vsub.s32 %v2366, %v2368
    %v2370 = vrot.slane %v2356, %v2369
    %v2371 = vcombine.low %v2338, %v2354
    %v2372 = vcombine.high %v2338, %v2354
    %v2374 = vunpack.c.l.s4 1934713408
    %v2375 = vunpack.c.0.s8 %v2374
    %v2376 = vlaneseq
    %v2377 = vshrl.u32 %v2376, 7
    %v2378 = vsub.s32 %v2375, %v2377
    %v2379 = vrot.slane %v2371, %v2378
    %v2381 = vunpack.c.l.s4 1934713408
    %v2382 = vunpack.c.0.s8 %v2381
    %v2383 = vlaneseq
    %v2384 = vshrl.u32 %v2383, 7
    %v2385 = vsub.s32 %v2382, %v2384
    %v2386 = vrot.slane %v2372, %v2385
    %v2387 = vcombine.high %v2363, 0.0
    %v2388 = vcombine.high %v2370, 0.0
    %v2389 = vcombine.high %v2379, 0.0
    %v2390 = vcombine.high %v2386, 0.0
    %v2391 = vcombine.low %v2295, %v2302
    %v2393 = vunpack.c.l.s4 1983009808
    %v2394 = vunpack.c.0.s8 %v2393
    %v2395 = vlaneseq
    %v2396 = vshrl.u32 %v2395, 7
    %v2397 = vsub.s32 %v2394, %v2396
    %v2398 = vrot.slane %v2391, %v2397
    %v2399 = vcombine.low %v2319, %v2320
    %v2401 = vunpack.c.l.s4 1983009808
    %v2402 = vunpack.c.0.s8 %v2401
    %v2403 = vlaneseq
    %v2404 = vshrl.u32 %v2403, 7
    %v2405 = vsub.s32 %v2402, %v2404
    %v2406 = vrot.slane %v2399, %v2405
    %v2407 = vcombine.low %v2311, %v2318
    %v2409 = vunpack.c.l.s4 1983009808
    %v2410 = vunpack.c.0.s8 %v2409
    %v2411 = vlaneseq
    %v2412 = vshrl.u32 %v2411, 7
    %v2413 = vsub.s32 %v2410, %v2412
    %v2414 = vrot.slane %v2407, %v2413
    %v2415 = vcombine.low %v2321, %v2322
    %v2417 = vunpack.c.l.s4 1983009808
    %v2418 = vunpack.c.0.s8 %v2417
    %v2419 = vlaneseq
    %v2420 = vshrl.u32 %v2419, 7
    %v2421 = vsub.s32 %v2418, %v2420
    %v2422 = vrot.slane %v2415, %v2421
    %v2423 = vcombine.low %v2398, %v2406
    %v2424 = vcombine.high %v2398, %v2406
    %v2426 = vunpack.c.l.s4 1934713408
    %v2427 = vunpack.c.0.s8 %v2426
    %v2428 = vlaneseq
    %v2429 = vshrl.u32 %v2428, 7
    %v2430 = vsub.s32 %v2427, %v2429
    %v2431 = vrot.slane %v2423, %v2430
    %v2433 = vunpack.c.l.s4 1934713408
    %v2434 = vunpack.c.0.s8 %v2433
    %v2435 = vlaneseq
    %v2436 = vshrl.u32 %v2435, 7
    %v2437 = vsub.s32 %v2434, %v2436
    %v2438 = vrot.slane %v2424, %v2437
    %v2439 = vcombine.low %v2414, %v2422
    %v2440 = vcombine.high %v2414, %v2422
    %v2442 = vunpack.c.l.s4 1934713408
    %v2443 = vunpack.c.0.s8 %v2442
    %v2444 = vlaneseq
    %v2445 = vshrl.u32 %v2444, 7
    %v2446 = vsub.s32 %v2443, %v2445
    %v2447 = vrot.slane %v2439, %v2446
    %v2449 = vunpack.c.l.s4 1934713408
    %v2450 = vunpack.c.0.s8 %v2449
    %v2451 = vlaneseq
    %v2452 = vshrl.u32 %v2451, 7
    %v2453 = vsub.s32 %v2450, %v2452
    %v2454 = vrot.slane %v2440, %v2453
    %v2455 = vcombine.low %v2431, %v2447
    %v2456 = vcombine.high %v2431, %v2447
    %v2457 = vcombine.low %v2438, %v2454
    %v2458 = vcombine.high %v2438, %v2454
    %v2459 = vcombine.low %v2363, %v2370
    %v2461 = vunpack.c.l.s4 1983009808
    %v2462 = vunpack.c.0.s8 %v2461
    %v2463 = vlaneseq
    %v2464 = vshrl.u32 %v2463, 7
    %v2465 = vsub.s32 %v2462, %v2464
    %v2466 = vrot.slane %v2459, %v2465
    %v2467 = vcombine.low %v2387, %v2388
    %v2469 = vunpack.c.l.s4 1983009808
    %v2470 = vunpack.c.0.s8 %v2469
    %v2471 = vlaneseq
    %v2472 = vshrl.u32 %v2471, 7
    %v2473 = vsub.s32 %v2470, %v2472
    %v2474 = vrot.slane %v2467, %v2473
    %v2475 = vcombine.low %v2379, %v2386
    %v2477 = vunpack.c.l.s4 1983009808
    %v2478 = vunpack.c.0.s8 %v2477
    %v2479 = vlaneseq
    %v2480 = vshrl.u32 %v2479, 7
    %v2481 = vsub.s32 %v2478, %v2480
    %v2482 = vrot.slane %v2475, %v2481
    %v2483 = vcombine.low %v2389, %v2390
    %v2485 = vunpack.c.l.s4 1983009808
    %v2486 = vunpack.c.0.s8 %v2485
    %v2487 = vlaneseq
    %v2488 = vshrl.u32 %v2487, 7
    %v2489 = vsub.s32 %v2486, %v2488
    %v2490 = vrot.slane %v2483, %v2489
    %v2491 = vcombine.low %v2466, %v2474
    %v2492 = vcombine.high %v2466, %v2474
    %v2494 = vunpack.c.l.s4 1934713408
    %v2495 = vunpack.c.0.s8 %v2494
    %v2496 = vlaneseq
    %v2497 = vshrl.u32 %v2496, 7
    %v2498 = vsub.s32 %v2495, %v2497
    %v2499 = vrot.slane %v2491, %v2498
    %v2501 = vunpack.c.l.s4 1934713408
    %v2502 = vunpack.c.0.s8 %v2501
    %v2503 = vlaneseq
    %v2504 = vshrl.u32 %v2503, 7
    %v2505 = vsub.s32 %v2502, %v2504
    %v2506 = vrot.slane %v2492, %v2505
    %v2507 = vcombine.low %v2482, %v2490
    %v2508 = vcombine.high %v2482, %v2490
    %v2510 = vunpack.c.l.s4 1934713408
    %v2511 = vunpack.c.0.s8 %v2510
    %v2512 = vlaneseq
    %v2513 = vshrl.u32 %v2512, 7
    %v2514 = vsub.s32 %v2511, %v2513
    %v2515 = vrot.slane %v2507, %v2514
    %v2517 = vunpack.c.l.s4 1934713408
    %v2518 = vunpack.c.0.s8 %v2517
    %v2519 = vlaneseq
    %v2520 = vshrl.u32 %v2519, 7
    %v2521 = vsub.s32 %v2518, %v2520
    %v2522 = vrot.slane %v2508, %v2521
    %v2523 = vcombine.low %v2499, %v2515
    %v2524 = vcombine.high %v2499, %v2515
    %v2525 = vcombine.low %v2506, %v2522
    %v2526 = vcombine.high %v2506, %v2522
    %2531 = vrot.lane.b32.xlu0 %v2149, 120
    %v2532 = vpop.permute.xlu0 %2531
    %2533 = vrot.lane.b32.xlu0 %v2152, 120
    %v2534 = vpop.permute.xlu0 %2533
    %2535 = vrot.lane.b32.xlu0 %v2157, 120
    %v2536 = vpop.permute.xlu0 %2535
    %2537 = vrot.lane.b32.xlu0 %v2160, 120
    %v2538 = vpop.permute.xlu0 %2537
    %2543 = vrot.lane.b32.xlu0 %v2149, 112
    %v2544 = vpop.permute.xlu0 %2543
    %2545 = vrot.lane.b32.xlu0 %v2152, 112
    %v2546 = vpop.permute.xlu0 %2545
    %2547 = vrot.lane.b32.xlu0 %v2157, 112
    %v2548 = vpop.permute.xlu0 %2547
    %2549 = vrot.lane.b32.xlu0 %v2160, 112
    %v2550 = vpop.permute.xlu0 %2549
    %2555 = vrot.lane.b32.xlu0 %v2149, 104
    %v2556 = vpop.permute.xlu0 %2555
    %2557 = vrot.lane.b32.xlu0 %v2152, 104
    %v2558 = vpop.permute.xlu0 %2557
    %2559 = vrot.lane.b32.xlu0 %v2157, 104
    %v2560 = vpop.permute.xlu0 %2559
    %2561 = vrot.lane.b32.xlu0 %v2160, 104
    %v2562 = vpop.permute.xlu0 %2561
    %v2567 = vcombine.low %v2149, %v2544
    %v2568 = vcombine.high %v2149, %v2544
    %v2570 = vunpack.c.l.s4 1983009808
    %v2571 = vunpack.c.0.s8 %v2570
    %v2572 = vlaneseq
    %v2573 = vshrl.u32 %v2572, 7
    %v2574 = vsub.s32 %v2571, %v2573
    %v2575 = vrot.slane %v2567, %v2574
    %v2577 = vunpack.c.l.s4 1983009808
    %v2578 = vunpack.c.0.s8 %v2577
    %v2579 = vlaneseq
    %v2580 = vshrl.u32 %v2579, 7
    %v2581 = vsub.s32 %v2578, %v2580
    %v2582 = vrot.slane %v2568, %v2581
    %v2583 = vcombine.low %v2532, %v2556
    %v2584 = vcombine.high %v2532, %v2556
    %v2586 = vunpack.c.l.s4 1983009808
    %v2587 = vunpack.c.0.s8 %v2586
    %v2588 = vlaneseq
    %v2589 = vshrl.u32 %v2588, 7
    %v2590 = vsub.s32 %v2587, %v2589
    %v2591 = vrot.slane %v2583, %v2590
    %v2593 = vunpack.c.l.s4 1983009808
    %v2594 = vunpack.c.0.s8 %v2593
    %v2595 = vlaneseq
    %v2596 = vshrl.u32 %v2595, 7
    %v2597 = vsub.s32 %v2594, %v2596
    %v2598 = vrot.slane %v2584, %v2597
    %v2599 = vcombine.low %v2575, %v2591
    %v2600 = vcombine.high %v2575, %v2591
    %v2602 = vunpack.c.l.s4 1934713408
    %v2603 = vunpack.c.0.s8 %v2602
    %v2604 = vlaneseq
    %v2605 = vshrl.u32 %v2604, 7
    %v2606 = vsub.s32 %v2603, %v2605
    %v2607 = vrot.slane %v2599, %v2606
    %v2609 = vunpack.c.l.s4 1934713408
    %v2610 = vunpack.c.0.s8 %v2609
    %v2611 = vlaneseq
    %v2612 = vshrl.u32 %v2611, 7
    %v2613 = vsub.s32 %v2610, %v2612
    %v2614 = vrot.slane %v2600, %v2613
    %v2615 = vcombine.low %v2582, %v2598
    %v2616 = vcombine.high %v2582, %v2598
    %v2618 = vunpack.c.l.s4 1934713408
    %v2619 = vunpack.c.0.s8 %v2618
    %v2620 = vlaneseq
    %v2621 = vshrl.u32 %v2620, 7
    %v2622 = vsub.s32 %v2619, %v2621
    %v2623 = vrot.slane %v2615, %v2622
    %v2625 = vunpack.c.l.s4 1934713408
    %v2626 = vunpack.c.0.s8 %v2625
    %v2627 = vlaneseq
    %v2628 = vshrl.u32 %v2627, 7
    %v2629 = vsub.s32 %v2626, %v2628
    %v2630 = vrot.slane %v2616, %v2629
    %v2631 = vcombine.high %v2607, 0.0
    %v2632 = vcombine.high %v2614, 0.0
    %v2633 = vcombine.high %v2623, 0.0
    %v2634 = vcombine.high %v2630, 0.0
    %v2635 = vcombine.low %v2152, %v2546
    %v2636 = vcombine.high %v2152, %v2546
    %v2638 = vunpack.c.l.s4 1983009808
    %v2639 = vunpack.c.0.s8 %v2638
    %v2640 = vlaneseq
    %v2641 = vshrl.u32 %v2640, 7
    %v2642 = vsub.s32 %v2639, %v2641
    %v2643 = vrot.slane %v2635, %v2642
    %v2645 = vunpack.c.l.s4 1983009808
    %v2646 = vunpack.c.0.s8 %v2645
    %v2647 = vlaneseq
    %v2648 = vshrl.u32 %v2647, 7
    %v2649 = vsub.s32 %v2646, %v2648
    %v2650 = vrot.slane %v2636, %v2649
    %v2651 = vcombine.low %v2534, %v2558
    %v2652 = vcombine.high %v2534, %v2558
    %v2654 = vunpack.c.l.s4 1983009808
    %v2655 = vunpack.c.0.s8 %v2654
    %v2656 = vlaneseq
    %v2657 = vshrl.u32 %v2656, 7
    %v2658 = vsub.s32 %v2655, %v2657
    %v2659 = vrot.slane %v2651, %v2658
    %v2661 = vunpack.c.l.s4 1983009808
    %v2662 = vunpack.c.0.s8 %v2661
    %v2663 = vlaneseq
    %v2664 = vshrl.u32 %v2663, 7
    %v2665 = vsub.s32 %v2662, %v2664
    %v2666 = vrot.slane %v2652, %v2665
    %v2667 = vcombine.low %v2643, %v2659
    %v2668 = vcombine.high %v2643, %v2659
    %v2670 = vunpack.c.l.s4 1934713408
    %v2671 = vunpack.c.0.s8 %v2670
    %v2672 = vlaneseq
    %v2673 = vshrl.u32 %v2672, 7
    %v2674 = vsub.s32 %v2671, %v2673
    %v2675 = vrot.slane %v2667, %v2674
    %v2677 = vunpack.c.l.s4 1934713408
    %v2678 = vunpack.c.0.s8 %v2677
    %v2679 = vlaneseq
    %v2680 = vshrl.u32 %v2679, 7
    %v2681 = vsub.s32 %v2678, %v2680
    %v2682 = vrot.slane %v2668, %v2681
    %v2683 = vcombine.low %v2650, %v2666
    %v2684 = vcombine.high %v2650, %v2666
    %v2686 = vunpack.c.l.s4 1934713408
    %v2687 = vunpack.c.0.s8 %v2686
    %v2688 = vlaneseq
    %v2689 = vshrl.u32 %v2688, 7
    %v2690 = vsub.s32 %v2687, %v2689
    %v2691 = vrot.slane %v2683, %v2690
    %v2693 = vunpack.c.l.s4 1934713408
    %v2694 = vunpack.c.0.s8 %v2693
    %v2695 = vlaneseq
    %v2696 = vshrl.u32 %v2695, 7
    %v2697 = vsub.s32 %v2694, %v2696
    %v2698 = vrot.slane %v2684, %v2697
    %v2699 = vcombine.high %v2675, 0.0
    %v2700 = vcombine.high %v2682, 0.0
    %v2701 = vcombine.high %v2691, 0.0
    %v2702 = vcombine.high %v2698, 0.0
    %v2703 = vcombine.low %v2157, %v2548
    %v2704 = vcombine.high %v2157, %v2548
    %v2706 = vunpack.c.l.s4 1983009808
    %v2707 = vunpack.c.0.s8 %v2706
    %v2708 = vlaneseq
    %v2709 = vshrl.u32 %v2708, 7
    %v2710 = vsub.s32 %v2707, %v2709
    %v2711 = vrot.slane %v2703, %v2710
    %v2713 = vunpack.c.l.s4 1983009808
    %v2714 = vunpack.c.0.s8 %v2713
    %v2715 = vlaneseq
    %v2716 = vshrl.u32 %v2715, 7
    %v2717 = vsub.s32 %v2714, %v2716
    %v2718 = vrot.slane %v2704, %v2717
    %v2719 = vcombine.low %v2536, %v2560
    %v2720 = vcombine.high %v2536, %v2560
    %v2722 = vunpack.c.l.s4 1983009808
    %v2723 = vunpack.c.0.s8 %v2722
    %v2724 = vlaneseq
    %v2725 = vshrl.u32 %v2724, 7
    %v2726 = vsub.s32 %v2723, %v2725
    %v2727 = vrot.slane %v2719, %v2726
    %v2729 = vunpack.c.l.s4 1983009808
    %v2730 = vunpack.c.0.s8 %v2729
    %v2731 = vlaneseq
    %v2732 = vshrl.u32 %v2731, 7
    %v2733 = vsub.s32 %v2730, %v2732
    %v2734 = vrot.slane %v2720, %v2733
    %v2735 = vcombine.low %v2711, %v2727
    %v2736 = vcombine.high %v2711, %v2727
    %v2738 = vunpack.c.l.s4 1934713408
    %v2739 = vunpack.c.0.s8 %v2738
    %v2740 = vlaneseq
    %v2741 = vshrl.u32 %v2740, 7
    %v2742 = vsub.s32 %v2739, %v2741
    %v2743 = vrot.slane %v2735, %v2742
    %v2745 = vunpack.c.l.s4 1934713408
    %v2746 = vunpack.c.0.s8 %v2745
    %v2747 = vlaneseq
    %v2748 = vshrl.u32 %v2747, 7
    %v2749 = vsub.s32 %v2746, %v2748
    %v2750 = vrot.slane %v2736, %v2749
    %v2751 = vcombine.low %v2718, %v2734
    %v2752 = vcombine.high %v2718, %v2734
    %v2754 = vunpack.c.l.s4 1934713408
    %v2755 = vunpack.c.0.s8 %v2754
    %v2756 = vlaneseq
    %v2757 = vshrl.u32 %v2756, 7
    %v2758 = vsub.s32 %v2755, %v2757
    %v2759 = vrot.slane %v2751, %v2758
    %v2761 = vunpack.c.l.s4 1934713408
    %v2762 = vunpack.c.0.s8 %v2761
    %v2763 = vlaneseq
    %v2764 = vshrl.u32 %v2763, 7
    %v2765 = vsub.s32 %v2762, %v2764
    %v2766 = vrot.slane %v2752, %v2765
    %v2767 = vcombine.high %v2743, 0.0
    %v2768 = vcombine.high %v2750, 0.0
    %v2769 = vcombine.high %v2759, 0.0
    %v2770 = vcombine.high %v2766, 0.0
    %v2771 = vcombine.low %v2160, %v2550
    %v2772 = vcombine.high %v2160, %v2550
    %v2774 = vunpack.c.l.s4 1983009808
    %v2775 = vunpack.c.0.s8 %v2774
    %v2776 = vlaneseq
    %v2777 = vshrl.u32 %v2776, 7
    %v2778 = vsub.s32 %v2775, %v2777
    %v2779 = vrot.slane %v2771, %v2778
    %v2781 = vunpack.c.l.s4 1983009808
    %v2782 = vunpack.c.0.s8 %v2781
    %v2783 = vlaneseq
    %v2784 = vshrl.u32 %v2783, 7
    %v2785 = vsub.s32 %v2782, %v2784
    %v2786 = vrot.slane %v2772, %v2785
    %v2787 = vcombine.low %v2538, %v2562
    %v2788 = vcombine.high %v2538, %v2562
    %v2790 = vunpack.c.l.s4 1983009808
    %v2791 = vunpack.c.0.s8 %v2790
    %v2792 = vlaneseq
    %v2793 = vshrl.u32 %v2792, 7
    %v2794 = vsub.s32 %v2791, %v2793
    %v2795 = vrot.slane %v2787, %v2794
    %v2797 = vunpack.c.l.s4 1983009808
    %v2798 = vunpack.c.0.s8 %v2797
    %v2799 = vlaneseq
    %v2800 = vshrl.u32 %v2799, 7
    %v2801 = vsub.s32 %v2798, %v2800
    %v2802 = vrot.slane %v2788, %v2801
    %v2803 = vcombine.low %v2779, %v2795
    %v2804 = vcombine.high %v2779, %v2795
    %v2806 = vunpack.c.l.s4 1934713408
    %v2807 = vunpack.c.0.s8 %v2806
    %v2808 = vlaneseq
    %v2809 = vshrl.u32 %v2808, 7
    %v2810 = vsub.s32 %v2807, %v2809
    %v2811 = vrot.slane %v2803, %v2810
    %v2813 = vunpack.c.l.s4 1934713408
    %v2814 = vunpack.c.0.s8 %v2813
    %v2815 = vlaneseq
    %v2816 = vshrl.u32 %v2815, 7
    %v2817 = vsub.s32 %v2814, %v2816
    %v2818 = vrot.slane %v2804, %v2817
    %v2819 = vcombine.low %v2786, %v2802
    %v2820 = vcombine.high %v2786, %v2802
    %v2822 = vunpack.c.l.s4 1934713408
    %v2823 = vunpack.c.0.s8 %v2822
    %v2824 = vlaneseq
    %v2825 = vshrl.u32 %v2824, 7
    %v2826 = vsub.s32 %v2823, %v2825
    %v2827 = vrot.slane %v2819, %v2826
    %v2829 = vunpack.c.l.s4 1934713408
    %v2830 = vunpack.c.0.s8 %v2829
    %v2831 = vlaneseq
    %v2832 = vshrl.u32 %v2831, 7
    %v2833 = vsub.s32 %v2830, %v2832
    %v2834 = vrot.slane %v2820, %v2833
    %v2835 = vcombine.high %v2811, 0.0
    %v2836 = vcombine.high %v2818, 0.0
    %v2837 = vcombine.high %v2827, 0.0
    %v2838 = vcombine.high %v2834, 0.0
    %v2839 = vcombine.low %v2607, %v2614
    %v2841 = vunpack.c.l.s4 1983009808
    %v2842 = vunpack.c.0.s8 %v2841
    %v2843 = vlaneseq
    %v2844 = vshrl.u32 %v2843, 7
    %v2845 = vsub.s32 %v2842, %v2844
    %v2846 = vrot.slane %v2839, %v2845
    %v2847 = vcombine.low %v2631, %v2632
    %v2849 = vunpack.c.l.s4 1983009808
    %v2850 = vunpack.c.0.s8 %v2849
    %v2851 = vlaneseq
    %v2852 = vshrl.u32 %v2851, 7
    %v2853 = vsub.s32 %v2850, %v2852
    %v2854 = vrot.slane %v2847, %v2853
    %v2855 = vcombine.low %v2623, %v2630
    %v2857 = vunpack.c.l.s4 1983009808
    %v2858 = vunpack.c.0.s8 %v2857
    %v2859 = vlaneseq
    %v2860 = vshrl.u32 %v2859, 7
    %v2861 = vsub.s32 %v2858, %v2860
    %v2862 = vrot.slane %v2855, %v2861
    %v2863 = vcombine.low %v2633, %v2634
    %v2865 = vunpack.c.l.s4 1983009808
    %v2866 = vunpack.c.0.s8 %v2865
    %v2867 = vlaneseq
    %v2868 = vshrl.u32 %v2867, 7
    %v2869 = vsub.s32 %v2866, %v2868
    %v2870 = vrot.slane %v2863, %v2869
    %v2871 = vcombine.low %v2846, %v2854
    %v2872 = vcombine.high %v2846, %v2854
    %v2874 = vunpack.c.l.s4 1934713408
    %v2875 = vunpack.c.0.s8 %v2874
    %v2876 = vlaneseq
    %v2877 = vshrl.u32 %v2876, 7
    %v2878 = vsub.s32 %v2875, %v2877
    %v2879 = vrot.slane %v2871, %v2878
    %v2881 = vunpack.c.l.s4 1934713408
    %v2882 = vunpack.c.0.s8 %v2881
    %v2883 = vlaneseq
    %v2884 = vshrl.u32 %v2883, 7
    %v2885 = vsub.s32 %v2882, %v2884
    %v2886 = vrot.slane %v2872, %v2885
    %v2887 = vcombine.low %v2862, %v2870
    %v2888 = vcombine.high %v2862, %v2870
    %v2890 = vunpack.c.l.s4 1934713408
    %v2891 = vunpack.c.0.s8 %v2890
    %v2892 = vlaneseq
    %v2893 = vshrl.u32 %v2892, 7
    %v2894 = vsub.s32 %v2891, %v2893
    %v2895 = vrot.slane %v2887, %v2894
    %v2897 = vunpack.c.l.s4 1934713408
    %v2898 = vunpack.c.0.s8 %v2897
    %v2899 = vlaneseq
    %v2900 = vshrl.u32 %v2899, 7
    %v2901 = vsub.s32 %v2898, %v2900
    %v2902 = vrot.slane %v2888, %v2901
    %v2903 = vcombine.low %v2879, %v2895
    %v2904 = vcombine.high %v2879, %v2895
    %v2905 = vcombine.low %v2886, %v2902
    %v2906 = vcombine.high %v2886, %v2902
    %v2907 = vcombine.low %v2675, %v2682
    %v2909 = vunpack.c.l.s4 1983009808
    %v2910 = vunpack.c.0.s8 %v2909
    %v2911 = vlaneseq
    %v2912 = vshrl.u32 %v2911, 7
    %v2913 = vsub.s32 %v2910, %v2912
    %v2914 = vrot.slane %v2907, %v2913
    %v2915 = vcombine.low %v2699, %v2700
    %v2917 = vunpack.c.l.s4 1983009808
    %v2918 = vunpack.c.0.s8 %v2917
    %v2919 = vlaneseq
    %v2920 = vshrl.u32 %v2919, 7
    %v2921 = vsub.s32 %v2918, %v2920
    %v2922 = vrot.slane %v2915, %v2921
    %v2923 = vcombine.low %v2691, %v2698
    %v2925 = vunpack.c.l.s4 1983009808
    %v2926 = vunpack.c.0.s8 %v2925
    %v2927 = vlaneseq
    %v2928 = vshrl.u32 %v2927, 7
    %v2929 = vsub.s32 %v2926, %v2928
    %v2930 = vrot.slane %v2923, %v2929
    %v2931 = vcombine.low %v2701, %v2702
    %v2933 = vunpack.c.l.s4 1983009808
    %v2934 = vunpack.c.0.s8 %v2933
    %v2935 = vlaneseq
    %v2936 = vshrl.u32 %v2935, 7
    %v2937 = vsub.s32 %v2934, %v2936
    %v2938 = vrot.slane %v2931, %v2937
    %v2939 = vcombine.low %v2914, %v2922
    %v2940 = vcombine.high %v2914, %v2922
    %v2942 = vunpack.c.l.s4 1934713408
    %v2943 = vunpack.c.0.s8 %v2942
    %v2944 = vlaneseq
    %v2945 = vshrl.u32 %v2944, 7
    %v2946 = vsub.s32 %v2943, %v2945
    %v2947 = vrot.slane %v2939, %v2946
    %v2949 = vunpack.c.l.s4 1934713408
    %v2950 = vunpack.c.0.s8 %v2949
    %v2951 = vlaneseq
    %v2952 = vshrl.u32 %v2951, 7
    %v2953 = vsub.s32 %v2950, %v2952
    %v2954 = vrot.slane %v2940, %v2953
    %v2955 = vcombine.low %v2930, %v2938
    %v2956 = vcombine.high %v2930, %v2938
    %v2958 = vunpack.c.l.s4 1934713408
    %v2959 = vunpack.c.0.s8 %v2958
    %v2960 = vlaneseq
    %v2961 = vshrl.u32 %v2960, 7
    %v2962 = vsub.s32 %v2959, %v2961
    %v2963 = vrot.slane %v2955, %v2962
    %v2965 = vunpack.c.l.s4 1934713408
    %v2966 = vunpack.c.0.s8 %v2965
    %v2967 = vlaneseq
    %v2968 = vshrl.u32 %v2967, 7
    %v2969 = vsub.s32 %v2966, %v2968
    %v2970 = vrot.slane %v2956, %v2969
    %v2971 = vcombine.low %v2947, %v2963
    %v2972 = vcombine.high %v2947, %v2963
    %v2973 = vcombine.low %v2954, %v2970
    %v2974 = vcombine.high %v2954, %v2970
    %v2975 = vcombine.low %v2743, %v2750
    %v2977 = vunpack.c.l.s4 1983009808
    %v2978 = vunpack.c.0.s8 %v2977
    %v2979 = vlaneseq
    %v2980 = vshrl.u32 %v2979, 7
    %v2981 = vsub.s32 %v2978, %v2980
    %v2982 = vrot.slane %v2975, %v2981
    %v2983 = vcombine.low %v2767, %v2768
    %v2985 = vunpack.c.l.s4 1983009808
    %v2986 = vunpack.c.0.s8 %v2985
    %v2987 = vlaneseq
    %v2988 = vshrl.u32 %v2987, 7
    %v2989 = vsub.s32 %v2986, %v2988
    %v2990 = vrot.slane %v2983, %v2989
    %v2991 = vcombine.low %v2759, %v2766
    %v2993 = vunpack.c.l.s4 1983009808
    %v2994 = vunpack.c.0.s8 %v2993
    %v2995 = vlaneseq
    %v2996 = vshrl.u32 %v2995, 7
    %v2997 = vsub.s32 %v2994, %v2996
    %v2998 = vrot.slane %v2991, %v2997
    %v2999 = vcombine.low %v2769, %v2770
    %v3001 = vunpack.c.l.s4 1983009808
    %v3002 = vunpack.c.0.s8 %v3001
    %v3003 = vlaneseq
    %v3004 = vshrl.u32 %v3003, 7
    %v3005 = vsub.s32 %v3002, %v3004
    %v3006 = vrot.slane %v2999, %v3005
    %v3007 = vcombine.low %v2982, %v2990
    %v3008 = vcombine.high %v2982, %v2990
    %v3010 = vunpack.c.l.s4 1934713408
    %v3011 = vunpack.c.0.s8 %v3010
    %v3012 = vlaneseq
    %v3013 = vshrl.u32 %v3012, 7
    %v3014 = vsub.s32 %v3011, %v3013
    %v3015 = vrot.slane %v3007, %v3014
    %v3017 = vunpack.c.l.s4 1934713408
    %v3018 = vunpack.c.0.s8 %v3017
    %v3019 = vlaneseq
    %v3020 = vshrl.u32 %v3019, 7
    %v3021 = vsub.s32 %v3018, %v3020
    %v3022 = vrot.slane %v3008, %v3021
    %v3023 = vcombine.low %v2998, %v3006
    %v3024 = vcombine.high %v2998, %v3006
    %v3026 = vunpack.c.l.s4 1934713408
    %v3027 = vunpack.c.0.s8 %v3026
    %v3028 = vlaneseq
    %v3029 = vshrl.u32 %v3028, 7
    %v3030 = vsub.s32 %v3027, %v3029
    %v3031 = vrot.slane %v3023, %v3030
    %v3033 = vunpack.c.l.s4 1934713408
    %v3034 = vunpack.c.0.s8 %v3033
    %v3035 = vlaneseq
    %v3036 = vshrl.u32 %v3035, 7
    %v3037 = vsub.s32 %v3034, %v3036
    %v3038 = vrot.slane %v3024, %v3037
    %v3039 = vcombine.low %v3015, %v3031
    %v3040 = vcombine.high %v3015, %v3031
    %v3041 = vcombine.low %v3022, %v3038
    %v3042 = vcombine.high %v3022, %v3038
    %v3043 = vcombine.low %v2811, %v2818
    %v3045 = vunpack.c.l.s4 1983009808
    %v3046 = vunpack.c.0.s8 %v3045
    %v3047 = vlaneseq
    %v3048 = vshrl.u32 %v3047, 7
    %v3049 = vsub.s32 %v3046, %v3048
    %v3050 = vrot.slane %v3043, %v3049
    %v3051 = vcombine.low %v2835, %v2836
    %v3053 = vunpack.c.l.s4 1983009808
    %v3054 = vunpack.c.0.s8 %v3053
    %v3055 = vlaneseq
    %v3056 = vshrl.u32 %v3055, 7
    %v3057 = vsub.s32 %v3054, %v3056
    %v3058 = vrot.slane %v3051, %v3057
    %v3059 = vcombine.low %v2827, %v2834
    %v3061 = vunpack.c.l.s4 1983009808
    %v3062 = vunpack.c.0.s8 %v3061
    %v3063 = vlaneseq
    %v3064 = vshrl.u32 %v3063, 7
    %v3065 = vsub.s32 %v3062, %v3064
    %v3066 = vrot.slane %v3059, %v3065
    %v3067 = vcombine.low %v2837, %v2838
    %v3069 = vunpack.c.l.s4 1983009808
    %v3070 = vunpack.c.0.s8 %v3069
    %v3071 = vlaneseq
    %v3072 = vshrl.u32 %v3071, 7
    %v3073 = vsub.s32 %v3070, %v3072
    %v3074 = vrot.slane %v3067, %v3073
    %v3075 = vcombine.low %v3050, %v3058
    %v3076 = vcombine.high %v3050, %v3058
    %v3078 = vunpack.c.l.s4 1934713408
    %v3079 = vunpack.c.0.s8 %v3078
    %v3080 = vlaneseq
    %v3081 = vshrl.u32 %v3080, 7
    %v3082 = vsub.s32 %v3079, %v3081
    %v3083 = vrot.slane %v3075, %v3082
    %v3085 = vunpack.c.l.s4 1934713408
    %v3086 = vunpack.c.0.s8 %v3085
    %v3087 = vlaneseq
    %v3088 = vshrl.u32 %v3087, 7
    %v3089 = vsub.s32 %v3086, %v3088
    %v3090 = vrot.slane %v3076, %v3089
    %v3091 = vcombine.low %v3066, %v3074
    %v3092 = vcombine.high %v3066, %v3074
    %v3094 = vunpack.c.l.s4 1934713408
    %v3095 = vunpack.c.0.s8 %v3094
    %v3096 = vlaneseq
    %v3097 = vshrl.u32 %v3096, 7
    %v3098 = vsub.s32 %v3095, %v3097
    %v3099 = vrot.slane %v3091, %v3098
    %v3101 = vunpack.c.l.s4 1934713408
    %v3102 = vunpack.c.0.s8 %v3101
    %v3103 = vlaneseq
    %v3104 = vshrl.u32 %v3103, 7
    %v3105 = vsub.s32 %v3102, %v3104
    %v3106 = vrot.slane %v3092, %v3105
    %v3107 = vcombine.low %v3083, %v3099
    %v3108 = vcombine.high %v3083, %v3099
    %v3109 = vcombine.low %v3090, %v3106
    %v3110 = vcombine.high %v3090, %v3106
    %3115 = vrot.lane.b32.xlu0 %v2221, 120
    %v3116 = vpop.permute.xlu0 %3115
    %3117 = vrot.lane.b32.xlu0 %v2224, 120
    %v3118 = vpop.permute.xlu0 %3117
    %3119 = vrot.lane.b32.xlu0 %v2229, 120
    %v3120 = vpop.permute.xlu0 %3119
    %3121 = vrot.lane.b32.xlu0 %v2232, 120
    %v3122 = vpop.permute.xlu0 %3121
    %3127 = vrot.lane.b32.xlu0 %v2221, 112
    %v3128 = vpop.permute.xlu0 %3127
    %3129 = vrot.lane.b32.xlu0 %v2224, 112
    %v3130 = vpop.permute.xlu0 %3129
    %3131 = vrot.lane.b32.xlu0 %v2229, 112
    %v3132 = vpop.permute.xlu0 %3131
    %3133 = vrot.lane.b32.xlu0 %v2232, 112
    %v3134 = vpop.permute.xlu0 %3133
    %3139 = vrot.lane.b32.xlu0 %v2221, 104
    %v3140 = vpop.permute.xlu0 %3139
    %3141 = vrot.lane.b32.xlu0 %v2224, 104
    %v3142 = vpop.permute.xlu0 %3141
    %3143 = vrot.lane.b32.xlu0 %v2229, 104
    %v3144 = vpop.permute.xlu0 %3143
    %3145 = vrot.lane.b32.xlu0 %v2232, 104
    %v3146 = vpop.permute.xlu0 %3145
    %v3151 = vcombine.low %v2221, %v3128
    %v3152 = vcombine.high %v2221, %v3128
    %v3154 = vunpack.c.l.s4 1983009808
    %v3155 = vunpack.c.0.s8 %v3154
    %v3156 = vlaneseq
    %v3157 = vshrl.u32 %v3156, 7
    %v3158 = vsub.s32 %v3155, %v3157
    %v3159 = vrot.slane %v3151, %v3158
    %v3161 = vunpack.c.l.s4 1983009808
    %v3162 = vunpack.c.0.s8 %v3161
    %v3163 = vlaneseq
    %v3164 = vshrl.u32 %v3163, 7
    %v3165 = vsub.s32 %v3162, %v3164
    %v3166 = vrot.slane %v3152, %v3165
    %v3167 = vcombine.low %v3116, %v3140
    %v3168 = vcombine.high %v3116, %v3140
    %v3170 = vunpack.c.l.s4 1983009808
    %v3171 = vunpack.c.0.s8 %v3170
    %v3172 = vlaneseq
    %v3173 = vshrl.u32 %v3172, 7
    %v3174 = vsub.s32 %v3171, %v3173
    %v3175 = vrot.slane %v3167, %v3174
    %v3177 = vunpack.c.l.s4 1983009808
    %v3178 = vunpack.c.0.s8 %v3177
    %v3179 = vlaneseq
    %v3180 = vshrl.u32 %v3179, 7
    %v3181 = vsub.s32 %v3178, %v3180
    %v3182 = vrot.slane %v3168, %v3181
    %v3183 = vcombine.low %v3159, %v3175
    %v3184 = vcombine.high %v3159, %v3175
    %v3186 = vunpack.c.l.s4 1934713408
    %v3187 = vunpack.c.0.s8 %v3186
    %v3188 = vlaneseq
    %v3189 = vshrl.u32 %v3188, 7
    %v3190 = vsub.s32 %v3187, %v3189
    %v3191 = vrot.slane %v3183, %v3190
    %v3193 = vunpack.c.l.s4 1934713408
    %v3194 = vunpack.c.0.s8 %v3193
    %v3195 = vlaneseq
    %v3196 = vshrl.u32 %v3195, 7
    %v3197 = vsub.s32 %v3194, %v3196
    %v3198 = vrot.slane %v3184, %v3197
    %v3199 = vcombine.low %v3166, %v3182
    %v3200 = vcombine.high %v3166, %v3182
    %v3202 = vunpack.c.l.s4 1934713408
    %v3203 = vunpack.c.0.s8 %v3202
    %v3204 = vlaneseq
    %v3205 = vshrl.u32 %v3204, 7
    %v3206 = vsub.s32 %v3203, %v3205
    %v3207 = vrot.slane %v3199, %v3206
    %v3209 = vunpack.c.l.s4 1934713408
    %v3210 = vunpack.c.0.s8 %v3209
    %v3211 = vlaneseq
    %v3212 = vshrl.u32 %v3211, 7
    %v3213 = vsub.s32 %v3210, %v3212
    %v3214 = vrot.slane %v3200, %v3213
    %v3215 = vcombine.high %v3191, 0.0
    %v3216 = vcombine.high %v3198, 0.0
    %v3217 = vcombine.high %v3207, 0.0
    %v3218 = vcombine.high %v3214, 0.0
    %v3219 = vcombine.low %v2224, %v3130
    %v3220 = vcombine.high %v2224, %v3130
    %v3222 = vunpack.c.l.s4 1983009808
    %v3223 = vunpack.c.0.s8 %v3222
    %v3224 = vlaneseq
    %v3225 = vshrl.u32 %v3224, 7
    %v3226 = vsub.s32 %v3223, %v3225
    %v3227 = vrot.slane %v3219, %v3226
    %v3229 = vunpack.c.l.s4 1983009808
    %v3230 = vunpack.c.0.s8 %v3229
    %v3231 = vlaneseq
    %v3232 = vshrl.u32 %v3231, 7
    %v3233 = vsub.s32 %v3230, %v3232
    %v3234 = vrot.slane %v3220, %v3233
    %v3235 = vcombine.low %v3118, %v3142
    %v3236 = vcombine.high %v3118, %v3142
    %v3238 = vunpack.c.l.s4 1983009808
    %v3239 = vunpack.c.0.s8 %v3238
    %v3240 = vlaneseq
    %v3241 = vshrl.u32 %v3240, 7
    %v3242 = vsub.s32 %v3239, %v3241
    %v3243 = vrot.slane %v3235, %v3242
    %v3245 = vunpack.c.l.s4 1983009808
    %v3246 = vunpack.c.0.s8 %v3245
    %v3247 = vlaneseq
    %v3248 = vshrl.u32 %v3247, 7
    %v3249 = vsub.s32 %v3246, %v3248
    %v3250 = vrot.slane %v3236, %v3249
    %v3251 = vcombine.low %v3227, %v3243
    %v3252 = vcombine.high %v3227, %v3243
    %v3254 = vunpack.c.l.s4 1934713408
    %v3255 = vunpack.c.0.s8 %v3254
    %v3256 = vlaneseq
    %v3257 = vshrl.u32 %v3256, 7
    %v3258 = vsub.s32 %v3255, %v3257
    %v3259 = vrot.slane %v3251, %v3258
    %v3261 = vunpack.c.l.s4 1934713408
    %v3262 = vunpack.c.0.s8 %v3261
    %v3263 = vlaneseq
    %v3264 = vshrl.u32 %v3263, 7
    %v3265 = vsub.s32 %v3262, %v3264
    %v3266 = vrot.slane %v3252, %v3265
    %v3267 = vcombine.low %v3234, %v3250
    %v3268 = vcombine.high %v3234, %v3250
    %v3270 = vunpack.c.l.s4 1934713408
    %v3271 = vunpack.c.0.s8 %v3270
    %v3272 = vlaneseq
    %v3273 = vshrl.u32 %v3272, 7
    %v3274 = vsub.s32 %v3271, %v3273
    %v3275 = vrot.slane %v3267, %v3274
    %v3277 = vunpack.c.l.s4 1934713408
    %v3278 = vunpack.c.0.s8 %v3277
    %v3279 = vlaneseq
    %v3280 = vshrl.u32 %v3279, 7
    %v3281 = vsub.s32 %v3278, %v3280
    %v3282 = vrot.slane %v3268, %v3281
    %v3283 = vcombine.high %v3259, 0.0
    %v3284 = vcombine.high %v3266, 0.0
    %v3285 = vcombine.high %v3275, 0.0
    %v3286 = vcombine.high %v3282, 0.0
    %v3287 = vcombine.low %v2229, %v3132
    %v3288 = vcombine.high %v2229, %v3132
    %v3290 = vunpack.c.l.s4 1983009808
    %v3291 = vunpack.c.0.s8 %v3290
    %v3292 = vlaneseq
    %v3293 = vshrl.u32 %v3292, 7
    %v3294 = vsub.s32 %v3291, %v3293
    %v3295 = vrot.slane %v3287, %v3294
    %v3297 = vunpack.c.l.s4 1983009808
    %v3298 = vunpack.c.0.s8 %v3297
    %v3299 = vlaneseq
    %v3300 = vshrl.u32 %v3299, 7
    %v3301 = vsub.s32 %v3298, %v3300
    %v3302 = vrot.slane %v3288, %v3301
    %v3303 = vcombine.low %v3120, %v3144
    %v3304 = vcombine.high %v3120, %v3144
    %v3306 = vunpack.c.l.s4 1983009808
    %v3307 = vunpack.c.0.s8 %v3306
    %v3308 = vlaneseq
    %v3309 = vshrl.u32 %v3308, 7
    %v3310 = vsub.s32 %v3307, %v3309
    %v3311 = vrot.slane %v3303, %v3310
    %v3313 = vunpack.c.l.s4 1983009808
    %v3314 = vunpack.c.0.s8 %v3313
    %v3315 = vlaneseq
    %v3316 = vshrl.u32 %v3315, 7
    %v3317 = vsub.s32 %v3314, %v3316
    %v3318 = vrot.slane %v3304, %v3317
    %v3319 = vcombine.low %v3295, %v3311
    %v3320 = vcombine.high %v3295, %v3311
    %v3322 = vunpack.c.l.s4 1934713408
    %v3323 = vunpack.c.0.s8 %v3322
    %v3324 = vlaneseq
    %v3325 = vshrl.u32 %v3324, 7
    %v3326 = vsub.s32 %v3323, %v3325
    %v3327 = vrot.slane %v3319, %v3326
    %v3329 = vunpack.c.l.s4 1934713408
    %v3330 = vunpack.c.0.s8 %v3329
    %v3331 = vlaneseq
    %v3332 = vshrl.u32 %v3331, 7
    %v3333 = vsub.s32 %v3330, %v3332
    %v3334 = vrot.slane %v3320, %v3333
    %v3335 = vcombine.low %v3302, %v3318
    %v3336 = vcombine.high %v3302, %v3318
    %v3338 = vunpack.c.l.s4 1934713408
    %v3339 = vunpack.c.0.s8 %v3338
    %v3340 = vlaneseq
    %v3341 = vshrl.u32 %v3340, 7
    %v3342 = vsub.s32 %v3339, %v3341
    %v3343 = vrot.slane %v3335, %v3342
    %v3345 = vunpack.c.l.s4 1934713408
    %v3346 = vunpack.c.0.s8 %v3345
    %v3347 = vlaneseq
    %v3348 = vshrl.u32 %v3347, 7
    %v3349 = vsub.s32 %v3346, %v3348
    %v3350 = vrot.slane %v3336, %v3349
    %v3351 = vcombine.high %v3327, 0.0
    %v3352 = vcombine.high %v3334, 0.0
    %v3353 = vcombine.high %v3343, 0.0
    %v3354 = vcombine.high %v3350, 0.0
    %v3355 = vcombine.low %v2232, %v3134
    %v3356 = vcombine.high %v2232, %v3134
    %v3358 = vunpack.c.l.s4 1983009808
    %v3359 = vunpack.c.0.s8 %v3358
    %v3360 = vlaneseq
    %v3361 = vshrl.u32 %v3360, 7
    %v3362 = vsub.s32 %v3359, %v3361
    %v3363 = vrot.slane %v3355, %v3362
    %v3365 = vunpack.c.l.s4 1983009808
    %v3366 = vunpack.c.0.s8 %v3365
    %v3367 = vlaneseq
    %v3368 = vshrl.u32 %v3367, 7
    %v3369 = vsub.s32 %v3366, %v3368
    %v3370 = vrot.slane %v3356, %v3369
    %v3371 = vcombine.low %v3122, %v3146
    %v3372 = vcombine.high %v3122, %v3146
    %v3374 = vunpack.c.l.s4 1983009808
    %v3375 = vunpack.c.0.s8 %v3374
    %v3376 = vlaneseq
    %v3377 = vshrl.u32 %v3376, 7
    %v3378 = vsub.s32 %v3375, %v3377
    %v3379 = vrot.slane %v3371, %v3378
    %v3381 = vunpack.c.l.s4 1983009808
    %v3382 = vunpack.c.0.s8 %v3381
    %v3383 = vlaneseq
    %v3384 = vshrl.u32 %v3383, 7
    %v3385 = vsub.s32 %v3382, %v3384
    %v3386 = vrot.slane %v3372, %v3385
    %v3387 = vcombine.low %v3363, %v3379
    %v3388 = vcombine.high %v3363, %v3379
    %v3390 = vunpack.c.l.s4 1934713408
    %v3391 = vunpack.c.0.s8 %v3390
    %v3392 = vlaneseq
    %v3393 = vshrl.u32 %v3392, 7
    %v3394 = vsub.s32 %v3391, %v3393
    %v3395 = vrot.slane %v3387, %v3394
    %v3397 = vunpack.c.l.s4 1934713408
    %v3398 = vunpack.c.0.s8 %v3397
    %v3399 = vlaneseq
    %v3400 = vshrl.u32 %v3399, 7
    %v3401 = vsub.s32 %v3398, %v3400
    %v3402 = vrot.slane %v3388, %v3401
    %v3403 = vcombine.low %v3370, %v3386
    %v3404 = vcombine.high %v3370, %v3386
    %v3406 = vunpack.c.l.s4 1934713408
    %v3407 = vunpack.c.0.s8 %v3406
    %v3408 = vlaneseq
    %v3409 = vshrl.u32 %v3408, 7
    %v3410 = vsub.s32 %v3407, %v3409
    %v3411 = vrot.slane %v3403, %v3410
    %v3413 = vunpack.c.l.s4 1934713408
    %v3414 = vunpack.c.0.s8 %v3413
    %v3415 = vlaneseq
    %v3416 = vshrl.u32 %v3415, 7
    %v3417 = vsub.s32 %v3414, %v3416
    %v3418 = vrot.slane %v3404, %v3417
    %v3419 = vcombine.high %v3395, 0.0
    %v3420 = vcombine.high %v3402, 0.0
    %v3421 = vcombine.high %v3411, 0.0
    %v3422 = vcombine.high %v3418, 0.0
    %v3423 = vcombine.low %v3191, %v3198
    %v3425 = vunpack.c.l.s4 1983009808
    %v3426 = vunpack.c.0.s8 %v3425
    %v3427 = vlaneseq
    %v3428 = vshrl.u32 %v3427, 7
    %v3429 = vsub.s32 %v3426, %v3428
    %v3430 = vrot.slane %v3423, %v3429
    %v3431 = vcombine.low %v3215, %v3216
    %v3433 = vunpack.c.l.s4 1983009808
    %v3434 = vunpack.c.0.s8 %v3433
    %v3435 = vlaneseq
    %v3436 = vshrl.u32 %v3435, 7
    %v3437 = vsub.s32 %v3434, %v3436
    %v3438 = vrot.slane %v3431, %v3437
    %v3439 = vcombine.low %v3207, %v3214
    %v3441 = vunpack.c.l.s4 1983009808
    %v3442 = vunpack.c.0.s8 %v3441
    %v3443 = vlaneseq
    %v3444 = vshrl.u32 %v3443, 7
    %v3445 = vsub.s32 %v3442, %v3444
    %v3446 = vrot.slane %v3439, %v3445
    %v3447 = vcombine.low %v3217, %v3218
    %v3449 = vunpack.c.l.s4 1983009808
    %v3450 = vunpack.c.0.s8 %v3449
    %v3451 = vlaneseq
    %v3452 = vshrl.u32 %v3451, 7
    %v3453 = vsub.s32 %v3450, %v3452
    %v3454 = vrot.slane %v3447, %v3453
    %v3455 = vcombine.low %v3430, %v3438
    %v3456 = vcombine.high %v3430, %v3438
    %v3458 = vunpack.c.l.s4 1934713408
    %v3459 = vunpack.c.0.s8 %v3458
    %v3460 = vlaneseq
    %v3461 = vshrl.u32 %v3460, 7
    %v3462 = vsub.s32 %v3459, %v3461
    %v3463 = vrot.slane %v3455, %v3462
    %v3465 = vunpack.c.l.s4 1934713408
    %v3466 = vunpack.c.0.s8 %v3465
    %v3467 = vlaneseq
    %v3468 = vshrl.u32 %v3467, 7
    %v3469 = vsub.s32 %v3466, %v3468
    %v3470 = vrot.slane %v3456, %v3469
    %v3471 = vcombine.low %v3446, %v3454
    %v3472 = vcombine.high %v3446, %v3454
    %v3474 = vunpack.c.l.s4 1934713408
    %v3475 = vunpack.c.0.s8 %v3474
    %v3476 = vlaneseq
    %v3477 = vshrl.u32 %v3476, 7
    %v3478 = vsub.s32 %v3475, %v3477
    %v3479 = vrot.slane %v3471, %v3478
    %v3481 = vunpack.c.l.s4 1934713408
    %v3482 = vunpack.c.0.s8 %v3481
    %v3483 = vlaneseq
    %v3484 = vshrl.u32 %v3483, 7
    %v3485 = vsub.s32 %v3482, %v3484
    %v3486 = vrot.slane %v3472, %v3485
    %v3487 = vcombine.low %v3463, %v3479
    %v3488 = vcombine.high %v3463, %v3479
    %v3489 = vcombine.low %v3470, %v3486
    %v3490 = vcombine.high %v3470, %v3486
    %v3491 = vcombine.low %v3259, %v3266
    %v3493 = vunpack.c.l.s4 1983009808
    %v3494 = vunpack.c.0.s8 %v3493
    %v3495 = vlaneseq
    %v3496 = vshrl.u32 %v3495, 7
    %v3497 = vsub.s32 %v3494, %v3496
    %v3498 = vrot.slane %v3491, %v3497
    %v3499 = vcombine.low %v3283, %v3284
    %v3501 = vunpack.c.l.s4 1983009808
    %v3502 = vunpack.c.0.s8 %v3501
    %v3503 = vlaneseq
    %v3504 = vshrl.u32 %v3503, 7
    %v3505 = vsub.s32 %v3502, %v3504
    %v3506 = vrot.slane %v3499, %v3505
    %v3507 = vcombine.low %v3275, %v3282
    %v3509 = vunpack.c.l.s4 1983009808
    %v3510 = vunpack.c.0.s8 %v3509
    %v3511 = vlaneseq
    %v3512 = vshrl.u32 %v3511, 7
    %v3513 = vsub.s32 %v3510, %v3512
    %v3514 = vrot.slane %v3507, %v3513
    %v3515 = vcombine.low %v3285, %v3286
    %v3517 = vunpack.c.l.s4 1983009808
    %v3518 = vunpack.c.0.s8 %v3517
    %v3519 = vlaneseq
    %v3520 = vshrl.u32 %v3519, 7
    %v3521 = vsub.s32 %v3518, %v3520
    %v3522 = vrot.slane %v3515, %v3521
    %v3523 = vcombine.low %v3498, %v3506
    %v3524 = vcombine.high %v3498, %v3506
    %v3526 = vunpack.c.l.s4 1934713408
    %v3527 = vunpack.c.0.s8 %v3526
    %v3528 = vlaneseq
    %v3529 = vshrl.u32 %v3528, 7
    %v3530 = vsub.s32 %v3527, %v3529
    %v3531 = vrot.slane %v3523, %v3530
    %v3533 = vunpack.c.l.s4 1934713408
    %v3534 = vunpack.c.0.s8 %v3533
    %v3535 = vlaneseq
    %v3536 = vshrl.u32 %v3535, 7
    %v3537 = vsub.s32 %v3534, %v3536
    %v3538 = vrot.slane %v3524, %v3537
    %v3539 = vcombine.low %v3514, %v3522
    %v3540 = vcombine.high %v3514, %v3522
    %v3542 = vunpack.c.l.s4 1934713408
    %v3543 = vunpack.c.0.s8 %v3542
    %v3544 = vlaneseq
    %v3545 = vshrl.u32 %v3544, 7
    %v3546 = vsub.s32 %v3543, %v3545
    %v3547 = vrot.slane %v3539, %v3546
    %v3549 = vunpack.c.l.s4 1934713408
    %v3550 = vunpack.c.0.s8 %v3549
    %v3551 = vlaneseq
    %v3552 = vshrl.u32 %v3551, 7
    %v3553 = vsub.s32 %v3550, %v3552
    %v3554 = vrot.slane %v3540, %v3553
    %v3555 = vcombine.low %v3531, %v3547
    %v3556 = vcombine.high %v3531, %v3547
    %v3557 = vcombine.low %v3538, %v3554
    %v3558 = vcombine.high %v3538, %v3554
    %v3559 = vcombine.low %v3327, %v3334
    %v3561 = vunpack.c.l.s4 1983009808
    %v3562 = vunpack.c.0.s8 %v3561
    %v3563 = vlaneseq
    %v3564 = vshrl.u32 %v3563, 7
    %v3565 = vsub.s32 %v3562, %v3564
    %v3566 = vrot.slane %v3559, %v3565
    %v3567 = vcombine.low %v3351, %v3352
    %v3569 = vunpack.c.l.s4 1983009808
    %v3570 = vunpack.c.0.s8 %v3569
    %v3571 = vlaneseq
    %v3572 = vshrl.u32 %v3571, 7
    %v3573 = vsub.s32 %v3570, %v3572
    %v3574 = vrot.slane %v3567, %v3573
    %v3575 = vcombine.low %v3343, %v3350
    %v3577 = vunpack.c.l.s4 1983009808
    %v3578 = vunpack.c.0.s8 %v3577
    %v3579 = vlaneseq
    %v3580 = vshrl.u32 %v3579, 7
    %v3581 = vsub.s32 %v3578, %v3580
    %v3582 = vrot.slane %v3575, %v3581
    %v3583 = vcombine.low %v3353, %v3354
    %v3585 = vunpack.c.l.s4 1983009808
    %v3586 = vunpack.c.0.s8 %v3585
    %v3587 = vlaneseq
    %v3588 = vshrl.u32 %v3587, 7
    %v3589 = vsub.s32 %v3586, %v3588
    %v3590 = vrot.slane %v3583, %v3589
    %v3591 = vcombine.low %v3566, %v3574
    %v3592 = vcombine.high %v3566, %v3574
    %v3594 = vunpack.c.l.s4 1934713408
    %v3595 = vunpack.c.0.s8 %v3594
    %v3596 = vlaneseq
    %v3597 = vshrl.u32 %v3596, 7
    %v3598 = vsub.s32 %v3595, %v3597
    %v3599 = vrot.slane %v3591, %v3598
    %v3601 = vunpack.c.l.s4 1934713408
    %v3602 = vunpack.c.0.s8 %v3601
    %v3603 = vlaneseq
    %v3604 = vshrl.u32 %v3603, 7
    %v3605 = vsub.s32 %v3602, %v3604
    %v3606 = vrot.slane %v3592, %v3605
    %v3607 = vcombine.low %v3582, %v3590
    %v3608 = vcombine.high %v3582, %v3590
    %v3610 = vunpack.c.l.s4 1934713408
    %v3611 = vunpack.c.0.s8 %v3610
    %v3612 = vlaneseq
    %v3613 = vshrl.u32 %v3612, 7
    %v3614 = vsub.s32 %v3611, %v3613
    %v3615 = vrot.slane %v3607, %v3614
    %v3617 = vunpack.c.l.s4 1934713408
    %v3618 = vunpack.c.0.s8 %v3617
    %v3619 = vlaneseq
    %v3620 = vshrl.u32 %v3619, 7
    %v3621 = vsub.s32 %v3618, %v3620
    %v3622 = vrot.slane %v3608, %v3621
    %v3623 = vcombine.low %v3599, %v3615
    %v3624 = vcombine.high %v3599, %v3615
    %v3625 = vcombine.low %v3606, %v3622
    %v3626 = vcombine.high %v3606, %v3622
    %v3627 = vcombine.low %v3395, %v3402
    %v3629 = vunpack.c.l.s4 1983009808
    %v3630 = vunpack.c.0.s8 %v3629
    %v3631 = vlaneseq
    %v3632 = vshrl.u32 %v3631, 7
    %v3633 = vsub.s32 %v3630, %v3632
    %v3634 = vrot.slane %v3627, %v3633
    %v3635 = vcombine.low %v3419, %v3420
    %v3637 = vunpack.c.l.s4 1983009808
    %v3638 = vunpack.c.0.s8 %v3637
    %v3639 = vlaneseq
    %v3640 = vshrl.u32 %v3639, 7
    %v3641 = vsub.s32 %v3638, %v3640
    %v3642 = vrot.slane %v3635, %v3641
    %v3643 = vcombine.low %v3411, %v3418
    %v3645 = vunpack.c.l.s4 1983009808
    %v3646 = vunpack.c.0.s8 %v3645
    %v3647 = vlaneseq
    %v3648 = vshrl.u32 %v3647, 7
    %v3649 = vsub.s32 %v3646, %v3648
    %v3650 = vrot.slane %v3643, %v3649
    %v3651 = vcombine.low %v3421, %v3422
    %v3653 = vunpack.c.l.s4 1983009808
    %v3654 = vunpack.c.0.s8 %v3653
    %v3655 = vlaneseq
    %v3656 = vshrl.u32 %v3655, 7
    %v3657 = vsub.s32 %v3654, %v3656
    %v3658 = vrot.slane %v3651, %v3657
    %v3659 = vcombine.low %v3634, %v3642
    %v3660 = vcombine.high %v3634, %v3642
    %v3662 = vunpack.c.l.s4 1934713408
    %v3663 = vunpack.c.0.s8 %v3662
    %v3664 = vlaneseq
    %v3665 = vshrl.u32 %v3664, 7
    %v3666 = vsub.s32 %v3663, %v3665
    %v3667 = vrot.slane %v3659, %v3666
    %v3669 = vunpack.c.l.s4 1934713408
    %v3670 = vunpack.c.0.s8 %v3669
    %v3671 = vlaneseq
    %v3672 = vshrl.u32 %v3671, 7
    %v3673 = vsub.s32 %v3670, %v3672
    %v3674 = vrot.slane %v3660, %v3673
    %v3675 = vcombine.low %v3650, %v3658
    %v3676 = vcombine.high %v3650, %v3658
    %v3678 = vunpack.c.l.s4 1934713408
    %v3679 = vunpack.c.0.s8 %v3678
    %v3680 = vlaneseq
    %v3681 = vshrl.u32 %v3680, 7
    %v3682 = vsub.s32 %v3679, %v3681
    %v3683 = vrot.slane %v3675, %v3682
    %v3685 = vunpack.c.l.s4 1934713408
    %v3686 = vunpack.c.0.s8 %v3685
    %v3687 = vlaneseq
    %v3688 = vshrl.u32 %v3687, 7
    %v3689 = vsub.s32 %v3686, %v3688
    %v3690 = vrot.slane %v3676, %v3689
    %v3691 = vcombine.low %v3667, %v3683
    %v3692 = vcombine.high %v3667, %v3683
    %v3693 = vcombine.low %v3674, %v3690
    %v3694 = vcombine.high %v3674, %v3690
    %v3695 = vpack.c.bf16 %v2523, %v2455
    %v3696 = vpack.c.bf16 %v2524, %v2456
    %v3697 = vpack.c.bf16 %v2525, %v2457
    %v3698 = vpack.c.bf16 %v2526, %v2458
    %v3699 = vpack.c.bf16 %v2971, %v2903
    %v3700 = vpack.c.bf16 %v3107, %v3039
    %v3701 = vpack.c.bf16 %v2972, %v2904
    %v3702 = vpack.c.bf16 %v3108, %v3040
    %v3703 = vpack.c.bf16 %v2973, %v2905
    %v3704 = vpack.c.bf16 %v3109, %v3041
    %v3705 = vpack.c.bf16 %v2974, %v2906
    %v3706 = vpack.c.bf16 %v3110, %v3042
    %v3708 = vsel %vm1395, %v3695, 0
    %v3711 = vsel %vm1395, %v3699, 0
    %v3714 = vsel %vm1395, %v3700, 0
    %3716 = vmatprep.subr.bf16.mxu0 0
    %3717 = vmatpush1.bf16.xpose.msra.mxu0 %v3711
    %3718 = vmatprep.subr.bf16.mxu0 0
    %3719 = vmatpush1.bf16.xpose.msra.mxu0 %v3714
    %3720 = vmatprep.subr.bf16.mxu0 0
    %3721 = vmatpush1.bf16.xpose.msra.mxu0 0
    %3722 = vmatprep.subr.bf16.mxu0 0
    %3723 = vmatpush1.bf16.xpose.msra.mxu0 0
    %3724 = vmatprep.subr.bf16.mxu0 0
    %3725 = vmatpush1.bf16.xpose.msra.mxu0 0
    %3726 = vmatprep.subr.bf16.mxu0 0
    %3727 = vmatpush1.bf16.xpose.msra.mxu0 0
    %3728 = vmatprep.subr.bf16.mxu0 0
    %3729 = vmatpush1.bf16.xpose.msra.mxu0 0
    %3730 = vmatprep.subr.bf16.mxu0 0
    %3731 = vmatpush1.bf16.xpose.msra.mxu0 0
    %3732 = vmatprep.subr.bf16.mxu0 0
    %3733 = vmatpush1.bf16.xpose.msra.mxu0 0
    %3734 = vmatprep.subr.bf16.mxu0 0
    %3735 = vmatpush1.bf16.xpose.msra.mxu0 0
    %3736 = vmatprep.subr.bf16.mxu0 0
    %3737 = vmatpush1.bf16.xpose.msra.mxu0 0
    %3738 = vmatprep.subr.bf16.mxu0 0
    %3739 = vmatpush1.bf16.xpose.msra.mxu0 0
    %3740 = vmatprep.subr.bf16.mxu0 0
    %3741 = vmatpush1.bf16.xpose.msra.mxu0 0
    %3742 = vmatprep.subr.bf16.mxu0 0
    %3743 = vmatpush1.bf16.xpose.msra.mxu0 0
    %3744 = vmatprep.subr.bf16.mxu0 0
    %3745 = vmatpush1.bf16.xpose.msra.mxu0 0
    %3746 = vmatprep.subr.bf16.mxu0 0
    %3747 = vmatpush1.bf16.xpose.msra.mxu0 0
    %3748 = vmatprep.mubr.bf16.mxu0 0
    %3749 = vmatmul.mubr.bf16.gmra.mrb[0].mxu0 %v3708
    %v3750 = vpop.f32.mrb[0].mxu0
    %v3751 = vadd.f32 0.0, %v3750
    %v3752 = vpop.f32.mrb[0].mxu0
    %v3753 = vpop.f32.mrb[0].mxu0
    %v3754 = vadd.f32 0.0, %v3753
    %v3755 = vpop.f32.mrb[0].mxu0
    %3756 = vdwg.mxu0
    %v3758 = vsel %vm1395, %v3696, 0
    %v3761 = vsel %vm1395, %v3701, 0
    %v3764 = vsel %vm1395, %v3702, 0
    %3766 = vmatprep.subr.bf16.mxu0 0
    %3767 = vmatpush1.bf16.xpose.msra.mxu0 %v3761
    %3768 = vmatprep.subr.bf16.mxu0 0
    %3769 = vmatpush1.bf16.xpose.msra.mxu0 %v3764
    %3770 = vmatprep.subr.bf16.mxu0 0
    %3771 = vmatpush1.bf16.xpose.msra.mxu0 0
    %3772 = vmatprep.subr.bf16.mxu0 0
    %3773 = vmatpush1.bf16.xpose.msra.mxu0 0
    %3774 = vmatprep.subr.bf16.mxu0 0
    %3775 = vmatpush1.bf16.xpose.msra.mxu0 0
    %3776 = vmatprep.subr.bf16.mxu0 0
    %3777 = vmatpush1.bf16.xpose.msra.mxu0 0
    %3778 = vmatprep.subr.bf16.mxu0 0
    %3779 = vmatpush1.bf16.xpose.msra.mxu0 0
    %3780 = vmatprep.subr.bf16.mxu0 0
    %3781 = vmatpush1.bf16.xpose.msra.mxu0 0
    %3782 = vmatprep.subr.bf16.mxu0 0
    %3783 = vmatpush1.bf16.xpose.msra.mxu0 0
    %3784 = vmatprep.subr.bf16.mxu0 0
    %3785 = vmatpush1.bf16.xpose.msra.mxu0 0
    %3786 = vmatprep.subr.bf16.mxu0 0
    %3787 = vmatpush1.bf16.xpose.msra.mxu0 0
    %3788 = vmatprep.subr.bf16.mxu0 0
    %3789 = vmatpush1.bf16.xpose.msra.mxu0 0
    %3790 = vmatprep.subr.bf16.mxu0 0
    %3791 = vmatpush1.bf16.xpose.msra.mxu0 0
    %3792 = vmatprep.subr.bf16.mxu0 0
    %3793 = vmatpush1.bf16.xpose.msra.mxu0 0
    %3794 = vmatprep.subr.bf16.mxu0 0
    %3795 = vmatpush1.bf16.xpose.msra.mxu0 0
    %3796 = vmatprep.subr.bf16.mxu0 0
    %3797 = vmatpush1.bf16.xpose.msra.mxu0 0
    %3798 = vmatprep.mubr.bf16.mxu0 0
    %3799 = vmatmul.mubr.bf16.gmra.mrb[0].mxu0 %v3758
    %v3800 = vpop.f32.mrb[0].mxu0
    %v3801 = vadd.f32 0.0, %v3800
    %v3802 = vpop.f32.mrb[0].mxu0
    %v3803 = vpop.f32.mrb[0].mxu0
    %v3804 = vadd.f32 0.0, %v3803
    %v3805 = vpop.f32.mrb[0].mxu0
    %3806 = vdwg.mxu0
    %v3808 = vsel %vm1395, %v3697, 0
    %v3811 = vsel %vm1395, %v3703, 0
    %v3814 = vsel %vm1395, %v3704, 0
    %3816 = vmatprep.subr.bf16.mxu0 0
    %3817 = vmatpush1.bf16.xpose.msra.mxu0 %v3811
    %3818 = vmatprep.subr.bf16.mxu0 0
    %3819 = vmatpush1.bf16.xpose.msra.mxu0 %v3814
    %3820 = vmatprep.subr.bf16.mxu0 0
    %3821 = vmatpush1.bf16.xpose.msra.mxu0 0
    %3822 = vmatprep.subr.bf16.mxu0 0
    %3823 = vmatpush1.bf16.xpose.msra.mxu0 0
    %3824 = vmatprep.subr.bf16.mxu0 0
    %3825 = vmatpush1.bf16.xpose.msra.mxu0 0
    %3826 = vmatprep.subr.bf16.mxu0 0
    %3827 = vmatpush1.bf16.xpose.msra.mxu0 0
    %3828 = vmatprep.subr.bf16.mxu0 0
    %3829 = vmatpush1.bf16.xpose.msra.mxu0 0
    %3830 = vmatprep.subr.bf16.mxu0 0
    %3831 = vmatpush1.bf16.xpose.msra.mxu0 0
    %3832 = vmatprep.subr.bf16.mxu0 0
    %3833 = vmatpush1.bf16.xpose.msra.mxu0 0
    %3834 = vmatprep.subr.bf16.mxu0 0
    %3835 = vmatpush1.bf16.xpose.msra.mxu0 0
    %3836 = vmatprep.subr.bf16.mxu0 0
    %3837 = vmatpush1.bf16.xpose.msra.mxu0 0
    %3838 = vmatprep.subr.bf16.mxu0 0
    %3839 = vmatpush1.bf16.xpose.msra.mxu0 0
    %3840 = vmatprep.subr.bf16.mxu0 0
    %3841 = vmatpush1.bf16.xpose.msra.mxu0 0
    %3842 = vmatprep.subr.bf16.mxu0 0
    %3843 = vmatpush1.bf16.xpose.msra.mxu0 0
    %3844 = vmatprep.subr.bf16.mxu0 0
    %3845 = vmatpush1.bf16.xpose.msra.mxu0 0
    %3846 = vmatprep.subr.bf16.mxu0 0
    %3847 = vmatpush1.bf16.xpose.msra.mxu0 0
    %3848 = vmatprep.mubr.bf16.mxu0 0
    %3849 = vmatmul.mubr.bf16.gmra.mrb[0].mxu0 %v3808
    %v3850 = vpop.f32.mrb[0].mxu0
    %v3851 = vadd.f32 0.0, %v3850
    %v3852 = vpop.f32.mrb[0].mxu0
    %v3853 = vpop.f32.mrb[0].mxu0
    %v3854 = vadd.f32 0.0, %v3853
    %v3855 = vpop.f32.mrb[0].mxu0
    %3856 = vdwg.mxu0
    %v3858 = vsel %vm1395, %v3698, 0
    %v3861 = vsel %vm1395, %v3705, 0
    %v3864 = vsel %vm1395, %v3706, 0
    %3866 = vmatprep.subr.bf16.mxu0 0
    %3867 = vmatpush1.bf16.xpose.msra.mxu0 %v3861
    %3868 = vmatprep.subr.bf16.mxu0 0
    %3869 = vmatpush1.bf16.xpose.msra.mxu0 %v3864
    %3870 = vmatprep.subr.bf16.mxu0 0
    %3871 = vmatpush1.bf16.xpose.msra.mxu0 0
    %3872 = vmatprep.subr.bf16.mxu0 0
    %3873 = vmatpush1.bf16.xpose.msra.mxu0 0
    %3874 = vmatprep.subr.bf16.mxu0 0
    %3875 = vmatpush1.bf16.xpose.msra.mxu0 0
    %3876 = vmatprep.subr.bf16.mxu0 0
    %3877 = vmatpush1.bf16.xpose.msra.mxu0 0
    %3878 = vmatprep.subr.bf16.mxu0 0
    %3879 = vmatpush1.bf16.xpose.msra.mxu0 0
    %3880 = vmatprep.subr.bf16.mxu0 0
    %3881 = vmatpush1.bf16.xpose.msra.mxu0 0
    %3882 = vmatprep.subr.bf16.mxu0 0
    %3883 = vmatpush1.bf16.xpose.msra.mxu0 0
    %3884 = vmatprep.subr.bf16.mxu0 0
    %3885 = vmatpush1.bf16.xpose.msra.mxu0 0
    %3886 = vmatprep.subr.bf16.mxu0 0
    %3887 = vmatpush1.bf16.xpose.msra.mxu0 0
    %3888 = vmatprep.subr.bf16.mxu0 0
    %3889 = vmatpush1.bf16.xpose.msra.mxu0 0
    %3890 = vmatprep.subr.bf16.mxu0 0
    %3891 = vmatpush1.bf16.xpose.msra.mxu0 0
    %3892 = vmatprep.subr.bf16.mxu0 0
    %3893 = vmatpush1.bf16.xpose.msra.mxu0 0
    %3894 = vmatprep.subr.bf16.mxu0 0
    %3895 = vmatpush1.bf16.xpose.msra.mxu0 0
    %3896 = vmatprep.subr.bf16.mxu0 0
    %3897 = vmatpush1.bf16.xpose.msra.mxu0 0
    %3898 = vmatprep.mubr.bf16.mxu0 0
    %3899 = vmatmul.mubr.bf16.gmra.mrb[0].mxu0 %v3858
    %v3900 = vpop.f32.mrb[0].mxu0
    %v3901 = vadd.f32 0.0, %v3900
    %v3902 = vpop.f32.mrb[0].mxu0
    %v3903 = vpop.f32.mrb[0].mxu0
    %v3904 = vadd.f32 0.0, %v3903
    %v3905 = vpop.f32.mrb[0].mxu0
    %3906 = vdwg.mxu0
    %v3907 = vsel %vm1586, %v3751, -1e+30
    %v3908 = vsel %vm1587, %v3754, -1e+30
    %v3909 = vsel %vm1586, %v3801, -1e+30
    %v3910 = vsel %vm1587, %v3804, -1e+30
    %v3911 = vsel %vm1586, %v3851, -1e+30
    %v3912 = vsel %vm1587, %v3854, -1e+30
    %v3913 = vsel %vm1586, %v3901, -1e+30
    %v3914 = vsel %vm1587, %v3904, -1e+30
    %v3915 = vsel %vm338, %v3907, -inf
    %3916 = vmax.xlane.f32.xlu0 %v3915
    %v3917 = vpop.xlane.xlu0 %3916
    %v3918 = vsel %vm338, %v3908, -inf
    %3919 = vmax.xlane.f32.xlu0 %v3918
    %v3920 = vpop.xlane.xlu0 %3919
    %v3921 = vsel %vm338, %v3909, -inf
    %3922 = vmax.xlane.f32.xlu0 %v3921
    %v3923 = vpop.xlane.xlu0 %3922
    %v3924 = vsel %vm338, %v3910, -inf
    %3925 = vmax.xlane.f32.xlu0 %v3924
    %v3926 = vpop.xlane.xlu0 %3925
    %v3927 = vsel %vm338, %v3911, -inf
    %3928 = vmax.xlane.f32.xlu0 %v3927
    %v3929 = vpop.xlane.xlu0 %3928
    %v3930 = vsel %vm338, %v3912, -inf
    %3931 = vmax.xlane.f32.xlu0 %v3930
    %v3932 = vpop.xlane.xlu0 %3931
    %v3933 = vsel %vm338, %v3913, -inf
    %3934 = vmax.xlane.f32.xlu0 %v3933
    %v3935 = vpop.xlane.xlu0 %3934
    %v3936 = vsel %vm338, %v3914, -inf
    %3937 = vmax.xlane.f32.xlu0 %v3936
    %v3938 = vpop.xlane.xlu0 %3937
    %v3939 = vsub.f32 %v3907, %v3917
    %v3940 = vsub.f32 %v3908, %v3920
    %v3941 = vsub.f32 %v3909, %v3923
    %v3942 = vsub.f32 %v3910, %v3926
    %v3943 = vsub.f32 %v3911, %v3929
    %v3944 = vsub.f32 %v3912, %v3932
    %v3945 = vsub.f32 %v3913, %v3935
    %v3946 = vsub.f32 %v3914, %v3938
    %v3947 = vmul.f32 %v3939, 1.442695
    %v3948 = vpow.pop %v3947
    %v3949 = vmul.f32 %v3940, 1.442695
    %v3950 = vpow.pop %v3949
    %v3951 = vmul.f32 %v3941, 1.442695
    %v3952 = vpow.pop %v3951
    %v3953 = vmul.f32 %v3942, 1.442695
    %v3954 = vpow.pop %v3953
    %v3955 = vmul.f32 %v3943, 1.442695
    %v3956 = vpow.pop %v3955
    %v3957 = vmul.f32 %v3944, 1.442695
    %v3958 = vpow.pop %v3957
    %v3959 = vmul.f32 %v3945, 1.442695
    %v3960 = vpow.pop %v3959
    %v3961 = vmul.f32 %v3946, 1.442695
    %v3962 = vpow.pop %v3961
    %v3963 = vsel %vm338, %v3948, 0.0
    %3964 = vadd.xlane.f32.xlu0 %v3963
    %v3965 = vpop.xlane.xlu0 %3964
    %v3966 = vsel %vm338, %v3950, 0.0
    %3967 = vadd.xlane.f32.xlu0 %v3966
    %v3968 = vpop.xlane.xlu0 %3967
    %v3969 = vsel %vm338, %v3952, 0.0
    %3970 = vadd.xlane.f32.xlu0 %v3969
    %v3971 = vpop.xlane.xlu0 %3970
    %v3972 = vsel %vm338, %v3954, 0.0
    %3973 = vadd.xlane.f32.xlu0 %v3972
    %v3974 = vpop.xlane.xlu0 %3973
    %v3975 = vsel %vm338, %v3956, 0.0
    %3976 = vadd.xlane.f32.xlu0 %v3975
    %v3977 = vpop.xlane.xlu0 %3976
    %v3978 = vsel %vm338, %v3958, 0.0
    %3979 = vadd.xlane.f32.xlu0 %v3978
    %v3980 = vpop.xlane.xlu0 %3979
    %v3981 = vsel %vm338, %v3960, 0.0
    %3982 = vadd.xlane.f32.xlu0 %v3981
    %v3983 = vpop.xlane.xlu0 %3982
    %v3984 = vsel %vm338, %v3962, 0.0
    %3985 = vadd.xlane.f32.xlu0 %v3984
    %v3986 = vpop.xlane.xlu0 %3985
    %v3987 = vrcp.pop %v3965
    %v3988 = vrcp.pop %v3968
    %v3989 = vrcp.pop %v3971
    %v3990 = vrcp.pop %v3974
    %v3991 = vrcp.pop %v3977
    %v3992 = vrcp.pop %v3980
    %v3993 = vrcp.pop %v3983
    %v3994 = vrcp.pop %v3986
    %v3995 = vmul.f32 %v3948, %v3987
    %v3996 = vmul.f32 %v3950, %v3988
    %v3997 = vmul.f32 %v3952, %v3989
    %v3998 = vmul.f32 %v3954, %v3990
    %v3999 = vmul.f32 %v3956, %v3991
    %v4000 = vmul.f32 %v3958, %v3992
    %v4001 = vmul.f32 %v3960, %v3993
    %v4002 = vmul.f32 %v3962, %v3994
    %v4003 = vpack.c.bf16 %v3996, %v3995
    %v4004 = vpack.c.bf16 %v3998, %v3997
    %v4005 = vpack.c.bf16 %v4000, %v3999
    %v4006 = vpack.c.bf16 %v4002, %v4001
    %v4007 = vpack.c.bf16 %v3555, %v3487
    %v4008 = vpack.c.bf16 %v3691, %v3623
    %v4009 = vpack.c.bf16 %v3556, %v3488
    %v4010 = vpack.c.bf16 %v3692, %v3624
    %v4011 = vpack.c.bf16 %v3557, %v3489
    %v4012 = vpack.c.bf16 %v3693, %v3625
    %v4013 = vpack.c.bf16 %v3558, %v3490
    %v4014 = vpack.c.bf16 %v3694, %v3626
    %v4016 = vsel %vm338, %v4003, 0
    %4018 = vmatprep.subr.bf16.mxu0 0
    %4019 = vmatpush1.bf16.msra.mxu0 %v4007
    %4020 = vmatprep.subr.bf16.mxu0 0
    %4021 = vmatpush1.bf16.msra.mxu0 %v4008
    %4022 = vmatprep.subr.bf16.mxu0 0
    %4023 = vmatpush1.bf16.msra.mxu0 0
    %4024 = vmatprep.subr.bf16.mxu0 0
    %4025 = vmatpush1.bf16.msra.mxu0 0
    %4026 = vmatprep.subr.bf16.mxu0 0
    %4027 = vmatpush1.bf16.msra.mxu0 0
    %4028 = vmatprep.subr.bf16.mxu0 0
    %4029 = vmatpush1.bf16.msra.mxu0 0
    %4030 = vmatprep.subr.bf16.mxu0 0
    %4031 = vmatpush1.bf16.msra.mxu0 0
    %4032 = vmatprep.subr.bf16.mxu0 0
    %4033 = vmatpush1.bf16.msra.mxu0 0
    %4034 = vmatprep.subr.bf16.mxu0 0
    %4035 = vmatpush1.bf16.msra.mxu0 0
    %4036 = vmatprep.subr.bf16.mxu0 0
    %4037 = vmatpush1.bf16.msra.mxu0 0
    %4038 = vmatprep.subr.bf16.mxu0 0
    %4039 = vmatpush1.bf16.msra.mxu0 0
    %4040 = vmatprep.subr.bf16.mxu0 0
    %4041 = vmatpush1.bf16.msra.mxu0 0
    %4042 = vmatprep.subr.bf16.mxu0 0
    %4043 = vmatpush1.bf16.msra.mxu0 0
    %4044 = vmatprep.subr.bf16.mxu0 0
    %4045 = vmatpush1.bf16.msra.mxu0 0
    %4046 = vmatprep.subr.bf16.mxu0 0
    %4047 = vmatpush1.bf16.msra.mxu0 0
    %4048 = vmatprep.subr.bf16.mxu0 0
    %4049 = vmatpush1.bf16.msra.mxu0 0
    %4050 = vmatprep.mubr.bf16.mxu0 0
    %4051 = vmatmul.mubr.bf16.gmra.mrb[0].mxu0 %v4016
    %v4052 = vpop.f32.mrb[0].mxu0
    %v4053 = vadd.f32 0.0, %v4052
    %v4054 = vpop.f32.mrb[0].mxu0
    %v4055 = vpop.f32.mrb[0].mxu0
    %v4056 = vadd.f32 0.0, %v4055
    %v4057 = vpop.f32.mrb[0].mxu0
    %4058 = vdwg.mxu0
    %v4060 = vsel %vm338, %v4004, 0
    %4062 = vmatprep.subr.bf16.mxu0 0
    %4063 = vmatpush1.bf16.msra.mxu0 %v4009
    %4064 = vmatprep.subr.bf16.mxu0 0
    %4065 = vmatpush1.bf16.msra.mxu0 %v4010
    %4066 = vmatprep.subr.bf16.mxu0 0
    %4067 = vmatpush1.bf16.msra.mxu0 0
    %4068 = vmatprep.subr.bf16.mxu0 0
    %4069 = vmatpush1.bf16.msra.mxu0 0
    %4070 = vmatprep.subr.bf16.mxu0 0
    %4071 = vmatpush1.bf16.msra.mxu0 0
    %4072 = vmatprep.subr.bf16.mxu0 0
    %4073 = vmatpush1.bf16.msra.mxu0 0
    %4074 = vmatprep.subr.bf16.mxu0 0
    %4075 = vmatpush1.bf16.msra.mxu0 0
    %4076 = vmatprep.subr.bf16.mxu0 0
    %4077 = vmatpush1.bf16.msra.mxu0 0
    %4078 = vmatprep.subr.bf16.mxu0 0
    %4079 = vmatpush1.bf16.msra.mxu0 0
    %4080 = vmatprep.subr.bf16.mxu0 0
    %4081 = vmatpush1.bf16.msra.mxu0 0
    %4082 = vmatprep.subr.bf16.mxu0 0
    %4083 = vmatpush1.bf16.msra.mxu0 0
    %4084 = vmatprep.subr.bf16.mxu0 0
    %4085 = vmatpush1.bf16.msra.mxu0 0
    %4086 = vmatprep.subr.bf16.mxu0 0
    %4087 = vmatpush1.bf16.msra.mxu0 0
    %4088 = vmatprep.subr.bf16.mxu0 0
    %4089 = vmatpush1.bf16.msra.mxu0 0
    %4090 = vmatprep.subr.bf16.mxu0 0
    %4091 = vmatpush1.bf16.msra.mxu0 0
    %4092 = vmatprep.subr.bf16.mxu0 0
    %4093 = vmatpush1.bf16.msra.mxu0 0
    %4094 = vmatprep.mubr.bf16.mxu0 0
    %4095 = vmatmul.mubr.bf16.gmra.mrb[0].mxu0 %v4060
    %v4096 = vpop.f32.mrb[0].mxu0
    %v4097 = vadd.f32 0.0, %v4096
    %v4098 = vpop.f32.mrb[0].mxu0
    %v4099 = vpop.f32.mrb[0].mxu0
    %v4100 = vadd.f32 0.0, %v4099
    %v4101 = vpop.f32.mrb[0].mxu0
    %4102 = vdwg.mxu0
    %v4104 = vsel %vm338, %v4005, 0
    %4106 = vmatprep.subr.bf16.mxu0 0
    %4107 = vmatpush1.bf16.msra.mxu0 %v4011
    %4108 = vmatprep.subr.bf16.mxu0 0
    %4109 = vmatpush1.bf16.msra.mxu0 %v4012
    %4110 = vmatprep.subr.bf16.mxu0 0
    %4111 = vmatpush1.bf16.msra.mxu0 0
    %4112 = vmatprep.subr.bf16.mxu0 0
    %4113 = vmatpush1.bf16.msra.mxu0 0
    %4114 = vmatprep.subr.bf16.mxu0 0
    %4115 = vmatpush1.bf16.msra.mxu0 0
    %4116 = vmatprep.subr.bf16.mxu0 0
    %4117 = vmatpush1.bf16.msra.mxu0 0
    %4118 = vmatprep.subr.bf16.mxu0 0
    %4119 = vmatpush1.bf16.msra.mxu0 0
    %4120 = vmatprep.subr.bf16.mxu0 0
    %4121 = vmatpush1.bf16.msra.mxu0 0
    %4122 = vmatprep.subr.bf16.mxu0 0
    %4123 = vmatpush1.bf16.msra.mxu0 0
    %4124 = vmatprep.subr.bf16.mxu0 0
    %4125 = vmatpush1.bf16.msra.mxu0 0
    %4126 = vmatprep.subr.bf16.mxu0 0
    %4127 = vmatpush1.bf16.msra.mxu0 0
    %4128 = vmatprep.subr.bf16.mxu0 0
    %4129 = vmatpush1.bf16.msra.mxu0 0
    %4130 = vmatprep.subr.bf16.mxu0 0
    %4131 = vmatpush1.bf16.msra.mxu0 0
    %4132 = vmatprep.subr.bf16.mxu0 0
    %4133 = vmatpush1.bf16.msra.mxu0 0
    %4134 = vmatprep.subr.bf16.mxu0 0
    %4135 = vmatpush1.bf16.msra.mxu0 0
    %4136 = vmatprep.subr.bf16.mxu0 0
    %4137 = vmatpush1.bf16.msra.mxu0 0
    %4138 = vmatprep.mubr.bf16.mxu0 0
    %4139 = vmatmul.mubr.bf16.gmra.mrb[0].mxu0 %v4104
    %v4140 = vpop.f32.mrb[0].mxu0
    %v4141 = vadd.f32 0.0, %v4140
    %v4142 = vpop.f32.mrb[0].mxu0
    %v4143 = vpop.f32.mrb[0].mxu0
    %v4144 = vadd.f32 0.0, %v4143
    %v4145 = vpop.f32.mrb[0].mxu0
    %4146 = vdwg.mxu0
    %v4148 = vsel %vm338, %v4006, 0
    %4150 = vmatprep.subr.bf16.mxu0 0
    %4151 = vmatpush1.bf16.msra.mxu0 %v4013
    %4152 = vmatprep.subr.bf16.mxu0 0
    %4153 = vmatpush1.bf16.msra.mxu0 %v4014
    %4154 = vmatprep.subr.bf16.mxu0 0
    %4155 = vmatpush1.bf16.msra.mxu0 0
    %4156 = vmatprep.subr.bf16.mxu0 0
    %4157 = vmatpush1.bf16.msra.mxu0 0
    %4158 = vmatprep.subr.bf16.mxu0 0
    %4159 = vmatpush1.bf16.msra.mxu0 0
    %4160 = vmatprep.subr.bf16.mxu0 0
    %4161 = vmatpush1.bf16.msra.mxu0 0
    %4162 = vmatprep.subr.bf16.mxu0 0
    %4163 = vmatpush1.bf16.msra.mxu0 0
    %4164 = vmatprep.subr.bf16.mxu0 0
    %4165 = vmatpush1.bf16.msra.mxu0 0
    %4166 = vmatprep.subr.bf16.mxu0 0
    %4167 = vmatpush1.bf16.msra.mxu0 0
    %4168 = vmatprep.subr.bf16.mxu0 0
    %4169 = vmatpush1.bf16.msra.mxu0 0
    %4170 = vmatprep.subr.bf16.mxu0 0
    %4171 = vmatpush1.bf16.msra.mxu0 0
    %4172 = vmatprep.subr.bf16.mxu0 0
    %4173 = vmatpush1.bf16.msra.mxu0 0
    %4174 = vmatprep.subr.bf16.mxu0 0
    %4175 = vmatpush1.bf16.msra.mxu0 0
    %4176 = vmatprep.subr.bf16.mxu0 0
    %4177 = vmatpush1.bf16.msra.mxu0 0
    %4178 = vmatprep.subr.bf16.mxu0 0
    %4179 = vmatpush1.bf16.msra.mxu0 0
    %4180 = vmatprep.subr.bf16.mxu0 0
    %4181 = vmatpush1.bf16.msra.mxu0 0
    %4182 = vmatprep.mubr.bf16.mxu0 0
    %4183 = vmatmul.mubr.bf16.gmra.mrb[0].mxu0 %v4148
    %v4184 = vpop.f32.mrb[0].mxu0
    %v4185 = vadd.f32 0.0, %v4184
    %v4186 = vpop.f32.mrb[0].mxu0
    %v4187 = vpop.f32.mrb[0].mxu0
    %v4188 = vadd.f32 0.0, %v4187
    %v4189 = vpop.f32.mrb[0].mxu0
    %4190 = vdwg.mxu0
    %4193 = vrot.lane.b32.xlu0 %v4097, 8
    %v4194 = vpop.permute.xlu0 %4193
    %4195 = vrot.lane.b32.xlu0 %v4100, 8
    %v4196 = vpop.permute.xlu0 %4195
    %4201 = vrot.lane.b32.xlu0 %v4141, 16
    %v4202 = vpop.permute.xlu0 %4201
    %4203 = vrot.lane.b32.xlu0 %v4144, 16
    %v4204 = vpop.permute.xlu0 %4203
    %4209 = vrot.lane.b32.xlu0 %v4185, 24
    %v4210 = vpop.permute.xlu0 %4209
    %4211 = vrot.lane.b32.xlu0 %v4188, 24
    %v4212 = vpop.permute.xlu0 %4211
    %v4215 = vsel %vm1395, %v4053, %v4194
    %v4216 = vsel %vm1395, %v4056, %v4196
    %v4217 = vsel %vm1596, %v4215, %v4202
    %v4218 = vsel %vm1596, %v4216, %v4204
    %v4219 = vsel %vm1897, %v4217, %v4210
    %v4220 = vsel %vm1897, %v4218, %v4212
    %v4221 = vpack.c.bf16 %v4220, %v4219
    %v4222 = vld [vmem:[%s16] sm:$0xf]
    %v4223 = vld [vmem:[%s16 + $0x4] sm:$0xf]
    %v4224 = vld [vmem:[%s16 + $0x8] sm:$0xf]
    %v4225 = vld [vmem:[%s16 + $0xc] sm:$0xf]
    %v4226 = vld [vmem:[#allocation23] sm:$0x1]
    %v4228 = vlaneseq
    %v4229 = vshrl.u32 %v4228, 7
    %v4230 = vsub.s32 0, %v4229
    %v4231 = vrot.slane %v4226, %v4230
    %v4237 = vunpack.c.l.b16 %v4222
    %v4238 = vunpack.c.l.b16 %v4223
    %v4239 = vunpack.c.l.b16 %v4224
    %v4240 = vunpack.c.l.b16 %v4225
    %v4241 = vpack.c.b16 %v4238, %v4237
    %v4242 = vpack.c.b16 %v4240, %v4239
    %v4246 = vsel %vm338, %v4221, 0
    %4248 = vmatprep.subr.bf16.mxu0 0
    %4249 = vmatpush1.bf16.msra.mxu0 %v4241
    %4250 = vmatprep.subr.bf16.mxu0 0
    %4251 = vmatpush1.bf16.msra.mxu0 %v4242
    %4252 = vmatprep.subr.bf16.mxu0 0
    %4253 = vmatpush1.bf16.msra.mxu0 0
    %4254 = vmatprep.subr.bf16.mxu0 0
    %4255 = vmatpush1.bf16.msra.mxu0 0
    %4256 = vmatprep.subr.bf16.mxu0 0
    %4257 = vmatpush1.bf16.msra.mxu0 0
    %4258 = vmatprep.subr.bf16.mxu0 0
    %4259 = vmatpush1.bf16.msra.mxu0 0
    %4260 = vmatprep.subr.bf16.mxu0 0
    %4261 = vmatpush1.bf16.msra.mxu0 0
    %4262 = vmatprep.subr.bf16.mxu0 0
    %4263 = vmatpush1.bf16.msra.mxu0 0
    %4264 = vmatprep.subr.bf16.mxu0 0
    %4265 = vmatpush1.bf16.msra.mxu0 0
    %4266 = vmatprep.subr.bf16.mxu0 0
    %4267 = vmatpush1.bf16.msra.mxu0 0
    %4268 = vmatprep.subr.bf16.mxu0 0
    %4269 = vmatpush1.bf16.msra.mxu0 0
    %4270 = vmatprep.subr.bf16.mxu0 0
    %4271 = vmatpush1.bf16.msra.mxu0 0
    %4272 = vmatprep.subr.bf16.mxu0 0
    %4273 = vmatpush1.bf16.msra.mxu0 0
    %4274 = vmatprep.subr.bf16.mxu0 0
    %4275 = vmatpush1.bf16.msra.mxu0 0
    %4276 = vmatprep.subr.bf16.mxu0 0
    %4277 = vmatpush1.bf16.msra.mxu0 0
    %4278 = vmatprep.subr.bf16.mxu0 0
    %4279 = vmatpush1.bf16.msra.mxu0 0
    %4280 = vmatprep.mubr.bf16.mxu0 0
    %4281 = vmatmul.mubr.bf16.gmra.mrb[0].mxu0 %v4246
    %v4282 = vpop.f32.mrb[0].mxu0
    %v4283 = vadd.f32 %v4231, %v4282
    %v4284 = vpop.f32.mrb[0].mxu0
    %v4285 = vpop.f32.mrb[0].mxu0
    %v4286 = vadd.f32 %v4231, %v4285
    %v4287 = vpop.f32.mrb[0].mxu0
    %4288 = vdwg.mxu0
    %v4289 = vadd.f32 %v2013, %v4283
    %v4290 = vadd.f32 %v2014, %v4286
    %v4291 = vld [vmem:[%s24] sm:$0x1]
    %v4292 = vld [vmem:[%s25] sm:$0x1]
    %v4293 = vsel %vm338, %v4289, 0.0
    %4294 = vadd.xlane.f32.xlu0 %v4293
    %v4295 = vpop.xlane.xlu0 %4294
    %v4296 = vsel %vm338, %v4290, 0.0
    %4297 = vadd.xlane.f32.xlu0 %v4296
    %v4298 = vpop.xlane.xlu0 %4297
    %v4299 = vmul.f32 %v4295, %v1978
    %v4300 = vmul.f32 %v4298, %v1978
    %v4301 = vsub.f32 %v4289, %v4299
    %v4302 = vsub.f32 %v4290, %v4300
    %v4303 = vmul.f32 %v4301, %v4301
    %v4304 = vmul.f32 %v4302, %v4302
    %v4305 = vsel %vm338, %v4303, 0.0
    %4306 = vadd.xlane.f32.xlu0 %v4305
    %v4307 = vpop.xlane.xlu0 %4306
    %v4308 = vsel %vm338, %v4304, 0.0
    %4309 = vadd.xlane.f32.xlu0 %v4308
    %v4310 = vpop.xlane.xlu0 %4309
    %v4311 = vmul.f32 %v4307, %v1978
    %v4312 = vmul.f32 %v4310, %v1978
    %v4313 = vadd.f32 %v4311, 1e-06
    %v4314 = vadd.f32 %v4312, 1e-06
    %v4315 = vrsqrt.pop %v4313
    %v4316 = vrsqrt.pop %v4314
    %v4317 = vmul.f32 %v4301, %v4315
    %v4318 = vmul.f32 %v4302, %v4316
    %v4320 = vlaneseq
    %v4321 = vshrl.u32 %v4320, 7
    %v4322 = vsub.s32 0, %v4321
    %v4323 = vrot.slane %v4291, %v4322
    %v4325 = vmul.f32 %v4317, %v4323
    %v4326 = vmul.f32 %v4318, %v4323
    %v4328 = vlaneseq
    %v4329 = vshrl.u32 %v4328, 7
    %v4330 = vsub.s32 0, %v4329
    %v4331 = vrot.slane %v4292, %v4330
    %v4333 = vadd.f32 %v4325, %v4331
    %v4334 = vadd.f32 %v4326, %v4331
    %v4335 = vpack.c.bf16 %v4334, %v4333
    %v4336 = vld [vmem:[%s18] sm:$0xf]
    %v4337 = vld [vmem:[%s18 + $0x4] sm:$0xf]
    %v4338 = vld [vmem:[%s18 + $0x8] sm:$0xf]
    %v4339 = vld [vmem:[%s18 + $0xc] sm:$0xf]
    %v4340 = vld [vmem:[%s19] sm:$0x1]
    %v4342 = vlaneseq
    %v4343 = vshrl.u32 %v4342, 7
    %v4344 = vsub.s32 0, %v4343
    %v4345 = vrot.slane %v4340, %v4344
    %v4351 = vunpack.c.l.b16 %v4336
    %v4352 = vunpack.c.l.b16 %v4337
    %v4353 = vunpack.c.l.b16 %v4338
    %v4354 = vunpack.c.l.b16 %v4339
    %v4355 = vpack.c.b16 %v4352, %v4351
    %v4356 = vpack.c.b16 %v4354, %v4353
    %v4360 = vsel %vm338, %v4335, 0
    %4362 = vmatprep.subr.bf16.mxu0 0
    %4363 = vmatpush1.bf16.msra.mxu0 %v4355
    %4364 = vmatprep.subr.bf16.mxu0 0
    %4365 = vmatpush1.bf16.msra.mxu0 %v4356
    %4366 = vmatprep.subr.bf16.mxu0 0
    %4367 = vmatpush1.bf16.msra.mxu0 0
    %4368 = vmatprep.subr.bf16.mxu0 0
    %4369 = vmatpush1.bf16.msra.mxu0 0
    %4370 = vmatprep.subr.bf16.mxu0 0
    %4371 = vmatpush1.bf16.msra.mxu0 0
    %4372 = vmatprep.subr.bf16.mxu0 0
    %4373 = vmatpush1.bf16.msra.mxu0 0
    %4374 = vmatprep.subr.bf16.mxu0 0
    %4375 = vmatpush1.bf16.msra.mxu0 0
    %4376 = vmatprep.subr.bf16.mxu0 0
    %4377 = vmatpush1.bf16.msra.mxu0 0
    %4378 = vmatprep.subr.bf16.mxu0 0
    %4379 = vmatpush1.bf16.msra.mxu0 0
    %4380 = vmatprep.subr.bf16.mxu0 0
    %4381 = vmatpush1.bf16.msra.mxu0 0
    %4382 = vmatprep.subr.bf16.mxu0 0
    %4383 = vmatpush1.bf16.msra.mxu0 0
    %4384 = vmatprep.subr.bf16.mxu0 0
    %4385 = vmatpush1.bf16.msra.mxu0 0
    %4386 = vmatprep.subr.bf16.mxu0 0
    %4387 = vmatpush1.bf16.msra.mxu0 0
    %4388 = vmatprep.subr.bf16.mxu0 0
    %4389 = vmatpush1.bf16.msra.mxu0 0
    %4390 = vmatprep.subr.bf16.mxu0 0
    %4391 = vmatpush1.bf16.msra.mxu0 0
    %4392 = vmatprep.subr.bf16.mxu0 0
    %4393 = vmatpush1.bf16.msra.mxu0 0
    %4394 = vmatprep.mubr.bf16.mxu0 0
    %4395 = vmatmul.mubr.bf16.gmra.mrb[0].mxu0 %v4360
    %v4396 = vpop.f32.mrb[0].mxu0
    %v4397 = vadd.f32 %v4345, %v4396
    %v4398 = vpop.f32.mrb[0].mxu0
    %v4399 = vpop.f32.mrb[0].mxu0
    %v4400 = vadd.f32 %v4345, %v4399
    %v4401 = vpop.f32.mrb[0].mxu0
    %4402 = vdwg.mxu0
    %v4403 = vmax.f32 %v4397, 0.0
    %v4404 = vmax.f32 %v4400, 0.0
    %v4405 = vpack.c.bf16 %v4404, %v4403
    %v4406 = vld [vmem:[%s20] sm:$0xf]
    %v4407 = vld [vmem:[%s20 + $0x4] sm:$0xf]
    %v4408 = vld [vmem:[%s20 + $0x8] sm:$0xf]
    %v4409 = vld [vmem:[%s20 + $0xc] sm:$0xf]
    %v4410 = vld [vmem:[%s20 + $0x10] sm:$0xf]
    %v4411 = vld [vmem:[%s20 + $0x14] sm:$0xf]
    %v4412 = vld [vmem:[%s20 + $0x18] sm:$0xf]
    %v4413 = vld [vmem:[%s20 + $0x1c] sm:$0xf]
    %v4414 = vld [vmem:[%s21] sm:$0x1]
    %v4416 = vlaneseq
    %v4417 = vshrl.u32 %v4416, 7
    %v4418 = vsub.s32 0, %v4417
    %v4419 = vrot.slane %v4414, %v4418
    %v4429 = vunpack.c.l.b16 %v4406
    %v4430 = vunpack.c.l.b16 %v4407
    %v4431 = vunpack.c.l.b16 %v4408
    %v4432 = vunpack.c.l.b16 %v4409
    %v4433 = vunpack.c.l.b16 %v4410
    %v4434 = vunpack.c.l.b16 %v4411
    %v4435 = vunpack.c.l.b16 %v4412
    %v4436 = vunpack.c.l.b16 %v4413
    %v4437 = vpack.c.b16 %v4430, %v4429
    %v4438 = vpack.c.b16 %v4432, %v4431
    %v4439 = vpack.c.b16 %v4434, %v4433
    %v4440 = vpack.c.b16 %v4436, %v4435
    %vm4445 = vcmask 523264
    %v4447 = vsel %vm4445, %v4405, 0
    %4449 = vmatprep.subr.bf16.mxu0 0
    %4450 = vmatpush1.bf16.msra.mxu0 %v4437
    %4451 = vmatprep.subr.bf16.mxu0 0
    %4452 = vmatpush1.bf16.msra.mxu0 %v4438
    %4453 = vmatprep.subr.bf16.mxu0 0
    %4454 = vmatpush1.bf16.msra.mxu0 %v4439
    %4455 = vmatprep.subr.bf16.mxu0 0
    %4456 = vmatpush1.bf16.msra.mxu0 %v4440
    %4457 = vmatprep.subr.bf16.mxu0 0
    %4458 = vmatpush1.bf16.msra.mxu0 0
    %4459 = vmatprep.subr.bf16.mxu0 0
    %4460 = vmatpush1.bf16.msra.mxu0 0
    %4461 = vmatprep.subr.bf16.mxu0 0
    %4462 = vmatpush1.bf16.msra.mxu0 0
    %4463 = vmatprep.subr.bf16.mxu0 0
    %4464 = vmatpush1.bf16.msra.mxu0 0
    %4465 = vmatprep.subr.bf16.mxu0 0
    %4466 = vmatpush1.bf16.msra.mxu0 0
    %4467 = vmatprep.subr.bf16.mxu0 0
    %4468 = vmatpush1.bf16.msra.mxu0 0
    %4469 = vmatprep.subr.bf16.mxu0 0
    %4470 = vmatpush1.bf16.msra.mxu0 0
    %4471 = vmatprep.subr.bf16.mxu0 0
    %4472 = vmatpush1.bf16.msra.mxu0 0
    %4473 = vmatprep.subr.bf16.mxu0 0
    %4474 = vmatpush1.bf16.msra.mxu0 0
    %4475 = vmatprep.subr.bf16.mxu0 0
    %4476 = vmatpush1.bf16.msra.mxu0 0
    %4477 = vmatprep.subr.bf16.mxu0 0
    %4478 = vmatpush1.bf16.msra.mxu0 0
    %4479 = vmatprep.subr.bf16.mxu0 0
    %4480 = vmatpush1.bf16.msra.mxu0 0
    %4481 = vmatprep.mubr.bf16.mxu0 0
    %4482 = vmatmul.mubr.bf16.gmra.mrb[0].mxu0 %v4447
    %v4483 = vpop.f32.mrb[0].mxu0
    %v4484 = vadd.f32 %v4419, %v4483
    %v4485 = vpop.f32.mrb[0].mxu0
    %v4486 = vpop.f32.mrb[0].mxu0
    %v4487 = vadd.f32 %v4419, %v4486
    %v4488 = vpop.f32.mrb[0].mxu0
    %4489 = vdwg.mxu0
    %v4490 = vadd.f32 %v4333, %v4484
    %v4491 = vadd.f32 %v4334, %v4487
    %v4492 = vld [vmem:[%s26] sm:$0x1]
    %v4493 = vld [vmem:[%s27] sm:$0x1]
    %v4494 = vsel %vm338, %v4490, 0.0
    %4495 = vadd.xlane.f32.xlu0 %v4494
    %v4496 = vpop.xlane.xlu0 %4495
    %v4497 = vsel %vm338, %v4491, 0.0
    %4498 = vadd.xlane.f32.xlu0 %v4497
    %v4499 = vpop.xlane.xlu0 %4498
    %v4500 = vmul.f32 %v4496, %v1978
    %v4501 = vmul.f32 %v4499, %v1978
    %v4502 = vsub.f32 %v4490, %v4500
    %v4503 = vsub.f32 %v4491, %v4501
    %v4504 = vmul.f32 %v4502, %v4502
    %v4505 = vmul.f32 %v4503, %v4503
    %v4506 = vsel %vm338, %v4504, 0.0
    %4507 = vadd.xlane.f32.xlu0 %v4506
    %v4508 = vpop.xlane.xlu0 %4507
    %v4509 = vsel %vm338, %v4505, 0.0
    %4510 = vadd.xlane.f32.xlu0 %v4509
    %v4511 = vpop.xlane.xlu0 %4510
    %v4512 = vmul.f32 %v4508, %v1978
    %v4513 = vmul.f32 %v4511, %v1978
    %v4514 = vadd.f32 %v4512, 1e-06
    %v4515 = vadd.f32 %v4513, 1e-06
    %v4516 = vrsqrt.pop %v4514
    %v4517 = vrsqrt.pop %v4515
    %v4518 = vmul.f32 %v4502, %v4516
    %v4519 = vmul.f32 %v4503, %v4517
    %v4521 = vlaneseq
    %v4522 = vshrl.u32 %v4521, 7
    %v4523 = vsub.s32 0, %v4522
    %v4524 = vrot.slane %v4492, %v4523
    %v4526 = vmul.f32 %v4518, %v4524
    %v4527 = vmul.f32 %v4519, %v4524
    %v4529 = vlaneseq
    %v4530 = vshrl.u32 %v4529, 7
    %v4531 = vsub.s32 0, %v4530
    %v4532 = vrot.slane %v4493, %v4531
    %v4534 = vadd.f32 %v4526, %v4532
    %v4535 = vadd.f32 %v4527, %v4532
    %4536 = vst.msk [vmem:[#allocation25] sm:$0xff] %vm338, %v4534
    %4537 = vst.msk [vmem:[#allocation25 + $0x8] sm:$0xff] %vm338, %v4535
    // Predicated region
    $region170: #{tpu_custom_call.1} parent=1 // pred_check
      _
    $region171: #{tpu_custom_call.1} parent=1 // pred_check_branch
      %4539 = sbr.rel (0) target = $region173
    $region172: #{tpu_custom_call.1} parent=1 // pred_region
      %s4541 = ssub.s32 256, 256
      %4542 = vsyncadd [#allocation4], %s4541
      %s4543 = sshll.u32 [#allocation25], 4
      %s4544 = int_to_ptr.vmem [resolvable:$true] %s4543
      %4549 = dma.vmem_to_hbm [thread:$0]  %s4544, 256, %s28, [#allocation4], 128, 128, 8
    $region173: #{tpu_custom_call.1} parent=1 // pred_fallthru
      _
    // Predicated region
    $region174: #{tpu_custom_call.1} parent=1 // pred_check
      _
    $region175: #{tpu_custom_call.1} parent=1 // pred_check_branch
      %4551 = sbr.rel (0) target = $region177
    $region176: #{tpu_custom_call.1} parent=1 // pred_region
      %4552 = dma.done [#allocation4], 256
    $region177: #{tpu_custom_call.1} parent=1 // pred_fallthru
      _
    %4553 = vsyncpa [#allocation3], 1
    %4554 = vsyncpa [#allocation6], 1
    %4555 = vsyncpa [#allocation9], 1
    %4556 = vsyncpa [#allocation12], 1
    %4557 = vsyncpa [#allocation15], 1
    %4558 = vsyncpa [#allocation18], 1
    %4559 = vsyncpa [#allocation21], 1
    %4560 = vsyncpa [#allocation24], 1
    %4561 = vsyncpa [#allocation4], 1

</llo_original>
